<compile_context>
chip_gen: v5e
topology: v5e:2x2
jax: 0.10.0
libtpu: 0.0.40
codegen_flags: <defaults>
</compile_context>

<pallas_src>
import functools

import jax
import jax.numpy as jnp
import numpy as np
from jax import lax
from jax.experimental import pallas as pl
from jax.experimental.pallas import tpu as pltpu


# ---------------------------------------------------------------------------
# Pallas kernel: full recurrence for all time steps in a single grid step.
# ---------------------------------------------------------------------------
def hybrid_kernel(ih1_ref, fmap_ref, w_hh1_ref, w_l2_ref, b2_ref,
                  hid_ref, mask_ref,
                  xh_ref,
                  *, num_steps, hidden_size):
    H = hidden_size
    B = fmap_ref.shape[0]

    # Loop-invariant loads (hoisted out of the recurrence).
    fmap = fmap_ref[...]          # (B, HW, H)
    w_hh1 = w_hh1_ref[...]        # (H, 4H)
    w_l2 = w_l2_ref[...]          # (2H, 4H)  == [w_ih2; w_hh2]
    b2 = b2_ref[...]              # (1, 4H)

    def gates_to_hc(gates, c):
        # PyTorch LSTMCell gate order: i, f, g, o.
        i_g = jax.nn.sigmoid(gates[:, 0 * H:1 * H])
        f_g = jax.nn.sigmoid(gates[:, 1 * H:2 * H])
        g_g = jnp.tanh(gates[:, 2 * H:3 * H])
        o_g = jax.nn.sigmoid(gates[:, 3 * H:4 * H])
        c_new = f_g * c + i_g * g_g
        h_new = o_g * jnp.tanh(c_new)
        return h_new, c_new

    def step(t, carry):
        h1, c1, h2, c2 = carry

        # Layer 1: input projection precomputed in wrapper -> only h @ w_hh here.
        gates1 = ih1_ref[t] + jnp.dot(h1, w_hh1,
                                      preferred_element_type=jnp.float32)
        h1n, c1n = gates_to_hc(gates1, c1)

        # Layer 2: single fused matmul on [x, h] with pre-concatenated weights.
        xh_ref[:, :H] = h1n
        xh_ref[:, H:] = h2
        gates2 = jnp.dot(xh_ref[...], w_l2,
                         preferred_element_type=jnp.float32) + b2
        h2n, c2n = gates_to_hc(gates2, c2)

        # Unnormalised sigmoid attention, done on the VPU/XLU (no M=1 MXU ops).
        a = jax.nn.sigmoid(jnp.sum(h2n[:, None, :] * fmap, axis=-1))   # (B, HW)
        context = jnp.sum(a[:, :, None] * fmap, axis=1)                # (B, H)

        hid_ref[t] = context
        mask_ref[t] = a
        return (h1n, c1n, h2n, c2n)

    z = jnp.zeros((B, H), jnp.float32)   # LSTM states start at zero
    lax.fori_loop(0, num_steps, step, (z, z, z, z), unroll=True)


# ---------------------------------------------------------------------------
# Wrapper
# ---------------------------------------------------------------------------
def hybrid_branch_forward(origin_fmap, text, params, num_steps):
    """Equivalent of HybridBranch.forward(origin_fmap, text, is_train=True)."""
    B, C, Hh, W = origin_fmap.shape
    hidden = C
    HW = Hh * W
    num_classes = params['w_emb'].shape[0]

    fmap_flat = jnp.transpose(origin_fmap, (0, 2, 3, 1)).reshape(B, HW, hidden)

    # Hoisted dense precompute (one big matmul, outside the serial recurrence):
    # layer-1 gate inputs for every step, with b1 (= b_ih1 + b_hh1) folded in.
    x1hot = jax.nn.one_hot(text, num_classes, dtype=jnp.float32)      # (B, T, NC)
    x_emb = x1hot @ params['w_emb'] + params['b_emb']                 # (B, T, H)
    ih1_all = x_emb @ params['w_ih1'] + params['b1']                  # (B, T, 4H)
    ih1_all = jnp.transpose(ih1_all, (1, 0, 2))                       # (T, B, 4H)

    # Pre-concatenate layer-2 weights so the kernel does one matmul per step.
    w_l2 = jnp.concatenate([params['w_ih2'], params['w_hh2']], axis=0)  # (2H, 4H)

    kernel = functools.partial(hybrid_kernel,
                               num_steps=num_steps, hidden_size=hidden)

    hid_tm, mask_tm = pl.pallas_call(
        kernel,
        out_shape=(
            jax.ShapeDtypeStruct((num_steps, B, hidden), jnp.float32),   # contexts
            jax.ShapeDtypeStruct((num_steps, B, HW), jnp.float32),       # masks
        ),
        grid=(1,),
        in_specs=[
            pl.BlockSpec((num_steps, B, 4 * hidden), lambda i: (0, 0, 0)),  # ih1_all
            pl.BlockSpec((B, HW, hidden), lambda i: (0, 0, 0)),             # fmap
            pl.BlockSpec((hidden, 4 * hidden), lambda i: (0, 0)),           # w_hh1
            pl.BlockSpec((2 * hidden, 4 * hidden), lambda i: (0, 0)),       # w_l2
            pl.BlockSpec((1, 4 * hidden), lambda i: (0, 0)),                # b2
        ],
        out_specs=(
            pl.BlockSpec((num_steps, B, hidden), lambda i: (0, 0, 0)),
            pl.BlockSpec((num_steps, B, HW), lambda i: (0, 0, 0)),
        ),
        scratch_shapes=[
            pltpu.VMEM((B, 2 * hidden), jnp.float32),   # [h1n, h2] staging
        ],
        compiler_params=pltpu.CompilerParams(
            dimension_semantics=("arbitrary",)),
    )(ih1_all, fmap_flat, params['w_hh1'], w_l2, params['b2'])

    output_hiddens = jnp.transpose(hid_tm, (1, 0, 2))                 # (B, T, H)
    masks = jnp.transpose(mask_tm, (1, 0, 2)).reshape(B, num_steps, Hh, W)

    # Train branch applies the generator to all contexts after the loop
    # (PyTorch: g = self.generator(output_hiddens)) — one dense matmul.
    g = output_hiddens @ params['w_gen'] + params['b_gen']            # (B, T, NC)
    return g, output_hiddens, masks


# ---------------------------------------------------------------------------
# Pure-JAX reference (mirrors the PyTorch train branch step-by-step)
# ---------------------------------------------------------------------------
def _lstm_cell(x, h, c, w_ih, w_hh, b, H):
    gates = x @ w_ih + h @ w_hh + b
    i_g = jax.nn.sigmoid(gates[:, 0 * H:1 * H])
    f_g = jax.nn.sigmoid(gates[:, 1 * H:2 * H])
    g_g = jnp.tanh(gates[:, 2 * H:3 * H])
    o_g = jax.nn.sigmoid(gates[:, 3 * H:4 * H])
    c_new = f_g * c + i_g * g_g
    h_new = o_g * jnp.tanh(c_new)
    return h_new, c_new


def reference_forward(origin_fmap, text, params, num_steps):
    B, C, Hh, W = origin_fmap.shape
    hidden = C
    HW = Hh * W
    num_classes = params['w_emb'].shape[0]
    fmap_flat = jnp.transpose(origin_fmap, (0, 2, 3, 1)).reshape(B, HW, hidden)

    h1 = jnp.zeros((B, hidden), jnp.float32)
    c1 = jnp.zeros((B, hidden), jnp.float32)
    h2 = jnp.zeros((B, hidden), jnp.float32)
    c2 = jnp.zeros((B, hidden), jnp.float32)

    gs, hids, masks = [], [], []
    for i in range(num_steps):
        x_t = jax.nn.one_hot(text[:, i], num_classes, dtype=jnp.float32)
        x_emb = x_t @ params['w_emb'] + params['b_emb']
        h1, c1 = _lstm_cell(x_emb, h1, c1, params['w_ih1'], params['w_hh1'],
                            params['b1'], hidden)
        h2, c2 = _lstm_cell(h1, h2, c2, params['w_ih2'], params['w_hh2'],
                            params['b2'], hidden)
        a = jax.nn.sigmoid(jnp.einsum('bh,bnh->bn', h2, fmap_flat))
        context = jnp.einsum('bn,bnh->bh', a, fmap_flat)
        g_t = context @ params['w_gen'] + params['b_gen']
        gs.append(g_t)
        hids.append(context)
        masks.append(a)

    g = jnp.stack(gs, axis=1)
    output_hiddens = jnp.stack(hids, axis=1)
    masks = jnp.stack(masks, axis=1).reshape(B, num_steps, Hh, W)
    return g, output_hiddens, masks


def make_params(key, hidden, num_classes):
    """Synthetic parameters in PyTorch shapes, pre-transposed so kernels do x @ W."""
    ks = jax.random.split(key, 12)
    s = 0.1
    emb_w = jax.random.normal(ks[0], (hidden, num_classes), jnp.float32) * s
    emb_b = jax.random.normal(ks[1], (hidden,), jnp.float32) * s
    w_ih1 = jax.random.normal(ks[2], (4 * hidden, hidden), jnp.float32) * s
    w_hh1 = jax.random.normal(ks[3], (4 * hidden, hidden), jnp.float32) * s
    b_ih1 = jax.random.normal(ks[4], (4 * hidden,), jnp.float32) * s
    b_hh1 = jax.random.normal(ks[5], (4 * hidden,), jnp.float32) * s
    w_ih2 = jax.random.normal(ks[6], (4 * hidden, hidden), jnp.float32) * s
    w_hh2 = jax.random.normal(ks[7], (4 * hidden, hidden), jnp.float32) * s
    b_ih2 = jax.random.normal(ks[8], (4 * hidden,), jnp.float32) * s
    b_hh2 = jax.random.normal(ks[9], (4 * hidden,), jnp.float32) * s
    gen_w = jax.random.normal(ks[10], (num_classes, hidden), jnp.float32) * s
    gen_b = jax.random.normal(ks[11], (num_classes,), jnp.float32) * s
    return dict(
        w_emb=emb_w.T, b_emb=emb_b[None, :],
        w_ih1=w_ih1.T, w_hh1=w_hh1.T, b1=(b_ih1 + b_hh1)[None, :],
        w_ih2=w_ih2.T, w_hh2=w_hh2.T, b2=(b_ih2 + b_hh2)[None, :],
        w_gen=gen_w.T, b_gen=gen_b[None, :],
    )


if __name__ == "__main__":
    B = 2
    hidden_size = 32          # == channels of origin_fmap (module requires this)
    Hh = W = 8
    num_steps = 8
    num_classes = 16

    key = jax.random.PRNGKey(0)
    k_params, k_fmap, k_text = jax.random.split(key, 3)

    params = make_params(k_params, hidden_size, num_classes)
    origin_fmap = jax.random.normal(
        k_fmap, (B, hidden_size, Hh, W), jnp.float32)
    text = jax.random.randint(k_text, (B, num_steps), 0, num_classes,
                              dtype=jnp.int32)

    g, output_hiddens, masks = hybrid_branch_forward(
        origin_fmap, text, params, num_steps)
    jax.block_until_ready((g, output_hiddens, masks))

    g_ref, hid_ref, mask_ref = reference_forward(
        origin_fmap, text, params, num_steps)

    np.testing.assert_allclose(np.asarray(g), np.asarray(g_ref),
                               rtol=2e-3, atol=2e-3)
    np.testing.assert_allclose(np.asarray(output_hiddens), np.asarray(hid_ref),
                               rtol=2e-3, atol=2e-3)
    np.testing.assert_allclose(np.asarray(masks), np.asarray(mask_ref),
                               rtol=2e-3, atol=2e-3)

    print("KERNEL_OK")
</pallas_src>

<mosaic_0001>
module attributes {stable_mosaic.version = 11 : i64} {
  func.func @hybrid_kernel(%arg0: i32, %arg1: memref<8x2x128xf32, #tpu.memory_space<vmem>>, %arg2: memref<2x64x32xf32, #tpu.memory_space<vmem>>, %arg3: memref<32x128xf32, #tpu.memory_space<vmem>>, %arg4: memref<64x128xf32, #tpu.memory_space<vmem>>, %arg5: memref<1x128xf32, #tpu.memory_space<vmem>>, %arg6: memref<8x2x32xf32, #tpu.memory_space<vmem>>, %arg7: memref<8x2x64xf32, #tpu.memory_space<vmem>>, %arg8: memref<2x64xf32, #tpu.memory_space<vmem>>) attributes {dimension_semantics = [#tpu.dimension_semantics<arbitrary>], iteration_bounds = array<i64: 1>, scalar_prefetch = 0 : i64, scratch_operands = 1 : i64, tpu.core_type = #tpu.core_type<tc>, window_params = [{pipeline_mode = #tpu.pipeline_mode<synchronous>, transform_indices = @transform_0, window_bounds = array<i64: 8, 2, 128>}, {pipeline_mode = #tpu.pipeline_mode<synchronous>, transform_indices = @transform_1, window_bounds = array<i64: 2, 64, 32>}, {pipeline_mode = #tpu.pipeline_mode<synchronous>, transform_indices = @transform_2, window_bounds = array<i64: 32, 128>}, {pipeline_mode = #tpu.pipeline_mode<synchronous>, transform_indices = @transform_3, window_bounds = array<i64: 64, 128>}, {pipeline_mode = #tpu.pipeline_mode<synchronous>, transform_indices = @transform_4, window_bounds = array<i64: 1, 128>}, {pipeline_mode = #tpu.pipeline_mode<synchronous>, transform_indices = @transform_5, window_bounds = array<i64: 8, 2, 32>}, {pipeline_mode = #tpu.pipeline_mode<synchronous>, transform_indices = @transform_6, window_bounds = array<i64: 8, 2, 64>}]} {
    %c0 = arith.constant 0 : index
    %c0_0 = arith.constant 0 : index
    %c0_1 = arith.constant 0 : index
    %0 = vector.load %arg2[%c0, %c0_0, %c0_1] : memref<2x64x32xf32, #tpu.memory_space<vmem>>, vector<2x64x32xf32>
    %c0_2 = arith.constant 0 : index
    %c0_3 = arith.constant 0 : index
    %1 = vector.load %arg3[%c0_2, %c0_3] : memref<32x128xf32, #tpu.memory_space<vmem>>, vector<32x128xf32>
    %c0_4 = arith.constant 0 : index
    %c0_5 = arith.constant 0 : index
    %2 = vector.load %arg4[%c0_4, %c0_5] : memref<64x128xf32, #tpu.memory_space<vmem>>, vector<64x128xf32>
    %c0_6 = arith.constant 0 : index
    %c0_7 = arith.constant 0 : index
    %3 = vector.load %arg5[%c0_6, %c0_7] : memref<1x128xf32, #tpu.memory_space<vmem>>, vector<1x128xf32>
    %cst = arith.constant 0.000000e+00 : f32
    %4 = vector.broadcast %cst : f32 to vector<2x32xf32>
    %c0_i32 = arith.constant 0 : i32
    %5 = arith.index_cast %c0_i32 : i32 to index
    %c0_8 = arith.constant 0 : index
    %c0_9 = arith.constant 0 : index
    %6 = vector.load %arg1[%5, %c0_8, %c0_9] : memref<8x2x128xf32, #tpu.memory_space<vmem>>, vector<1x2x128xf32>
    %7 = vector.shape_cast %6 : vector<1x2x128xf32> to vector<2x128xf32>
    %cst_10 = arith.constant dense<0.000000e+00> : vector<2x128xf32>
    %8 = tpu.matmul %4, %1, %cst_10 {dimension_numbers = #tpu.dot_dimension_numbers<[1], [0], [0], [1], [0, 0, 1, 1], [], []>} : vector<2x32xf32>, vector<32x128xf32>, vector<2x128xf32> -> vector<2x128xf32>
    %9 = arith.addf %7, %8 : vector<2x128xf32>
    %10 = vector.extract_strided_slice %9 {offsets = [0, 0], sizes = [2, 32], strides = [1, 1]} : vector<2x128xf32> to vector<2x32xf32>
    %11 = arith.negf %10 : vector<2x32xf32>
    %12 = math.exp %11 : vector<2x32xf32>
    %cst_11 = arith.constant 1.000000e+00 : f32
    %13 = vector.broadcast %cst_11 : f32 to vector<2x32xf32>
    %14 = arith.addf %13, %12 : vector<2x32xf32>
    %15 = arith.divf %13, %14 : vector<2x32xf32>
    %16 = vector.extract_strided_slice %9 {offsets = [0, 32], sizes = [2, 32], strides = [1, 1]} : vector<2x128xf32> to vector<2x32xf32>
    %17 = arith.negf %16 : vector<2x32xf32>
    %18 = math.exp %17 : vector<2x32xf32>
    %cst_12 = arith.constant 1.000000e+00 : f32
    %19 = vector.broadcast %cst_12 : f32 to vector<2x32xf32>
    %20 = arith.addf %19, %18 : vector<2x32xf32>
    %21 = arith.divf %19, %20 : vector<2x32xf32>
    %22 = vector.extract_strided_slice %9 {offsets = [0, 64], sizes = [2, 32], strides = [1, 1]} : vector<2x128xf32> to vector<2x32xf32>
    %23 = math.tanh %22 : vector<2x32xf32>
    %24 = vector.extract_strided_slice %9 {offsets = [0, 96], sizes = [2, 32], strides = [1, 1]} : vector<2x128xf32> to vector<2x32xf32>
    %25 = arith.negf %24 : vector<2x32xf32>
    %26 = math.exp %25 : vector<2x32xf32>
    %cst_13 = arith.constant 1.000000e+00 : f32
    %27 = vector.broadcast %cst_13 : f32 to vector<2x32xf32>
    %28 = arith.addf %27, %26 : vector<2x32xf32>
    %29 = arith.divf %27, %28 : vector<2x32xf32>
    %30 = arith.mulf %21, %4 : vector<2x32xf32>
    %31 = arith.mulf %15, %23 : vector<2x32xf32>
    %32 = arith.addf %30, %31 : vector<2x32xf32>
    %33 = math.tanh %32 : vector<2x32xf32>
    %34 = arith.mulf %29, %33 : vector<2x32xf32>
    %c0_14 = arith.constant 0 : index
    %c0_15 = arith.constant 0 : index
    %35 = vector.load %arg8[%c0_14, %c0_15] : memref<2x64xf32, #tpu.memory_space<vmem>>, vector<2x32xf32>
    tpu.vector_store %arg8[%c0_14, %c0_15], %34 {strides = array<i32>} : memref<2x64xf32, #tpu.memory_space<vmem>>, vector<2x32xf32>,
    %c0_16 = arith.constant 0 : index
    %c32 = arith.constant 32 : index
    %36 = vector.load %arg8[%c0_16, %c32] : memref<2x64xf32, #tpu.memory_space<vmem>>, vector<2x32xf32>
    tpu.vector_store %arg8[%c0_16, %c32], %4 {strides = array<i32>} : memref<2x64xf32, #tpu.memory_space<vmem>>, vector<2x32xf32>,
    %c0_17 = arith.constant 0 : index
    %c0_18 = arith.constant 0 : index
    %37 = vector.load %arg8[%c0_17, %c0_18] : memref<2x64xf32, #tpu.memory_space<vmem>>, vector<2x64xf32>
    %cst_19 = arith.constant dense<0.000000e+00> : vector<2x128xf32>
    %38 = tpu.matmul %37, %2, %cst_19 {dimension_numbers = #tpu.dot_dimension_numbers<[1], [0], [0], [1], [0, 0, 1, 1], [], []>} : vector<2x64xf32>, vector<64x128xf32>, vector<2x128xf32> -> vector<2x128xf32>
    %39 = vector.broadcast %3 : vector<1x128xf32> to vector<2x128xf32>
    %40 = arith.addf %38, %39 : vector<2x128xf32>
    %41 = vector.extract_strided_slice %40 {offsets = [0, 0], sizes = [2, 32], strides = [1, 1]} : vector<2x128xf32> to vector<2x32xf32>
    %42 = arith.negf %41 : vector<2x32xf32>
    %43 = math.exp %42 : vector<2x32xf32>
    %cst_20 = arith.constant 1.000000e+00 : f32
    %44 = vector.broadcast %cst_20 : f32 to vector<2x32xf32>
    %45 = arith.addf %44, %43 : vector<2x32xf32>
    %46 = arith.divf %44, %45 : vector<2x32xf32>
    %47 = vector.extract_strided_slice %40 {offsets = [0, 32], sizes = [2, 32], strides = [1, 1]} : vector<2x128xf32> to vector<2x32xf32>
    %48 = arith.negf %47 : vector<2x32xf32>
    %49 = math.exp %48 : vector<2x32xf32>
    %cst_21 = arith.constant 1.000000e+00 : f32
    %50 = vector.broadcast %cst_21 : f32 to vector<2x32xf32>
    %51 = arith.addf %50, %49 : vector<2x32xf32>
    %52 = arith.divf %50, %51 : vector<2x32xf32>
    %53 = vector.extract_strided_slice %40 {offsets = [0, 64], sizes = [2, 32], strides = [1, 1]} : vector<2x128xf32> to vector<2x32xf32>
    %54 = math.tanh %53 : vector<2x32xf32>
    %55 = vector.extract_strided_slice %40 {offsets = [0, 96], sizes = [2, 32], strides = [1, 1]} : vector<2x128xf32> to vector<2x32xf32>
    %56 = arith.negf %55 : vector<2x32xf32>
    %57 = math.exp %56 : vector<2x32xf32>
    %cst_22 = arith.constant 1.000000e+00 : f32
    %58 = vector.broadcast %cst_22 : f32 to vector<2x32xf32>
    %59 = arith.addf %58, %57 : vector<2x32xf32>
    %60 = arith.divf %58, %59 : vector<2x32xf32>
    %61 = arith.mulf %52, %4 : vector<2x32xf32>
    %62 = arith.mulf %46, %54 : vector<2x32xf32>
    %63 = arith.addf %61, %62 : vector<2x32xf32>
    %64 = math.tanh %63 : vector<2x32xf32>
    %65 = arith.mulf %60, %64 : vector<2x32xf32>
    %66 = vector.shape_cast %65 : vector<2x32xf32> to vector<2x1x32xf32>
    %67 = vector.broadcast %66 : vector<2x1x32xf32> to vector<2x64x32xf32>
    %68 = arith.mulf %67, %0 : vector<2x64x32xf32>
    %cst_23 = arith.constant dense<0.000000e+00> : vector<2x64xf32>
    %69 = vector.multi_reduction <add>, %68, %cst_23 [2] : vector<2x64x32xf32> to vector<2x64xf32>
    %70 = arith.negf %69 : vector<2x64xf32>
    %71 = math.exp %70 : vector<2x64xf32>
    %cst_24 = arith.constant 1.000000e+00 : f32
    %72 = vector.broadcast %cst_24 : f32 to vector<2x64xf32>
    %73 = arith.addf %72, %71 : vector<2x64xf32>
    %74 = arith.divf %72, %73 : vector<2x64xf32>
    %75 = vector.shape_cast %74 : vector<2x64xf32> to vector<2x64x1xf32>
    %76 = vector.broadcast %75 : vector<2x64x1xf32> to vector<2x64x32xf32>
    %77 = arith.mulf %76, %0 : vector<2x64x32xf32>
    %cst_25 = arith.constant dense<0.000000e+00> : vector<2x32xf32>
    %78 = vector.multi_reduction <add>, %77, %cst_25 [1] : vector<2x64x32xf32> to vector<2x32xf32>
    %79 = arith.index_cast %c0_i32 : i32 to index
    %c0_26 = arith.constant 0 : index
    %c0_27 = arith.constant 0 : index
    %80 = vector.load %arg6[%79, %c0_26, %c0_27] : memref<8x2x32xf32, #tpu.memory_space<vmem>>, vector<1x2x32xf32>
    %81 = vector.shape_cast %80 : vector<1x2x32xf32> to vector<2x32xf32>
    %82 = vector.shape_cast %78 : vector<2x32xf32> to vector<1x2x32xf32>
    tpu.vector_store %arg6[%79, %c0_26, %c0_27], %82 {strides = array<i32>} : memref<8x2x32xf32, #tpu.memory_space<vmem>>, vector<1x2x32xf32>,
    %83 = arith.index_cast %c0_i32 : i32 to index
    %c0_28 = arith.constant 0 : index
    %c0_29 = arith.constant 0 : index
    %84 = vector.load %arg7[%83, %c0_28, %c0_29] : memref<8x2x64xf32, #tpu.memory_space<vmem>>, vector<1x2x64xf32>
    %85 = vector.shape_cast %84 : vector<1x2x64xf32> to vector<2x64xf32>
    %86 = vector.shape_cast %74 : vector<2x64xf32> to vector<1x2x64xf32>
    tpu.vector_store %arg7[%83, %c0_28, %c0_29], %86 {strides = array<i32>} : memref<8x2x64xf32, #tpu.memory_space<vmem>>, vector<1x2x64xf32>,
    %c1_i32 = arith.constant 1 : i32
    %87 = arith.index_cast %c1_i32 : i32 to index
    %c0_30 = arith.constant 0 : index
    %c0_31 = arith.constant 0 : index
    %88 = vector.load %arg1[%87, %c0_30, %c0_31] : memref<8x2x128xf32, #tpu.memory_space<vmem>>, vector<1x2x128xf32>
    %89 = vector.shape_cast %88 : vector<1x2x128xf32> to vector<2x128xf32>
    %cst_32 = arith.constant dense<0.000000e+00> : vector<2x128xf32>
    %90 = tpu.matmul %34, %1, %cst_32 {dimension_numbers = #tpu.dot_dimension_numbers<[1], [0], [0], [1], [0, 0, 1, 1], [], []>} : vector<2x32xf32>, vector<32x128xf32>, vector<2x128xf32> -> vector<2x128xf32>
    %91 = arith.addf %89, %90 : vector<2x128xf32>
    %92 = vector.extract_strided_slice %91 {offsets = [0, 0], sizes = [2, 32], strides = [1, 1]} : vector<2x128xf32> to vector<2x32xf32>
    %93 = arith.negf %92 : vector<2x32xf32>
    %94 = math.exp %93 : vector<2x32xf32>
    %cst_33 = arith.constant 1.000000e+00 : f32
    %95 = vector.broadcast %cst_33 : f32 to vector<2x32xf32>
    %96 = arith.addf %95, %94 : vector<2x32xf32>
    %97 = arith.divf %95, %96 : vector<2x32xf32>
    %98 = vector.extract_strided_slice %91 {offsets = [0, 32], sizes = [2, 32], strides = [1, 1]} : vector<2x128xf32> to vector<2x32xf32>
    %99 = arith.negf %98 : vector<2x32xf32>
    %100 = math.exp %99 : vector<2x32xf32>
    %cst_34 = arith.constant 1.000000e+00 : f32
    %101 = vector.broadcast %cst_34 : f32 to vector<2x32xf32>
    %102 = arith.addf %101, %100 : vector<2x32xf32>
    %103 = arith.divf %101, %102 : vector<2x32xf32>
    %104 = vector.extract_strided_slice %91 {offsets = [0, 64], sizes = [2, 32], strides = [1, 1]} : vector<2x128xf32> to vector<2x32xf32>
    %105 = math.tanh %104 : vector<2x32xf32>
    %106 = vector.extract_strided_slice %91 {offsets = [0, 96], sizes = [2, 32], strides = [1, 1]} : vector<2x128xf32> to vector<2x32xf32>
    %107 = arith.negf %106 : vector<2x32xf32>
    %108 = math.exp %107 : vector<2x32xf32>
    %cst_35 = arith.constant 1.000000e+00 : f32
    %109 = vector.broadcast %cst_35 : f32 to vector<2x32xf32>
    %110 = arith.addf %109, %108 : vector<2x32xf32>
    %111 = arith.divf %109, %110 : vector<2x32xf32>
    %112 = arith.mulf %103, %32 : vector<2x32xf32>
    %113 = arith.mulf %97, %105 : vector<2x32xf32>
    %114 = arith.addf %112, %113 : vector<2x32xf32>
    %115 = math.tanh %114 : vector<2x32xf32>
    %116 = arith.mulf %111, %115 : vector<2x32xf32>
    %c0_36 = arith.constant 0 : index
    %c0_37 = arith.constant 0 : index
    %117 = vector.load %arg8[%c0_36, %c0_37] : memref<2x64xf32, #tpu.memory_space<vmem>>, vector<2x32xf32>
    tpu.vector_store %arg8[%c0_36, %c0_37], %116 {strides = array<i32>} : memref<2x64xf32, #tpu.memory_space<vmem>>, vector<2x32xf32>,
    %c0_38 = arith.constant 0 : index
    %c32_39 = arith.constant 32 : index
    %118 = vector.load %arg8[%c0_38, %c32_39] : memref<2x64xf32, #tpu.memory_space<vmem>>, vector<2x32xf32>
    tpu.vector_store %arg8[%c0_38, %c32_39], %65 {strides = array<i32>} : memref<2x64xf32, #tpu.memory_space<vmem>>, vector<2x32xf32>,
    %c0_40 = arith.constant 0 : index
    %c0_41 = arith.constant 0 : index
    %119 = vector.load %arg8[%c0_40, %c0_41] : memref<2x64xf32, #tpu.memory_space<vmem>>, vector<2x64xf32>
    %cst_42 = arith.constant dense<0.000000e+00> : vector<2x128xf32>
    %120 = tpu.matmul %119, %2, %cst_42 {dimension_numbers = #tpu.dot_dimension_numbers<[1], [0], [0], [1], [0, 0, 1, 1], [], []>} : vector<2x64xf32>, vector<64x128xf32>, vector<2x128xf32> -> vector<2x128xf32>
    %121 = vector.broadcast %3 : vector<1x128xf32> to vector<2x128xf32>
    %122 = arith.addf %120, %121 : vector<2x128xf32>
    %123 = vector.extract_strided_slice %122 {offsets = [0, 0], sizes = [2, 32], strides = [1, 1]} : vector<2x128xf32> to vector<2x32xf32>
    %124 = arith.negf %123 : vector<2x32xf32>
    %125 = math.exp %124 : vector<2x32xf32>
    %cst_43 = arith.constant 1.000000e+00 : f32
    %126 = vector.broadcast %cst_43 : f32 to vector<2x32xf32>
    %127 = arith.addf %126, %125 : vector<2x32xf32>
    %128 = arith.divf %126, %127 : vector<2x32xf32>
    %129 = vector.extract_strided_slice %122 {offsets = [0, 32], sizes = [2, 32], strides = [1, 1]} : vector<2x128xf32> to vector<2x32xf32>
    %130 = arith.negf %129 : vector<2x32xf32>
    %131 = math.exp %130 : vector<2x32xf32>
    %cst_44 = arith.constant 1.000000e+00 : f32
    %132 = vector.broadcast %cst_44 : f32 to vector<2x32xf32>
    %133 = arith.addf %132, %131 : vector<2x32xf32>
    %134 = arith.divf %132, %133 : vector<2x32xf32>
    %135 = vector.extract_strided_slice %122 {offsets = [0, 64], sizes = [2, 32], strides = [1, 1]} : vector<2x128xf32> to vector<2x32xf32>
    %136 = math.tanh %135 : vector<2x32xf32>
    %137 = vector.extract_strided_slice %122 {offsets = [0, 96], sizes = [2, 32], strides = [1, 1]} : vector<2x128xf32> to vector<2x32xf32>
    %138 = arith.negf %137 : vector<2x32xf32>
    %139 = math.exp %138 : vector<2x32xf32>
    %cst_45 = arith.constant 1.000000e+00 : f32
    %140 = vector.broadcast %cst_45 : f32 to vector<2x32xf32>
    %141 = arith.addf %140, %139 : vector<2x32xf32>
    %142 = arith.divf %140, %141 : vector<2x32xf32>
    %143 = arith.mulf %134, %63 : vector<2x32xf32>
    %144 = arith.mulf %128, %136 : vector<2x32xf32>
    %145 = arith.addf %143, %144 : vector<2x32xf32>
    %146 = math.tanh %145 : vector<2x32xf32>
    %147 = arith.mulf %142, %146 : vector<2x32xf32>
    %148 = vector.shape_cast %147 : vector<2x32xf32> to vector<2x1x32xf32>
    %149 = vector.broadcast %148 : vector<2x1x32xf32> to vector<2x64x32xf32>
    %150 = arith.mulf %149, %0 : vector<2x64x32xf32>
    %cst_46 = arith.constant dense<0.000000e+00> : vector<2x64xf32>
    %151 = vector.multi_reduction <add>, %150, %cst_46 [2] : vector<2x64x32xf32> to vector<2x64xf32>
    %152 = arith.negf %151 : vector<2x64xf32>
    %153 = math.exp %152 : vector<2x64xf32>
    %cst_47 = arith.constant 1.000000e+00 : f32
    %154 = vector.broadcast %cst_47 : f32 to vector<2x64xf32>
    %155 = arith.addf %154, %153 : vector<2x64xf32>
    %156 = arith.divf %154, %155 : vector<2x64xf32>
    %157 = vector.shape_cast %156 : vector<2x64xf32> to vector<2x64x1xf32>
    %158 = vector.broadcast %157 : vector<2x64x1xf32> to vector<2x64x32xf32>
    %159 = arith.mulf %158, %0 : vector<2x64x32xf32>
    %cst_48 = arith.constant dense<0.000000e+00> : vector<2x32xf32>
    %160 = vector.multi_reduction <add>, %159, %cst_48 [1] : vector<2x64x32xf32> to vector<2x32xf32>
    %161 = arith.index_cast %c1_i32 : i32 to index
    %c0_49 = arith.constant 0 : index
    %c0_50 = arith.constant 0 : index
    %162 = vector.load %arg6[%161, %c0_49, %c0_50] : memref<8x2x32xf32, #tpu.memory_space<vmem>>, vector<1x2x32xf32>
    %163 = vector.shape_cast %162 : vector<1x2x32xf32> to vector<2x32xf32>
    %164 = vector.shape_cast %160 : vector<2x32xf32> to vector<1x2x32xf32>
    tpu.vector_store %arg6[%161, %c0_49, %c0_50], %164 {strides = array<i32>} : memref<8x2x32xf32, #tpu.memory_space<vmem>>, vector<1x2x32xf32>,
    %165 = arith.index_cast %c1_i32 : i32 to index
    %c0_51 = arith.constant 0 : index
    %c0_52 = arith.constant 0 : index
    %166 = vector.load %arg7[%165, %c0_51, %c0_52] : memref<8x2x64xf32, #tpu.memory_space<vmem>>, vector<1x2x64xf32>
    %167 = vector.shape_cast %166 : vector<1x2x64xf32> to vector<2x64xf32>
    %168 = vector.shape_cast %156 : vector<2x64xf32> to vector<1x2x64xf32>
    tpu.vector_store %arg7[%165, %c0_51, %c0_52], %168 {strides = array<i32>} : memref<8x2x64xf32, #tpu.memory_space<vmem>>, vector<1x2x64xf32>,
    %c2_i32 = arith.constant 2 : i32
    %169 = arith.index_cast %c2_i32 : i32 to index
    %c0_53 = arith.constant 0 : index
    %c0_54 = arith.constant 0 : index
    %170 = vector.load %arg1[%169, %c0_53, %c0_54] : memref<8x2x128xf32, #tpu.memory_space<vmem>>, vector<1x2x128xf32>
    %171 = vector.shape_cast %170 : vector<1x2x128xf32> to vector<2x128xf32>
    %cst_55 = arith.constant dense<0.000000e+00> : vector<2x128xf32>
    %172 = tpu.matmul %116, %1, %cst_55 {dimension_numbers = #tpu.dot_dimension_numbers<[1], [0], [0], [1], [0, 0, 1, 1], [], []>} : vector<2x32xf32>, vector<32x128xf32>, vector<2x128xf32> -> vector<2x128xf32>
    %173 = arith.addf %171, %172 : vector<2x128xf32>
    %174 = vector.extract_strided_slice %173 {offsets = [0, 0], sizes = [2, 32], strides = [1, 1]} : vector<2x128xf32> to vector<2x32xf32>
    %175 = arith.negf %174 : vector<2x32xf32>
    %176 = math.exp %175 : vector<2x32xf32>
    %cst_56 = arith.constant 1.000000e+00 : f32
    %177 = vector.broadcast %cst_56 : f32 to vector<2x32xf32>
    %178 = arith.addf %177, %176 : vector<2x32xf32>
    %179 = arith.divf %177, %178 : vector<2x32xf32>
    %180 = vector.extract_strided_slice %173 {offsets = [0, 32], sizes = [2, 32], strides = [1, 1]} : vector<2x128xf32> to vector<2x32xf32>
    %181 = arith.negf %180 : vector<2x32xf32>
    %182 = math.exp %181 : vector<2x32xf32>
    %cst_57 = arith.constant 1.000000e+00 : f32
    %183 = vector.broadcast %cst_57 : f32 to vector<2x32xf32>
    %184 = arith.addf %183, %182 : vector<2x32xf32>
    %185 = arith.divf %183, %184 : vector<2x32xf32>
    %186 = vector.extract_strided_slice %173 {offsets = [0, 64], sizes = [2, 32], strides = [1, 1]} : vector<2x128xf32> to vector<2x32xf32>
    %187 = math.tanh %186 : vector<2x32xf32>
    %188 = vector.extract_strided_slice %173 {offsets = [0, 96], sizes = [2, 32], strides = [1, 1]} : vector<2x128xf32> to vector<2x32xf32>
    %189 = arith.negf %188 : vector<2x32xf32>
    %190 = math.exp %189 : vector<2x32xf32>
    %cst_58 = arith.constant 1.000000e+00 : f32
    %191 = vector.broadcast %cst_58 : f32 to vector<2x32xf32>
    %192 = arith.addf %191, %190 : vector<2x32xf32>
    %193 = arith.divf %191, %192 : vector<2x32xf32>
    %194 = arith.mulf %185, %114 : vector<2x32xf32>
    %195 = arith.mulf %179, %187 : vector<2x32xf32>
    %196 = arith.addf %194, %195 : vector<2x32xf32>
    %197 = math.tanh %196 : vector<2x32xf32>
    %198 = arith.mulf %193, %197 : vector<2x32xf32>
    %c0_59 = arith.constant 0 : index
    %c0_60 = arith.constant 0 : index
    %199 = vector.load %arg8[%c0_59, %c0_60] : memref<2x64xf32, #tpu.memory_space<vmem>>, vector<2x32xf32>
    tpu.vector_store %arg8[%c0_59, %c0_60], %198 {strides = array<i32>} : memref<2x64xf32, #tpu.memory_space<vmem>>, vector<2x32xf32>,
    %c0_61 = arith.constant 0 : index
    %c32_62 = arith.constant 32 : index
    %200 = vector.load %arg8[%c0_61, %c32_62] : memref<2x64xf32, #tpu.memory_space<vmem>>, vector<2x32xf32>
    tpu.vector_store %arg8[%c0_61, %c32_62], %147 {strides = array<i32>} : memref<2x64xf32, #tpu.memory_space<vmem>>, vector<2x32xf32>,
    %c0_63 = arith.constant 0 : index
    %c0_64 = arith.constant 0 : index
    %201 = vector.load %arg8[%c0_63, %c0_64] : memref<2x64xf32, #tpu.memory_space<vmem>>, vector<2x64xf32>
    %cst_65 = arith.constant dense<0.000000e+00> : vector<2x128xf32>
    %202 = tpu.matmul %201, %2, %cst_65 {dimension_numbers = #tpu.dot_dimension_numbers<[1], [0], [0], [1], [0, 0, 1, 1], [], []>} : vector<2x64xf32>, vector<64x128xf32>, vector<2x128xf32> -> vector<2x128xf32>
    %203 = vector.broadcast %3 : vector<1x128xf32> to vector<2x128xf32>
    %204 = arith.addf %202, %203 : vector<2x128xf32>
    %205 = vector.extract_strided_slice %204 {offsets = [0, 0], sizes = [2, 32], strides = [1, 1]} : vector<2x128xf32> to vector<2x32xf32>
    %206 = arith.negf %205 : vector<2x32xf32>
    %207 = math.exp %206 : vector<2x32xf32>
    %cst_66 = arith.constant 1.000000e+00 : f32
    %208 = vector.broadcast %cst_66 : f32 to vector<2x32xf32>
    %209 = arith.addf %208, %207 : vector<2x32xf32>
    %210 = arith.divf %208, %209 : vector<2x32xf32>
    %211 = vector.extract_strided_slice %204 {offsets = [0, 32], sizes = [2, 32], strides = [1, 1]} : vector<2x128xf32> to vector<2x32xf32>
    %212 = arith.negf %211 : vector<2x32xf32>
    %213 = math.exp %212 : vector<2x32xf32>
    %cst_67 = arith.constant 1.000000e+00 : f32
    %214 = vector.broadcast %cst_67 : f32 to vector<2x32xf32>
    %215 = arith.addf %214, %213 : vector<2x32xf32>
    %216 = arith.divf %214, %215 : vector<2x32xf32>
    %217 = vector.extract_strided_slice %204 {offsets = [0, 64], sizes = [2, 32], strides = [1, 1]} : vector<2x128xf32> to vector<2x32xf32>
    %218 = math.tanh %217 : vector<2x32xf32>
    %219 = vector.extract_strided_slice %204 {offsets = [0, 96], sizes = [2, 32], strides = [1, 1]} : vector<2x128xf32> to vector<2x32xf32>
    %220 = arith.negf %219 : vector<2x32xf32>
    %221 = math.exp %220 : vector<2x32xf32>
    %cst_68 = arith.constant 1.000000e+00 : f32
    %222 = vector.broadcast %cst_68 : f32 to vector<2x32xf32>
    %223 = arith.addf %222, %221 : vector<2x32xf32>
    %224 = arith.divf %222, %223 : vector<2x32xf32>
    %225 = arith.mulf %216, %145 : vector<2x32xf32>
    %226 = arith.mulf %210, %218 : vector<2x32xf32>
    %227 = arith.addf %225, %226 : vector<2x32xf32>
    %228 = math.tanh %227 : vector<2x32xf32>
    %229 = arith.mulf %224, %228 : vector<2x32xf32>
    %230 = vector.shape_cast %229 : vector<2x32xf32> to vector<2x1x32xf32>
    %231 = vector.broadcast %230 : vector<2x1x32xf32> to vector<2x64x32xf32>
    %232 = arith.mulf %231, %0 : vector<2x64x32xf32>
    %cst_69 = arith.constant dense<0.000000e+00> : vector<2x64xf32>
    %233 = vector.multi_reduction <add>, %232, %cst_69 [2] : vector<2x64x32xf32> to vector<2x64xf32>
    %234 = arith.negf %233 : vector<2x64xf32>
    %235 = math.exp %234 : vector<2x64xf32>
    %cst_70 = arith.constant 1.000000e+00 : f32
    %236 = vector.broadcast %cst_70 : f32 to vector<2x64xf32>
    %237 = arith.addf %236, %235 : vector<2x64xf32>
    %238 = arith.divf %236, %237 : vector<2x64xf32>
    %239 = vector.shape_cast %238 : vector<2x64xf32> to vector<2x64x1xf32>
    %240 = vector.broadcast %239 : vector<2x64x1xf32> to vector<2x64x32xf32>
    %241 = arith.mulf %240, %0 : vector<2x64x32xf32>
    %cst_71 = arith.constant dense<0.000000e+00> : vector<2x32xf32>
    %242 = vector.multi_reduction <add>, %241, %cst_71 [1] : vector<2x64x32xf32> to vector<2x32xf32>
    %243 = arith.index_cast %c2_i32 : i32 to index
    %c0_72 = arith.constant 0 : index
    %c0_73 = arith.constant 0 : index
    %244 = vector.load %arg6[%243, %c0_72, %c0_73] : memref<8x2x32xf32, #tpu.memory_space<vmem>>, vector<1x2x32xf32>
    %245 = vector.shape_cast %244 : vector<1x2x32xf32> to vector<2x32xf32>
    %246 = vector.shape_cast %242 : vector<2x32xf32> to vector<1x2x32xf32>
    tpu.vector_store %arg6[%243, %c0_72, %c0_73], %246 {strides = array<i32>} : memref<8x2x32xf32, #tpu.memory_space<vmem>>, vector<1x2x32xf32>,
    %247 = arith.index_cast %c2_i32 : i32 to index
    %c0_74 = arith.constant 0 : index
    %c0_75 = arith.constant 0 : index
    %248 = vector.load %arg7[%247, %c0_74, %c0_75] : memref<8x2x64xf32, #tpu.memory_space<vmem>>, vector<1x2x64xf32>
    %249 = vector.shape_cast %248 : vector<1x2x64xf32> to vector<2x64xf32>
    %250 = vector.shape_cast %238 : vector<2x64xf32> to vector<1x2x64xf32>
    tpu.vector_store %arg7[%247, %c0_74, %c0_75], %250 {strides = array<i32>} : memref<8x2x64xf32, #tpu.memory_space<vmem>>, vector<1x2x64xf32>,
    %c3_i32 = arith.constant 3 : i32
    %251 = arith.index_cast %c3_i32 : i32 to index
    %c0_76 = arith.constant 0 : index
    %c0_77 = arith.constant 0 : index
    %252 = vector.load %arg1[%251, %c0_76, %c0_77] : memref<8x2x128xf32, #tpu.memory_space<vmem>>, vector<1x2x128xf32>
    %253 = vector.shape_cast %252 : vector<1x2x128xf32> to vector<2x128xf32>
    %cst_78 = arith.constant dense<0.000000e+00> : vector<2x128xf32>
    %254 = tpu.matmul %198, %1, %cst_78 {dimension_numbers = #tpu.dot_dimension_numbers<[1], [0], [0], [1], [0, 0, 1, 1], [], []>} : vector<2x32xf32>, vector<32x128xf32>, vector<2x128xf32> -> vector<2x128xf32>
    %255 = arith.addf %253, %254 : vector<2x128xf32>
    %256 = vector.extract_strided_slice %255 {offsets = [0, 0], sizes = [2, 32], strides = [1, 1]} : vector<2x128xf32> to vector<2x32xf32>
    %257 = arith.negf %256 : vector<2x32xf32>
    %258 = math.exp %257 : vector<2x32xf32>
    %cst_79 = arith.constant 1.000000e+00 : f32
    %259 = vector.broadcast %cst_79 : f32 to vector<2x32xf32>
    %260 = arith.addf %259, %258 : vector<2x32xf32>
    %261 = arith.divf %259, %260 : vector<2x32xf32>
    %262 = vector.extract_strided_slice %255 {offsets = [0, 32], sizes = [2, 32], strides = [1, 1]} : vector<2x128xf32> to vector<2x32xf32>
    %263 = arith.negf %262 : vector<2x32xf32>
    %264 = math.exp %263 : vector<2x32xf32>
    %cst_80 = arith.constant 1.000000e+00 : f32
    %265 = vector.broadcast %cst_80 : f32 to vector<2x32xf32>
    %266 = arith.addf %265, %264 : vector<2x32xf32>
    %267 = arith.divf %265, %266 : vector<2x32xf32>
    %268 = vector.extract_strided_slice %255 {offsets = [0, 64], sizes = [2, 32], strides = [1, 1]} : vector<2x128xf32> to vector<2x32xf32>
    %269 = math.tanh %268 : vector<2x32xf32>
    %270 = vector.extract_strided_slice %255 {offsets = [0, 96], sizes = [2, 32], strides = [1, 1]} : vector<2x128xf32> to vector<2x32xf32>
    %271 = arith.negf %270 : vector<2x32xf32>
    %272 = math.exp %271 : vector<2x32xf32>
    %cst_81 = arith.constant 1.000000e+00 : f32
    %273 = vector.broadcast %cst_81 : f32 to vector<2x32xf32>
    %274 = arith.addf %273, %272 : vector<2x32xf32>
    %275 = arith.divf %273, %274 : vector<2x32xf32>
    %276 = arith.mulf %267, %196 : vector<2x32xf32>
    %277 = arith.mulf %261, %269 : vector<2x32xf32>
    %278 = arith.addf %276, %277 : vector<2x32xf32>
    %279 = math.tanh %278 : vector<2x32xf32>
    %280 = arith.mulf %275, %279 : vector<2x32xf32>
    %c0_82 = arith.constant 0 : index
    %c0_83 = arith.constant 0 : index
    %281 = vector.load %arg8[%c0_82, %c0_83] : memref<2x64xf32, #tpu.memory_space<vmem>>, vector<2x32xf32>
    tpu.vector_store %arg8[%c0_82, %c0_83], %280 {strides = array<i32>} : memref<2x64xf32, #tpu.memory_space<vmem>>, vector<2x32xf32>,
    %c0_84 = arith.constant 0 : index
    %c32_85 = arith.constant 32 : index
    %282 = vector.load %arg8[%c0_84, %c32_85] : memref<2x64xf32, #tpu.memory_space<vmem>>, vector<2x32xf32>
    tpu.vector_store %arg8[%c0_84, %c32_85], %229 {strides = array<i32>} : memref<2x64xf32, #tpu.memory_space<vmem>>, vector<2x32xf32>,
    %c0_86 = arith.constant 0 : index
    %c0_87 = arith.constant 0 : index
    %283 = vector.load %arg8[%c0_86, %c0_87] : memref<2x64xf32, #tpu.memory_space<vmem>>, vector<2x64xf32>
    %cst_88 = arith.constant dense<0.000000e+00> : vector<2x128xf32>
    %284 = tpu.matmul %283, %2, %cst_88 {dimension_numbers = #tpu.dot_dimension_numbers<[1], [0], [0], [1], [0, 0, 1, 1], [], []>} : vector<2x64xf32>, vector<64x128xf32>, vector<2x128xf32> -> vector<2x128xf32>
    %285 = vector.broadcast %3 : vector<1x128xf32> to vector<2x128xf32>
    %286 = arith.addf %284, %285 : vector<2x128xf32>
    %287 = vector.extract_strided_slice %286 {offsets = [0, 0], sizes = [2, 32], strides = [1, 1]} : vector<2x128xf32> to vector<2x32xf32>
    %288 = arith.negf %287 : vector<2x32xf32>
    %289 = math.exp %288 : vector<2x32xf32>
    %cst_89 = arith.constant 1.000000e+00 : f32
    %290 = vector.broadcast %cst_89 : f32 to vector<2x32xf32>
    %291 = arith.addf %290, %289 : vector<2x32xf32>
    %292 = arith.divf %290, %291 : vector<2x32xf32>
    %293 = vector.extract_strided_slice %286 {offsets = [0, 32], sizes = [2, 32], strides = [1, 1]} : vector<2x128xf32> to vector<2x32xf32>
    %294 = arith.negf %293 : vector<2x32xf32>
    %295 = math.exp %294 : vector<2x32xf32>
    %cst_90 = arith.constant 1.000000e+00 : f32
    %296 = vector.broadcast %cst_90 : f32 to vector<2x32xf32>
    %297 = arith.addf %296, %295 : vector<2x32xf32>
    %298 = arith.divf %296, %297 : vector<2x32xf32>
    %299 = vector.extract_strided_slice %286 {offsets = [0, 64], sizes = [2, 32], strides = [1, 1]} : vector<2x128xf32> to vector<2x32xf32>
    %300 = math.tanh %299 : vector<2x32xf32>
    %301 = vector.extract_strided_slice %286 {offsets = [0, 96], sizes = [2, 32], strides = [1, 1]} : vector<2x128xf32> to vector<2x32xf32>
    %302 = arith.negf %301 : vector<2x32xf32>
    %303 = math.exp %302 : vector<2x32xf32>
    %cst_91 = arith.constant 1.000000e+00 : f32
    %304 = vector.broadcast %cst_91 : f32 to vector<2x32xf32>
    %305 = arith.addf %304, %303 : vector<2x32xf32>
    %306 = arith.divf %304, %305 : vector<2x32xf32>
    %307 = arith.mulf %298, %227 : vector<2x32xf32>
    %308 = arith.mulf %292, %300 : vector<2x32xf32>
    %309 = arith.addf %307, %308 : vector<2x32xf32>
    %310 = math.tanh %309 : vector<2x32xf32>
    %311 = arith.mulf %306, %310 : vector<2x32xf32>
    %312 = vector.shape_cast %311 : vector<2x32xf32> to vector<2x1x32xf32>
    %313 = vector.broadcast %312 : vector<2x1x32xf32> to vector<2x64x32xf32>
    %314 = arith.mulf %313, %0 : vector<2x64x32xf32>
    %cst_92 = arith.constant dense<0.000000e+00> : vector<2x64xf32>
    %315 = vector.multi_reduction <add>, %314, %cst_92 [2] : vector<2x64x32xf32> to vector<2x64xf32>
    %316 = arith.negf %315 : vector<2x64xf32>
    %317 = math.exp %316 : vector<2x64xf32>
    %cst_93 = arith.constant 1.000000e+00 : f32
    %318 = vector.broadcast %cst_93 : f32 to vector<2x64xf32>
    %319 = arith.addf %318, %317 : vector<2x64xf32>
    %320 = arith.divf %318, %319 : vector<2x64xf32>
    %321 = vector.shape_cast %320 : vector<2x64xf32> to vector<2x64x1xf32>
    %322 = vector.broadcast %321 : vector<2x64x1xf32> to vector<2x64x32xf32>
    %323 = arith.mulf %322, %0 : vector<2x64x32xf32>
    %cst_94 = arith.constant dense<0.000000e+00> : vector<2x32xf32>
    %324 = vector.multi_reduction <add>, %323, %cst_94 [1] : vector<2x64x32xf32> to vector<2x32xf32>
    %325 = arith.index_cast %c3_i32 : i32 to index
    %c0_95 = arith.constant 0 : index
    %c0_96 = arith.constant 0 : index
    %326 = vector.load %arg6[%325, %c0_95, %c0_96] : memref<8x2x32xf32, #tpu.memory_space<vmem>>, vector<1x2x32xf32>
    %327 = vector.shape_cast %326 : vector<1x2x32xf32> to vector<2x32xf32>
    %328 = vector.shape_cast %324 : vector<2x32xf32> to vector<1x2x32xf32>
    tpu.vector_store %arg6[%325, %c0_95, %c0_96], %328 {strides = array<i32>} : memref<8x2x32xf32, #tpu.memory_space<vmem>>, vector<1x2x32xf32>,
    %329 = arith.index_cast %c3_i32 : i32 to index
    %c0_97 = arith.constant 0 : index
    %c0_98 = arith.constant 0 : index
    %330 = vector.load %arg7[%329, %c0_97, %c0_98] : memref<8x2x64xf32, #tpu.memory_space<vmem>>, vector<1x2x64xf32>
    %331 = vector.shape_cast %330 : vector<1x2x64xf32> to vector<2x64xf32>
    %332 = vector.shape_cast %320 : vector<2x64xf32> to vector<1x2x64xf32>
    tpu.vector_store %arg7[%329, %c0_97, %c0_98], %332 {strides = array<i32>} : memref<8x2x64xf32, #tpu.memory_space<vmem>>, vector<1x2x64xf32>,
    %c4_i32 = arith.constant 4 : i32
    %333 = arith.index_cast %c4_i32 : i32 to index
    %c0_99 = arith.constant 0 : index
    %c0_100 = arith.constant 0 : index
    %334 = vector.load %arg1[%333, %c0_99, %c0_100] : memref<8x2x128xf32, #tpu.memory_space<vmem>>, vector<1x2x128xf32>
    %335 = vector.shape_cast %334 : vector<1x2x128xf32> to vector<2x128xf32>
    %cst_101 = arith.constant dense<0.000000e+00> : vector<2x128xf32>
    %336 = tpu.matmul %280, %1, %cst_101 {dimension_numbers = #tpu.dot_dimension_numbers<[1], [0], [0], [1], [0, 0, 1, 1], [], []>} : vector<2x32xf32>, vector<32x128xf32>, vector<2x128xf32> -> vector<2x128xf32>
    %337 = arith.addf %335, %336 : vector<2x128xf32>
    %338 = vector.extract_strided_slice %337 {offsets = [0, 0], sizes = [2, 32], strides = [1, 1]} : vector<2x128xf32> to vector<2x32xf32>
    %339 = arith.negf %338 : vector<2x32xf32>
    %340 = math.exp %339 : vector<2x32xf32>
    %cst_102 = arith.constant 1.000000e+00 : f32
    %341 = vector.broadcast %cst_102 : f32 to vector<2x32xf32>
    %342 = arith.addf %341, %340 : vector<2x32xf32>
    %343 = arith.divf %341, %342 : vector<2x32xf32>
    %344 = vector.extract_strided_slice %337 {offsets = [0, 32], sizes = [2, 32], strides = [1, 1]} : vector<2x128xf32> to vector<2x32xf32>
    %345 = arith.negf %344 : vector<2x32xf32>
    %346 = math.exp %345 : vector<2x32xf32>
    %cst_103 = arith.constant 1.000000e+00 : f32
    %347 = vector.broadcast %cst_103 : f32 to vector<2x32xf32>
    %348 = arith.addf %347, %346 : vector<2x32xf32>
    %349 = arith.divf %347, %348 : vector<2x32xf32>
    %350 = vector.extract_strided_slice %337 {offsets = [0, 64], sizes = [2, 32], strides = [1, 1]} : vector<2x128xf32> to vector<2x32xf32>
    %351 = math.tanh %350 : vector<2x32xf32>
    %352 = vector.extract_strided_slice %337 {offsets = [0, 96], sizes = [2, 32], strides = [1, 1]} : vector<2x128xf32> to vector<2x32xf32>
    %353 = arith.negf %352 : vector<2x32xf32>
    %354 = math.exp %353 : vector<2x32xf32>
    %cst_104 = arith.constant 1.000000e+00 : f32
    %355 = vector.broadcast %cst_104 : f32 to vector<2x32xf32>
    %356 = arith.addf %355, %354 : vector<2x32xf32>
    %357 = arith.divf %355, %356 : vector<2x32xf32>
    %358 = arith.mulf %349, %278 : vector<2x32xf32>
    %359 = arith.mulf %343, %351 : vector<2x32xf32>
    %360 = arith.addf %358, %359 : vector<2x32xf32>
    %361 = math.tanh %360 : vector<2x32xf32>
    %362 = arith.mulf %357, %361 : vector<2x32xf32>
    %c0_105 = arith.constant 0 : index
    %c0_106 = arith.constant 0 : index
    %363 = vector.load %arg8[%c0_105, %c0_106] : memref<2x64xf32, #tpu.memory_space<vmem>>, vector<2x32xf32>
    tpu.vector_store %arg8[%c0_105, %c0_106], %362 {strides = array<i32>} : memref<2x64xf32, #tpu.memory_space<vmem>>, vector<2x32xf32>,
    %c0_107 = arith.constant 0 : index
    %c32_108 = arith.constant 32 : index
    %364 = vector.load %arg8[%c0_107, %c32_108] : memref<2x64xf32, #tpu.memory_space<vmem>>, vector<2x32xf32>
    tpu.vector_store %arg8[%c0_107, %c32_108], %311 {strides = array<i32>} : memref<2x64xf32, #tpu.memory_space<vmem>>, vector<2x32xf32>,
    %c0_109 = arith.constant 0 : index
    %c0_110 = arith.constant 0 : index
    %365 = vector.load %arg8[%c0_109, %c0_110] : memref<2x64xf32, #tpu.memory_space<vmem>>, vector<2x64xf32>
    %cst_111 = arith.constant dense<0.000000e+00> : vector<2x128xf32>
    %366 = tpu.matmul %365, %2, %cst_111 {dimension_numbers = #tpu.dot_dimension_numbers<[1], [0], [0], [1], [0, 0, 1, 1], [], []>} : vector<2x64xf32>, vector<64x128xf32>, vector<2x128xf32> -> vector<2x128xf32>
    %367 = vector.broadcast %3 : vector<1x128xf32> to vector<2x128xf32>
    %368 = arith.addf %366, %367 : vector<2x128xf32>
    %369 = vector.extract_strided_slice %368 {offsets = [0, 0], sizes = [2, 32], strides = [1, 1]} : vector<2x128xf32> to vector<2x32xf32>
    %370 = arith.negf %369 : vector<2x32xf32>
    %371 = math.exp %370 : vector<2x32xf32>
    %cst_112 = arith.constant 1.000000e+00 : f32
    %372 = vector.broadcast %cst_112 : f32 to vector<2x32xf32>
    %373 = arith.addf %372, %371 : vector<2x32xf32>
    %374 = arith.divf %372, %373 : vector<2x32xf32>
    %375 = vector.extract_strided_slice %368 {offsets = [0, 32], sizes = [2, 32], strides = [1, 1]} : vector<2x128xf32> to vector<2x32xf32>
    %376 = arith.negf %375 : vector<2x32xf32>
    %377 = math.exp %376 : vector<2x32xf32>
    %cst_113 = arith.constant 1.000000e+00 : f32
    %378 = vector.broadcast %cst_113 : f32 to vector<2x32xf32>
    %379 = arith.addf %378, %377 : vector<2x32xf32>
    %380 = arith.divf %378, %379 : vector<2x32xf32>
    %381 = vector.extract_strided_slice %368 {offsets = [0, 64], sizes = [2, 32], strides = [1, 1]} : vector<2x128xf32> to vector<2x32xf32>
    %382 = math.tanh %381 : vector<2x32xf32>
    %383 = vector.extract_strided_slice %368 {offsets = [0, 96], sizes = [2, 32], strides = [1, 1]} : vector<2x128xf32> to vector<2x32xf32>
    %384 = arith.negf %383 : vector<2x32xf32>
    %385 = math.exp %384 : vector<2x32xf32>
    %cst_114 = arith.constant 1.000000e+00 : f32
    %386 = vector.broadcast %cst_114 : f32 to vector<2x32xf32>
    %387 = arith.addf %386, %385 : vector<2x32xf32>
    %388 = arith.divf %386, %387 : vector<2x32xf32>
    %389 = arith.mulf %380, %309 : vector<2x32xf32>
    %390 = arith.mulf %374, %382 : vector<2x32xf32>
    %391 = arith.addf %389, %390 : vector<2x32xf32>
    %392 = math.tanh %391 : vector<2x32xf32>
    %393 = arith.mulf %388, %392 : vector<2x32xf32>
    %394 = vector.shape_cast %393 : vector<2x32xf32> to vector<2x1x32xf32>
    %395 = vector.broadcast %394 : vector<2x1x32xf32> to vector<2x64x32xf32>
    %396 = arith.mulf %395, %0 : vector<2x64x32xf32>
    %cst_115 = arith.constant dense<0.000000e+00> : vector<2x64xf32>
    %397 = vector.multi_reduction <add>, %396, %cst_115 [2] : vector<2x64x32xf32> to vector<2x64xf32>
    %398 = arith.negf %397 : vector<2x64xf32>
    %399 = math.exp %398 : vector<2x64xf32>
    %cst_116 = arith.constant 1.000000e+00 : f32
    %400 = vector.broadcast %cst_116 : f32 to vector<2x64xf32>
    %401 = arith.addf %400, %399 : vector<2x64xf32>
    %402 = arith.divf %400, %401 : vector<2x64xf32>
    %403 = vector.shape_cast %402 : vector<2x64xf32> to vector<2x64x1xf32>
    %404 = vector.broadcast %403 : vector<2x64x1xf32> to vector<2x64x32xf32>
    %405 = arith.mulf %404, %0 : vector<2x64x32xf32>
    %cst_117 = arith.constant dense<0.000000e+00> : vector<2x32xf32>
    %406 = vector.multi_reduction <add>, %405, %cst_117 [1] : vector<2x64x32xf32> to vector<2x32xf32>
    %407 = arith.index_cast %c4_i32 : i32 to index
    %c0_118 = arith.constant 0 : index
    %c0_119 = arith.constant 0 : index
    %408 = vector.load %arg6[%407, %c0_118, %c0_119] : memref<8x2x32xf32, #tpu.memory_space<vmem>>, vector<1x2x32xf32>
    %409 = vector.shape_cast %408 : vector<1x2x32xf32> to vector<2x32xf32>
    %410 = vector.shape_cast %406 : vector<2x32xf32> to vector<1x2x32xf32>
    tpu.vector_store %arg6[%407, %c0_118, %c0_119], %410 {strides = array<i32>} : memref<8x2x32xf32, #tpu.memory_space<vmem>>, vector<1x2x32xf32>,
    %411 = arith.index_cast %c4_i32 : i32 to index
    %c0_120 = arith.constant 0 : index
    %c0_121 = arith.constant 0 : index
    %412 = vector.load %arg7[%411, %c0_120, %c0_121] : memref<8x2x64xf32, #tpu.memory_space<vmem>>, vector<1x2x64xf32>
    %413 = vector.shape_cast %412 : vector<1x2x64xf32> to vector<2x64xf32>
    %414 = vector.shape_cast %402 : vector<2x64xf32> to vector<1x2x64xf32>
    tpu.vector_store %arg7[%411, %c0_120, %c0_121], %414 {strides = array<i32>} : memref<8x2x64xf32, #tpu.memory_space<vmem>>, vector<1x2x64xf32>,
    %c5_i32 = arith.constant 5 : i32
    %415 = arith.index_cast %c5_i32 : i32 to index
    %c0_122 = arith.constant 0 : index
    %c0_123 = arith.constant 0 : index
    %416 = vector.load %arg1[%415, %c0_122, %c0_123] : memref<8x2x128xf32, #tpu.memory_space<vmem>>, vector<1x2x128xf32>
    %417 = vector.shape_cast %416 : vector<1x2x128xf32> to vector<2x128xf32>
    %cst_124 = arith.constant dense<0.000000e+00> : vector<2x128xf32>
    %418 = tpu.matmul %362, %1, %cst_124 {dimension_numbers = #tpu.dot_dimension_numbers<[1], [0], [0], [1], [0, 0, 1, 1], [], []>} : vector<2x32xf32>, vector<32x128xf32>, vector<2x128xf32> -> vector<2x128xf32>
    %419 = arith.addf %417, %418 : vector<2x128xf32>
    %420 = vector.extract_strided_slice %419 {offsets = [0, 0], sizes = [2, 32], strides = [1, 1]} : vector<2x128xf32> to vector<2x32xf32>
    %421 = arith.negf %420 : vector<2x32xf32>
    %422 = math.exp %421 : vector<2x32xf32>
    %cst_125 = arith.constant 1.000000e+00 : f32
    %423 = vector.broadcast %cst_125 : f32 to vector<2x32xf32>
    %424 = arith.addf %423, %422 : vector<2x32xf32>
    %425 = arith.divf %423, %424 : vector<2x32xf32>
    %426 = vector.extract_strided_slice %419 {offsets = [0, 32], sizes = [2, 32], strides = [1, 1]} : vector<2x128xf32> to vector<2x32xf32>
    %427 = arith.negf %426 : vector<2x32xf32>
    %428 = math.exp %427 : vector<2x32xf32>
    %cst_126 = arith.constant 1.000000e+00 : f32
    %429 = vector.broadcast %cst_126 : f32 to vector<2x32xf32>
    %430 = arith.addf %429, %428 : vector<2x32xf32>
    %431 = arith.divf %429, %430 : vector<2x32xf32>
    %432 = vector.extract_strided_slice %419 {offsets = [0, 64], sizes = [2, 32], strides = [1, 1]} : vector<2x128xf32> to vector<2x32xf32>
    %433 = math.tanh %432 : vector<2x32xf32>
    %434 = vector.extract_strided_slice %419 {offsets = [0, 96], sizes = [2, 32], strides = [1, 1]} : vector<2x128xf32> to vector<2x32xf32>
    %435 = arith.negf %434 : vector<2x32xf32>
    %436 = math.exp %435 : vector<2x32xf32>
    %cst_127 = arith.constant 1.000000e+00 : f32
    %437 = vector.broadcast %cst_127 : f32 to vector<2x32xf32>
    %438 = arith.addf %437, %436 : vector<2x32xf32>
    %439 = arith.divf %437, %438 : vector<2x32xf32>
    %440 = arith.mulf %431, %360 : vector<2x32xf32>
    %441 = arith.mulf %425, %433 : vector<2x32xf32>
    %442 = arith.addf %440, %441 : vector<2x32xf32>
    %443 = math.tanh %442 : vector<2x32xf32>
    %444 = arith.mulf %439, %443 : vector<2x32xf32>
    %c0_128 = arith.constant 0 : index
    %c0_129 = arith.constant 0 : index
    %445 = vector.load %arg8[%c0_128, %c0_129] : memref<2x64xf32, #tpu.memory_space<vmem>>, vector<2x32xf32>
    tpu.vector_store %arg8[%c0_128, %c0_129], %444 {strides = array<i32>} : memref<2x64xf32, #tpu.memory_space<vmem>>, vector<2x32xf32>,
    %c0_130 = arith.constant 0 : index
    %c32_131 = arith.constant 32 : index
    %446 = vector.load %arg8[%c0_130, %c32_131] : memref<2x64xf32, #tpu.memory_space<vmem>>, vector<2x32xf32>
    tpu.vector_store %arg8[%c0_130, %c32_131], %393 {strides = array<i32>} : memref<2x64xf32, #tpu.memory_space<vmem>>, vector<2x32xf32>,
    %c0_132 = arith.constant 0 : index
    %c0_133 = arith.constant 0 : index
    %447 = vector.load %arg8[%c0_132, %c0_133] : memref<2x64xf32, #tpu.memory_space<vmem>>, vector<2x64xf32>
    %cst_134 = arith.constant dense<0.000000e+00> : vector<2x128xf32>
    %448 = tpu.matmul %447, %2, %cst_134 {dimension_numbers = #tpu.dot_dimension_numbers<[1], [0], [0], [1], [0, 0, 1, 1], [], []>} : vector<2x64xf32>, vector<64x128xf32>, vector<2x128xf32> -> vector<2x128xf32>
    %449 = vector.broadcast %3 : vector<1x128xf32> to vector<2x128xf32>
    %450 = arith.addf %448, %449 : vector<2x128xf32>
    %451 = vector.extract_strided_slice %450 {offsets = [0, 0], sizes = [2, 32], strides = [1, 1]} : vector<2x128xf32> to vector<2x32xf32>
    %452 = arith.negf %451 : vector<2x32xf32>
    %453 = math.exp %452 : vector<2x32xf32>
    %cst_135 = arith.constant 1.000000e+00 : f32
    %454 = vector.broadcast %cst_135 : f32 to vector<2x32xf32>
    %455 = arith.addf %454, %453 : vector<2x32xf32>
    %456 = arith.divf %454, %455 : vector<2x32xf32>
    %457 = vector.extract_strided_slice %450 {offsets = [0, 32], sizes = [2, 32], strides = [1, 1]} : vector<2x128xf32> to vector<2x32xf32>
    %458 = arith.negf %457 : vector<2x32xf32>
    %459 = math.exp %458 : vector<2x32xf32>
    %cst_136 = arith.constant 1.000000e+00 : f32
    %460 = vector.broadcast %cst_136 : f32 to vector<2x32xf32>
    %461 = arith.addf %460, %459 : vector<2x32xf32>
    %462 = arith.divf %460, %461 : vector<2x32xf32>
    %463 = vector.extract_strided_slice %450 {offsets = [0, 64], sizes = [2, 32], strides = [1, 1]} : vector<2x128xf32> to vector<2x32xf32>
    %464 = math.tanh %463 : vector<2x32xf32>
    %465 = vector.extract_strided_slice %450 {offsets = [0, 96], sizes = [2, 32], strides = [1, 1]} : vector<2x128xf32> to vector<2x32xf32>
    %466 = arith.negf %465 : vector<2x32xf32>
    %467 = math.exp %466 : vector<2x32xf32>
    %cst_137 = arith.constant 1.000000e+00 : f32
    %468 = vector.broadcast %cst_137 : f32 to vector<2x32xf32>
    %469 = arith.addf %468, %467 : vector<2x32xf32>
    %470 = arith.divf %468, %469 : vector<2x32xf32>
    %471 = arith.mulf %462, %391 : vector<2x32xf32>
    %472 = arith.mulf %456, %464 : vector<2x32xf32>
    %473 = arith.addf %471, %472 : vector<2x32xf32>
    %474 = math.tanh %473 : vector<2x32xf32>
    %475 = arith.mulf %470, %474 : vector<2x32xf32>
    %476 = vector.shape_cast %475 : vector<2x32xf32> to vector<2x1x32xf32>
    %477 = vector.broadcast %476 : vector<2x1x32xf32> to vector<2x64x32xf32>
    %478 = arith.mulf %477, %0 : vector<2x64x32xf32>
    %cst_138 = arith.constant dense<0.000000e+00> : vector<2x64xf32>
    %479 = vector.multi_reduction <add>, %478, %cst_138 [2] : vector<2x64x32xf32> to vector<2x64xf32>
    %480 = arith.negf %479 : vector<2x64xf32>
    %481 = math.exp %480 : vector<2x64xf32>
    %cst_139 = arith.constant 1.000000e+00 : f32
    %482 = vector.broadcast %cst_139 : f32 to vector<2x64xf32>
    %483 = arith.addf %482, %481 : vector<2x64xf32>
    %484 = arith.divf %482, %483 : vector<2x64xf32>
    %485 = vector.shape_cast %484 : vector<2x64xf32> to vector<2x64x1xf32>
    %486 = vector.broadcast %485 : vector<2x64x1xf32> to vector<2x64x32xf32>
    %487 = arith.mulf %486, %0 : vector<2x64x32xf32>
    %cst_140 = arith.constant dense<0.000000e+00> : vector<2x32xf32>
    %488 = vector.multi_reduction <add>, %487, %cst_140 [1] : vector<2x64x32xf32> to vector<2x32xf32>
    %489 = arith.index_cast %c5_i32 : i32 to index
    %c0_141 = arith.constant 0 : index
    %c0_142 = arith.constant 0 : index
    %490 = vector.load %arg6[%489, %c0_141, %c0_142] : memref<8x2x32xf32, #tpu.memory_space<vmem>>, vector<1x2x32xf32>
    %491 = vector.shape_cast %490 : vector<1x2x32xf32> to vector<2x32xf32>
    %492 = vector.shape_cast %488 : vector<2x32xf32> to vector<1x2x32xf32>
    tpu.vector_store %arg6[%489, %c0_141, %c0_142], %492 {strides = array<i32>} : memref<8x2x32xf32, #tpu.memory_space<vmem>>, vector<1x2x32xf32>,
    %493 = arith.index_cast %c5_i32 : i32 to index
    %c0_143 = arith.constant 0 : index
    %c0_144 = arith.constant 0 : index
    %494 = vector.load %arg7[%493, %c0_143, %c0_144] : memref<8x2x64xf32, #tpu.memory_space<vmem>>, vector<1x2x64xf32>
    %495 = vector.shape_cast %494 : vector<1x2x64xf32> to vector<2x64xf32>
    %496 = vector.shape_cast %484 : vector<2x64xf32> to vector<1x2x64xf32>
    tpu.vector_store %arg7[%493, %c0_143, %c0_144], %496 {strides = array<i32>} : memref<8x2x64xf32, #tpu.memory_space<vmem>>, vector<1x2x64xf32>,
    %c6_i32 = arith.constant 6 : i32
    %497 = arith.index_cast %c6_i32 : i32 to index
    %c0_145 = arith.constant 0 : index
    %c0_146 = arith.constant 0 : index
    %498 = vector.load %arg1[%497, %c0_145, %c0_146] : memref<8x2x128xf32, #tpu.memory_space<vmem>>, vector<1x2x128xf32>
    %499 = vector.shape_cast %498 : vector<1x2x128xf32> to vector<2x128xf32>
    %cst_147 = arith.constant dense<0.000000e+00> : vector<2x128xf32>
    %500 = tpu.matmul %444, %1, %cst_147 {dimension_numbers = #tpu.dot_dimension_numbers<[1], [0], [0], [1], [0, 0, 1, 1], [], []>} : vector<2x32xf32>, vector<32x128xf32>, vector<2x128xf32> -> vector<2x128xf32>
    %501 = arith.addf %499, %500 : vector<2x128xf32>
    %502 = vector.extract_strided_slice %501 {offsets = [0, 0], sizes = [2, 32], strides = [1, 1]} : vector<2x128xf32> to vector<2x32xf32>
    %503 = arith.negf %502 : vector<2x32xf32>
    %504 = math.exp %503 : vector<2x32xf32>
    %cst_148 = arith.constant 1.000000e+00 : f32
    %505 = vector.broadcast %cst_148 : f32 to vector<2x32xf32>
    %506 = arith.addf %505, %504 : vector<2x32xf32>
    %507 = arith.divf %505, %506 : vector<2x32xf32>
    %508 = vector.extract_strided_slice %501 {offsets = [0, 32], sizes = [2, 32], strides = [1, 1]} : vector<2x128xf32> to vector<2x32xf32>
    %509 = arith.negf %508 : vector<2x32xf32>
    %510 = math.exp %509 : vector<2x32xf32>
    %cst_149 = arith.constant 1.000000e+00 : f32
    %511 = vector.broadcast %cst_149 : f32 to vector<2x32xf32>
    %512 = arith.addf %511, %510 : vector<2x32xf32>
    %513 = arith.divf %511, %512 : vector<2x32xf32>
    %514 = vector.extract_strided_slice %501 {offsets = [0, 64], sizes = [2, 32], strides = [1, 1]} : vector<2x128xf32> to vector<2x32xf32>
    %515 = math.tanh %514 : vector<2x32xf32>
    %516 = vector.extract_strided_slice %501 {offsets = [0, 96], sizes = [2, 32], strides = [1, 1]} : vector<2x128xf32> to vector<2x32xf32>
    %517 = arith.negf %516 : vector<2x32xf32>
    %518 = math.exp %517 : vector<2x32xf32>
    %cst_150 = arith.constant 1.000000e+00 : f32
    %519 = vector.broadcast %cst_150 : f32 to vector<2x32xf32>
    %520 = arith.addf %519, %518 : vector<2x32xf32>
    %521 = arith.divf %519, %520 : vector<2x32xf32>
    %522 = arith.mulf %513, %442 : vector<2x32xf32>
    %523 = arith.mulf %507, %515 : vector<2x32xf32>
    %524 = arith.addf %522, %523 : vector<2x32xf32>
    %525 = math.tanh %524 : vector<2x32xf32>
    %526 = arith.mulf %521, %525 : vector<2x32xf32>
    %c0_151 = arith.constant 0 : index
    %c0_152 = arith.constant 0 : index
    %527 = vector.load %arg8[%c0_151, %c0_152] : memref<2x64xf32, #tpu.memory_space<vmem>>, vector<2x32xf32>
    tpu.vector_store %arg8[%c0_151, %c0_152], %526 {strides = array<i32>} : memref<2x64xf32, #tpu.memory_space<vmem>>, vector<2x32xf32>,
    %c0_153 = arith.constant 0 : index
    %c32_154 = arith.constant 32 : index
    %528 = vector.load %arg8[%c0_153, %c32_154] : memref<2x64xf32, #tpu.memory_space<vmem>>, vector<2x32xf32>
    tpu.vector_store %arg8[%c0_153, %c32_154], %475 {strides = array<i32>} : memref<2x64xf32, #tpu.memory_space<vmem>>, vector<2x32xf32>,
    %c0_155 = arith.constant 0 : index
    %c0_156 = arith.constant 0 : index
    %529 = vector.load %arg8[%c0_155, %c0_156] : memref<2x64xf32, #tpu.memory_space<vmem>>, vector<2x64xf32>
    %cst_157 = arith.constant dense<0.000000e+00> : vector<2x128xf32>
    %530 = tpu.matmul %529, %2, %cst_157 {dimension_numbers = #tpu.dot_dimension_numbers<[1], [0], [0], [1], [0, 0, 1, 1], [], []>} : vector<2x64xf32>, vector<64x128xf32>, vector<2x128xf32> -> vector<2x128xf32>
    %531 = vector.broadcast %3 : vector<1x128xf32> to vector<2x128xf32>
    %532 = arith.addf %530, %531 : vector<2x128xf32>
    %533 = vector.extract_strided_slice %532 {offsets = [0, 0], sizes = [2, 32], strides = [1, 1]} : vector<2x128xf32> to vector<2x32xf32>
    %534 = arith.negf %533 : vector<2x32xf32>
    %535 = math.exp %534 : vector<2x32xf32>
    %cst_158 = arith.constant 1.000000e+00 : f32
    %536 = vector.broadcast %cst_158 : f32 to vector<2x32xf32>
    %537 = arith.addf %536, %535 : vector<2x32xf32>
    %538 = arith.divf %536, %537 : vector<2x32xf32>
    %539 = vector.extract_strided_slice %532 {offsets = [0, 32], sizes = [2, 32], strides = [1, 1]} : vector<2x128xf32> to vector<2x32xf32>
    %540 = arith.negf %539 : vector<2x32xf32>
    %541 = math.exp %540 : vector<2x32xf32>
    %cst_159 = arith.constant 1.000000e+00 : f32
    %542 = vector.broadcast %cst_159 : f32 to vector<2x32xf32>
    %543 = arith.addf %542, %541 : vector<2x32xf32>
    %544 = arith.divf %542, %543 : vector<2x32xf32>
    %545 = vector.extract_strided_slice %532 {offsets = [0, 64], sizes = [2, 32], strides = [1, 1]} : vector<2x128xf32> to vector<2x32xf32>
    %546 = math.tanh %545 : vector<2x32xf32>
    %547 = vector.extract_strided_slice %532 {offsets = [0, 96], sizes = [2, 32], strides = [1, 1]} : vector<2x128xf32> to vector<2x32xf32>
    %548 = arith.negf %547 : vector<2x32xf32>
    %549 = math.exp %548 : vector<2x32xf32>
    %cst_160 = arith.constant 1.000000e+00 : f32
    %550 = vector.broadcast %cst_160 : f32 to vector<2x32xf32>
    %551 = arith.addf %550, %549 : vector<2x32xf32>
    %552 = arith.divf %550, %551 : vector<2x32xf32>
    %553 = arith.mulf %544, %473 : vector<2x32xf32>
    %554 = arith.mulf %538, %546 : vector<2x32xf32>
    %555 = arith.addf %553, %554 : vector<2x32xf32>
    %556 = math.tanh %555 : vector<2x32xf32>
    %557 = arith.mulf %552, %556 : vector<2x32xf32>
    %558 = vector.shape_cast %557 : vector<2x32xf32> to vector<2x1x32xf32>
    %559 = vector.broadcast %558 : vector<2x1x32xf32> to vector<2x64x32xf32>
    %560 = arith.mulf %559, %0 : vector<2x64x32xf32>
    %cst_161 = arith.constant dense<0.000000e+00> : vector<2x64xf32>
    %561 = vector.multi_reduction <add>, %560, %cst_161 [2] : vector<2x64x32xf32> to vector<2x64xf32>
    %562 = arith.negf %561 : vector<2x64xf32>
    %563 = math.exp %562 : vector<2x64xf32>
    %cst_162 = arith.constant 1.000000e+00 : f32
    %564 = vector.broadcast %cst_162 : f32 to vector<2x64xf32>
    %565 = arith.addf %564, %563 : vector<2x64xf32>
    %566 = arith.divf %564, %565 : vector<2x64xf32>
    %567 = vector.shape_cast %566 : vector<2x64xf32> to vector<2x64x1xf32>
    %568 = vector.broadcast %567 : vector<2x64x1xf32> to vector<2x64x32xf32>
    %569 = arith.mulf %568, %0 : vector<2x64x32xf32>
    %cst_163 = arith.constant dense<0.000000e+00> : vector<2x32xf32>
    %570 = vector.multi_reduction <add>, %569, %cst_163 [1] : vector<2x64x32xf32> to vector<2x32xf32>
    %571 = arith.index_cast %c6_i32 : i32 to index
    %c0_164 = arith.constant 0 : index
    %c0_165 = arith.constant 0 : index
    %572 = vector.load %arg6[%571, %c0_164, %c0_165] : memref<8x2x32xf32, #tpu.memory_space<vmem>>, vector<1x2x32xf32>
    %573 = vector.shape_cast %572 : vector<1x2x32xf32> to vector<2x32xf32>
    %574 = vector.shape_cast %570 : vector<2x32xf32> to vector<1x2x32xf32>
    tpu.vector_store %arg6[%571, %c0_164, %c0_165], %574 {strides = array<i32>} : memref<8x2x32xf32, #tpu.memory_space<vmem>>, vector<1x2x32xf32>,
    %575 = arith.index_cast %c6_i32 : i32 to index
    %c0_166 = arith.constant 0 : index
    %c0_167 = arith.constant 0 : index
    %576 = vector.load %arg7[%575, %c0_166, %c0_167] : memref<8x2x64xf32, #tpu.memory_space<vmem>>, vector<1x2x64xf32>
    %577 = vector.shape_cast %576 : vector<1x2x64xf32> to vector<2x64xf32>
    %578 = vector.shape_cast %566 : vector<2x64xf32> to vector<1x2x64xf32>
    tpu.vector_store %arg7[%575, %c0_166, %c0_167], %578 {strides = array<i32>} : memref<8x2x64xf32, #tpu.memory_space<vmem>>, vector<1x2x64xf32>,
    %c7_i32 = arith.constant 7 : i32
    %579 = arith.index_cast %c7_i32 : i32 to index
    %c0_168 = arith.constant 0 : index
    %c0_169 = arith.constant 0 : index
    %580 = vector.load %arg1[%579, %c0_168, %c0_169] : memref<8x2x128xf32, #tpu.memory_space<vmem>>, vector<1x2x128xf32>
    %581 = vector.shape_cast %580 : vector<1x2x128xf32> to vector<2x128xf32>
    %cst_170 = arith.constant dense<0.000000e+00> : vector<2x128xf32>
    %582 = tpu.matmul %526, %1, %cst_170 {dimension_numbers = #tpu.dot_dimension_numbers<[1], [0], [0], [1], [0, 0, 1, 1], [], []>} : vector<2x32xf32>, vector<32x128xf32>, vector<2x128xf32> -> vector<2x128xf32>
    %583 = arith.addf %581, %582 : vector<2x128xf32>
    %584 = vector.extract_strided_slice %583 {offsets = [0, 0], sizes = [2, 32], strides = [1, 1]} : vector<2x128xf32> to vector<2x32xf32>
    %585 = arith.negf %584 : vector<2x32xf32>
    %586 = math.exp %585 : vector<2x32xf32>
    %cst_171 = arith.constant 1.000000e+00 : f32
    %587 = vector.broadcast %cst_171 : f32 to vector<2x32xf32>
    %588 = arith.addf %587, %586 : vector<2x32xf32>
    %589 = arith.divf %587, %588 : vector<2x32xf32>
    %590 = vector.extract_strided_slice %583 {offsets = [0, 32], sizes = [2, 32], strides = [1, 1]} : vector<2x128xf32> to vector<2x32xf32>
    %591 = arith.negf %590 : vector<2x32xf32>
    %592 = math.exp %591 : vector<2x32xf32>
    %cst_172 = arith.constant 1.000000e+00 : f32
    %593 = vector.broadcast %cst_172 : f32 to vector<2x32xf32>
    %594 = arith.addf %593, %592 : vector<2x32xf32>
    %595 = arith.divf %593, %594 : vector<2x32xf32>
    %596 = vector.extract_strided_slice %583 {offsets = [0, 64], sizes = [2, 32], strides = [1, 1]} : vector<2x128xf32> to vector<2x32xf32>
    %597 = math.tanh %596 : vector<2x32xf32>
    %598 = vector.extract_strided_slice %583 {offsets = [0, 96], sizes = [2, 32], strides = [1, 1]} : vector<2x128xf32> to vector<2x32xf32>
    %599 = arith.negf %598 : vector<2x32xf32>
    %600 = math.exp %599 : vector<2x32xf32>
    %cst_173 = arith.constant 1.000000e+00 : f32
    %601 = vector.broadcast %cst_173 : f32 to vector<2x32xf32>
    %602 = arith.addf %601, %600 : vector<2x32xf32>
    %603 = arith.divf %601, %602 : vector<2x32xf32>
    %604 = arith.mulf %595, %524 : vector<2x32xf32>
    %605 = arith.mulf %589, %597 : vector<2x32xf32>
    %606 = arith.addf %604, %605 : vector<2x32xf32>
    %607 = math.tanh %606 : vector<2x32xf32>
    %608 = arith.mulf %603, %607 : vector<2x32xf32>
    %c0_174 = arith.constant 0 : index
    %c0_175 = arith.constant 0 : index
    %609 = vector.load %arg8[%c0_174, %c0_175] : memref<2x64xf32, #tpu.memory_space<vmem>>, vector<2x32xf32>
    tpu.vector_store %arg8[%c0_174, %c0_175], %608 {strides = array<i32>} : memref<2x64xf32, #tpu.memory_space<vmem>>, vector<2x32xf32>,
    %c0_176 = arith.constant 0 : index
    %c32_177 = arith.constant 32 : index
    %610 = vector.load %arg8[%c0_176, %c32_177] : memref<2x64xf32, #tpu.memory_space<vmem>>, vector<2x32xf32>
    tpu.vector_store %arg8[%c0_176, %c32_177], %557 {strides = array<i32>} : memref<2x64xf32, #tpu.memory_space<vmem>>, vector<2x32xf32>,
    %c0_178 = arith.constant 0 : index
    %c0_179 = arith.constant 0 : index
    %611 = vector.load %arg8[%c0_178, %c0_179] : memref<2x64xf32, #tpu.memory_space<vmem>>, vector<2x64xf32>
    %cst_180 = arith.constant dense<0.000000e+00> : vector<2x128xf32>
    %612 = tpu.matmul %611, %2, %cst_180 {dimension_numbers = #tpu.dot_dimension_numbers<[1], [0], [0], [1], [0, 0, 1, 1], [], []>} : vector<2x64xf32>, vector<64x128xf32>, vector<2x128xf32> -> vector<2x128xf32>
    %613 = vector.broadcast %3 : vector<1x128xf32> to vector<2x128xf32>
    %614 = arith.addf %612, %613 : vector<2x128xf32>
    %615 = vector.extract_strided_slice %614 {offsets = [0, 0], sizes = [2, 32], strides = [1, 1]} : vector<2x128xf32> to vector<2x32xf32>
    %616 = arith.negf %615 : vector<2x32xf32>
    %617 = math.exp %616 : vector<2x32xf32>
    %cst_181 = arith.constant 1.000000e+00 : f32
    %618 = vector.broadcast %cst_181 : f32 to vector<2x32xf32>
    %619 = arith.addf %618, %617 : vector<2x32xf32>
    %620 = arith.divf %618, %619 : vector<2x32xf32>
    %621 = vector.extract_strided_slice %614 {offsets = [0, 32], sizes = [2, 32], strides = [1, 1]} : vector<2x128xf32> to vector<2x32xf32>
    %622 = arith.negf %621 : vector<2x32xf32>
    %623 = math.exp %622 : vector<2x32xf32>
    %cst_182 = arith.constant 1.000000e+00 : f32
    %624 = vector.broadcast %cst_182 : f32 to vector<2x32xf32>
    %625 = arith.addf %624, %623 : vector<2x32xf32>
    %626 = arith.divf %624, %625 : vector<2x32xf32>
    %627 = vector.extract_strided_slice %614 {offsets = [0, 64], sizes = [2, 32], strides = [1, 1]} : vector<2x128xf32> to vector<2x32xf32>
    %628 = math.tanh %627 : vector<2x32xf32>
    %629 = vector.extract_strided_slice %614 {offsets = [0, 96], sizes = [2, 32], strides = [1, 1]} : vector<2x128xf32> to vector<2x32xf32>
    %630 = arith.negf %629 : vector<2x32xf32>
    %631 = math.exp %630 : vector<2x32xf32>
    %cst_183 = arith.constant 1.000000e+00 : f32
    %632 = vector.broadcast %cst_183 : f32 to vector<2x32xf32>
    %633 = arith.addf %632, %631 : vector<2x32xf32>
    %634 = arith.divf %632, %633 : vector<2x32xf32>
    %635 = arith.mulf %626, %555 : vector<2x32xf32>
    %636 = arith.mulf %620, %628 : vector<2x32xf32>
    %637 = arith.addf %635, %636 : vector<2x32xf32>
    %638 = math.tanh %637 : vector<2x32xf32>
    %639 = arith.mulf %634, %638 : vector<2x32xf32>
    %640 = vector.shape_cast %639 : vector<2x32xf32> to vector<2x1x32xf32>
    %641 = vector.broadcast %640 : vector<2x1x32xf32> to vector<2x64x32xf32>
    %642 = arith.mulf %641, %0 : vector<2x64x32xf32>
    %cst_184 = arith.constant dense<0.000000e+00> : vector<2x64xf32>
    %643 = vector.multi_reduction <add>, %642, %cst_184 [2] : vector<2x64x32xf32> to vector<2x64xf32>
    %644 = arith.negf %643 : vector<2x64xf32>
    %645 = math.exp %644 : vector<2x64xf32>
    %cst_185 = arith.constant 1.000000e+00 : f32
    %646 = vector.broadcast %cst_185 : f32 to vector<2x64xf32>
    %647 = arith.addf %646, %645 : vector<2x64xf32>
    %648 = arith.divf %646, %647 : vector<2x64xf32>
    %649 = vector.shape_cast %648 : vector<2x64xf32> to vector<2x64x1xf32>
    %650 = vector.broadcast %649 : vector<2x64x1xf32> to vector<2x64x32xf32>
    %651 = arith.mulf %650, %0 : vector<2x64x32xf32>
    %cst_186 = arith.constant dense<0.000000e+00> : vector<2x32xf32>
    %652 = vector.multi_reduction <add>, %651, %cst_186 [1] : vector<2x64x32xf32> to vector<2x32xf32>
    %653 = arith.index_cast %c7_i32 : i32 to index
    %c0_187 = arith.constant 0 : index
    %c0_188 = arith.constant 0 : index
    %654 = vector.load %arg6[%653, %c0_187, %c0_188] : memref<8x2x32xf32, #tpu.memory_space<vmem>>, vector<1x2x32xf32>
    %655 = vector.shape_cast %654 : vector<1x2x32xf32> to vector<2x32xf32>
    %656 = vector.shape_cast %652 : vector<2x32xf32> to vector<1x2x32xf32>
    tpu.vector_store %arg6[%653, %c0_187, %c0_188], %656 {strides = array<i32>} : memref<8x2x32xf32, #tpu.memory_space<vmem>>, vector<1x2x32xf32>,
    %657 = arith.index_cast %c7_i32 : i32 to index
    %c0_189 = arith.constant 0 : index
    %c0_190 = arith.constant 0 : index
    %658 = vector.load %arg7[%657, %c0_189, %c0_190] : memref<8x2x64xf32, #tpu.memory_space<vmem>>, vector<1x2x64xf32>
    %659 = vector.shape_cast %658 : vector<1x2x64xf32> to vector<2x64xf32>
    %660 = vector.shape_cast %648 : vector<2x64xf32> to vector<1x2x64xf32>
    tpu.vector_store %arg7[%657, %c0_189, %c0_190], %660 {strides = array<i32>} : memref<8x2x64xf32, #tpu.memory_space<vmem>>, vector<1x2x64xf32>,
    %c8_i32 = arith.constant 8 : i32
    return
  }
  func.func @transform_0(%arg0: i32) -> (i32, i32, i32) {
    %c0_i32 = arith.constant 0 : i32
    %c0_i32_0 = arith.constant 0 : i32
    %c0_i32_1 = arith.constant 0 : i32
    %c0_i32_2 = arith.constant 0 : i32
    return %c0_i32, %c0_i32_0, %c0_i32_1 : i32, i32, i32
  }
  func.func @transform_1(%arg0: i32) -> (i32, i32, i32) {
    %c0_i32 = arith.constant 0 : i32
    %c0_i32_0 = arith.constant 0 : i32
    %c0_i32_1 = arith.constant 0 : i32
    %c0_i32_2 = arith.constant 0 : i32
    return %c0_i32, %c0_i32_0, %c0_i32_1 : i32, i32, i32
  }
  func.func @transform_2(%arg0: i32) -> (i32, i32) {
    %c0_i32 = arith.constant 0 : i32
    %c0_i32_0 = arith.constant 0 : i32
    %c0_i32_1 = arith.constant 0 : i32
    return %c0_i32, %c0_i32_0 : i32, i32
  }
  func.func @transform_3(%arg0: i32) -> (i32, i32) {
    %c0_i32 = arith.constant 0 : i32
    %c0_i32_0 = arith.constant 0 : i32
    %c0_i32_1 = arith.constant 0 : i32
    return %c0_i32, %c0_i32_0 : i32, i32
  }
  func.func @transform_4(%arg0: i32) -> (i32, i32) {
    %c0_i32 = arith.constant 0 : i32
    %c0_i32_0 = arith.constant 0 : i32
    %c0_i32_1 = arith.constant 0 : i32
    return %c0_i32, %c0_i32_0 : i32, i32
  }
  func.func @transform_5(%arg0: i32) -> (i32, i32, i32) {
    %c0_i32 = arith.constant 0 : i32
    %c0_i32_0 = arith.constant 0 : i32
    %c0_i32_1 = arith.constant 0 : i32
    %c0_i32_2 = arith.constant 0 : i32
    return %c0_i32, %c0_i32_0, %c0_i32_1 : i32, i32, i32
  }
  func.func @transform_6(%arg0: i32) -> (i32, i32, i32) {
    %c0_i32 = arith.constant 0 : i32
    %c0_i32_0 = arith.constant 0 : i32
    %c0_i32_1 = arith.constant 0 : i32
    %c0_i32_2 = arith.constant 0 : i32
    return %c0_i32, %c0_i32_0, %c0_i32_1 : i32, i32, i32
  }
}

</mosaic_0001>

<llo_original>
// kernel: tpu_custom_call.1
$region0: #{tpu_custom_call.1}
  #allocation0 [shape = 'u32[]', space=smem, size = 0x4, offset = 0x4, fixed_abs, tag = 'smem constant byte address 0x4 - core index']
  #allocation1 [shape = 'u32[72,128]{1,0:T(1,128)}', space=vmem, size = 0x9000, scoped, tag = 'internal scratch']
  #allocation2 [shape = 'f32[2,64]{1,0:T(2,128)}', space=vmem, size = 0x400, scoped, tag = 'scratch operand']
  %s0 = inlined_call_operand.vmem [shape: f32[8,2,128], index: 0, kind: input, shape index: {}]
  %s1 = inlined_call_operand.vmem [shape: f32[2,64,32], index: 1, kind: input, shape index: {}]
  %s2 = inlined_call_operand.vmem [shape: f32[32,128], index: 2, kind: input, shape index: {}]
  %s3 = inlined_call_operand.vmem [shape: f32[64,128], index: 3, kind: input, shape index: {}]
  %s4 = inlined_call_operand.vmem [shape: f32[1,128], index: 4, kind: input, shape index: {}]
  %s5 = inlined_call_operand.hbm [shape: f32[8,2,32], index: 5, kind: output, shape index: {0}]
  %s6 = inlined_call_operand.hbm [shape: f32[8,2,64], index: 6, kind: output, shape index: {1}]
  %7 = xla_tuple %s5, %s6
  %s8 = sld [smem:[#allocation0]]
  $region38: #{tpu_custom_call.1} parent=0
    _
  %s10 = ssub.s32 1, %s8
  %s11 = scalar_select 0, %s10, %s8
  $region1: #{tpu_custom_call.1} parent=0
    #allocation3 [shape = 'u8[8192]{0}', space=vmem, size = 0x2000, scoped, tag = 'output window, operand 0, single buffered']
    #allocation4 [shape = 's32[1]{0}', space=sflag, size = 0x4, scoped, tag = 'scoped memory for tpu_custom_call.1']
    #allocation5 [shape = 'u8[8192]{0}', space=vmem, size = 0x2000, scoped, tag = 'output window, operand 1, single buffered']
    #allocation6 [shape = 's32[1]{0}', space=sflag, size = 0x4, scoped, tag = 'scoped memory for tpu_custom_call.1']
    %12 = vsyncpa [#allocation4], 0
    %13 = vsyncpa [#allocation6], 0
    // Predicated region
    $region2: #{tpu_custom_call.1} parent=1 // pred_check
      _
    $region3: #{tpu_custom_call.1} parent=1 // pred_check_branch
      %15 = sbr.rel (0) target = $region5
    $region4: #{tpu_custom_call.1} parent=1 // pred_region
      _
    $region5: #{tpu_custom_call.1} parent=1 // pred_fallthru
      _
    // Predicated region
    $region6: #{tpu_custom_call.1} parent=1 // pred_check
      _
    $region7: #{tpu_custom_call.1} parent=1 // pred_check_branch
      %17 = sbr.rel (0) target = $region9
    $region8: #{tpu_custom_call.1} parent=1 // pred_region
      _
    $region9: #{tpu_custom_call.1} parent=1 // pred_fallthru
      _
    // Predicated region
    $region10: #{tpu_custom_call.1} parent=1 // pred_check
      _
    $region11: #{tpu_custom_call.1} parent=1 // pred_check_branch
      %19 = sbr.rel (0) target = $region13
    $region12: #{tpu_custom_call.1} parent=1 // pred_region
      _
    $region13: #{tpu_custom_call.1} parent=1 // pred_fallthru
      _
    // Predicated region
    $region14: #{tpu_custom_call.1} parent=1 // pred_check
      _
    $region15: #{tpu_custom_call.1} parent=1 // pred_check_branch
      %21 = sbr.rel (0) target = $region17
    $region16: #{tpu_custom_call.1} parent=1 // pred_region
      _
    $region17: #{tpu_custom_call.1} parent=1 // pred_fallthru
      _
    // Predicated region
    $region18: #{tpu_custom_call.1} parent=1 // pred_check
      _
    $region19: #{tpu_custom_call.1} parent=1 // pred_check_branch
      %23 = sbr.rel (0) target = $region21
    $region20: #{tpu_custom_call.1} parent=1 // pred_region
      _
    $region21: #{tpu_custom_call.1} parent=1 // pred_fallthru
      _
    %v24 = vld [vmem:[%s1] sm:$0xff]
    %v25 = vld [vmem:[%s1 + $0x8] sm:$0xff]
    %v26 = vld [vmem:[%s1 + $0x10] sm:$0xff]
    %v27 = vld [vmem:[%s1 + $0x18] sm:$0xff]
    %v28 = vld [vmem:[%s1 + $0x20] sm:$0xff]
    %v29 = vld [vmem:[%s1 + $0x28] sm:$0xff]
    %v30 = vld [vmem:[%s1 + $0x30] sm:$0xff]
    %v31 = vld [vmem:[%s1 + $0x38] sm:$0xff]
    %v32 = vld [vmem:[%s1 + $0x40] sm:$0xff]
    %v33 = vld [vmem:[%s1 + $0x48] sm:$0xff]
    %v34 = vld [vmem:[%s1 + $0x50] sm:$0xff]
    %v35 = vld [vmem:[%s1 + $0x58] sm:$0xff]
    %v36 = vld [vmem:[%s1 + $0x60] sm:$0xff]
    %v37 = vld [vmem:[%s1 + $0x68] sm:$0xff]
    %v38 = vld [vmem:[%s1 + $0x70] sm:$0xff]
    %v39 = vld [vmem:[%s1 + $0x78] sm:$0xff]
    %v40 = vld [vmem:[%s2] sm:$0xff]
    %v41 = vld [vmem:[%s2 + $0x8] sm:$0xff]
    %v42 = vld [vmem:[%s2 + $0x10] sm:$0xff]
    %v43 = vld [vmem:[%s2 + $0x18] sm:$0xff]
    %v44 = vld [vmem:[%s3] sm:$0xff]
    %v45 = vld [vmem:[%s3 + $0x8] sm:$0xff]
    %v46 = vld [vmem:[%s3 + $0x10] sm:$0xff]
    %v47 = vld [vmem:[%s3 + $0x18] sm:$0xff]
    %v48 = vld [vmem:[%s3 + $0x20] sm:$0xff]
    %v49 = vld [vmem:[%s3 + $0x28] sm:$0xff]
    %v50 = vld [vmem:[%s3 + $0x30] sm:$0xff]
    %v51 = vld [vmem:[%s3 + $0x38] sm:$0xff]
    %v52 = vld [vmem:[%s4] sm:$0x1]
    %v53 = vld [vmem:[%s0] sm:$0x3]
    %vm54 = vcmask 261120
    %v56 = vsel %vm54, 0.0, 0
    %58 = vmatpush.msra.mxu0 0.0
    %59 = vmatpush.msra.mxu0 0.0
    %60 = vmatpush.msra.mxu0 0.0
    %61 = vmatpush.msra.mxu0 0.0
    %62 = vmatpush.msra.mxu0 0.0
    %63 = vmatpush.msra.mxu0 0.0
    %64 = vmatpush.msra.mxu0 0.0
    %65 = vmatpush.msra.mxu0 0.0
    %66 = vmatpush.msra.mxu0 0.0
    %67 = vmatpush.msra.mxu0 0.0
    %68 = vmatpush.msra.mxu0 0.0
    %69 = vmatpush.msra.mxu0 0.0
    %70 = vmatpush.msra.mxu0 %v43
    %71 = vmatpush.msra.mxu0 %v42
    %72 = vmatpush.msra.mxu0 %v41
    %73 = vmatpush.msra.mxu0 %v40
    %74 = vmatmul.f32.gmra.mxu0 %v56
    %v75 = vpop.f32.mrf.mxu0
    %v76 = vadd.f32 0.0, %v75
    %77 = vdwg.mxu0
    %v78 = vadd.f32 %v53, %v76
    %v79 = vxor.u32 %v78, 2147483648
    %v80 = vmul.f32 %v79, 1.442695
    %v81 = vpow.pop %v80
    %v82 = vadd.f32 %v81, 1.0
    %v83 = vrcp.pop %v82
    %v84 = vmul.f32 %v82, %v83
    %v85 = vsub.f32 1.0, %v84
    %v86 = vmul.f32 %v83, %v85
    %v87 = vadd.f32 %v83, %v86
    %vm88 = vweird.f32 %v82
    %vm89 = vweird.f32 %v83
    %vm90 = vmor %vm88, %vm89
    %v91 = vsel %vm90, %v83, %v87
    %v92 = vand.u32 2147483647, %v82
    %vm93 = vcmp.eq.f32.partialorder %v92, 8.507059e+37
    %v94 = vand.u32 %v82, 2147483648
    %v95 = vor.u32 1.1754944e-38, %v94
    %v96 = vsel %vm93, %v95, %v91
    %v97 = vmul.f32 1.0, %v96
    %v98 = vtanh.pop %v78
    %v99 = vmul.f32 %v97, 0.0
    %101 = vrot.lane.b32.xlu0 %v98, 64
    %v102 = vpop.permute.xlu0 %101
    %v104 = vmul.f32 %v97, %v102
    %106 = vrot.lane.b32.xlu0 %v104, 32
    %v107 = vpop.permute.xlu0 %106
    %v109 = vadd.f32 %v99, %v107
    %v110 = vtanh.pop %v109
    %112 = vrot.lane.b32.xlu0 %v110, 64
    %v113 = vpop.permute.xlu0 %112
    %v115 = vmul.f32 %v97, %v113
    %117 = vrot.lane.b32.xlu0 %v115, 32
    %v118 = vpop.permute.xlu0 %117
    %vm120 = vcmask 254976
    %121 = vst.msk [vmem:[#allocation2] sm:$0x3] %vm120, %v118
    %vm122 = vcmask 517376
    %123 = vst.msk [vmem:[#allocation2] sm:$0x3] %vm122, 0.0
    %v124 = vld [vmem:[#allocation2] sm:$0x3]
    %v126 = vperm.slane %v52, 0
    %vm128 = vcmask 523264
    %v130 = vsel %vm128, %v124, 0
    %132 = vmatpush.msra.mxu0 0.0
    %133 = vmatpush.msra.mxu0 0.0
    %134 = vmatpush.msra.mxu0 0.0
    %135 = vmatpush.msra.mxu0 0.0
    %136 = vmatpush.msra.mxu0 0.0
    %137 = vmatpush.msra.mxu0 0.0
    %138 = vmatpush.msra.mxu0 0.0
    %139 = vmatpush.msra.mxu0 0.0
    %140 = vmatpush.msra.mxu0 %v51
    %141 = vmatpush.msra.mxu0 %v50
    %142 = vmatpush.msra.mxu0 %v49
    %143 = vmatpush.msra.mxu0 %v48
    %144 = vmatpush.msra.mxu0 %v47
    %145 = vmatpush.msra.mxu0 %v46
    %146 = vmatpush.msra.mxu0 %v45
    %147 = vmatpush.msra.mxu0 %v44
    %148 = vmatmul.f32.gmra.mxu0 %v130
    %v149 = vpop.f32.mrf.mxu0
    %v150 = vadd.f32 %v126, %v149
    %151 = vdwg.mxu0
    %v152 = vxor.u32 %v150, 2147483648
    %v153 = vmul.f32 %v152, 1.442695
    %v154 = vpow.pop %v153
    %v155 = vadd.f32 %v154, 1.0
    %v156 = vrcp.pop %v155
    %v157 = vmul.f32 %v155, %v156
    %v158 = vsub.f32 1.0, %v157
    %v159 = vmul.f32 %v156, %v158
    %v160 = vadd.f32 %v156, %v159
    %vm161 = vweird.f32 %v155
    %vm162 = vweird.f32 %v156
    %vm163 = vmor %vm161, %vm162
    %v164 = vsel %vm163, %v156, %v160
    %v165 = vand.u32 2147483647, %v155
    %vm166 = vcmp.eq.f32.partialorder %v165, 8.507059e+37
    %v167 = vand.u32 %v155, 2147483648
    %v168 = vor.u32 1.1754944e-38, %v167
    %v169 = vsel %vm166, %v168, %v164
    %v170 = vmul.f32 1.0, %v169
    %v171 = vtanh.pop %v150
    %v172 = vmul.f32 %v170, 0.0
    %174 = vrot.lane.b32.xlu0 %v171, 64
    %v175 = vpop.permute.xlu0 %174
    %v177 = vmul.f32 %v170, %v175
    %179 = vrot.lane.b32.xlu0 %v177, 32
    %v180 = vpop.permute.xlu0 %179
    %v182 = vadd.f32 %v172, %v180
    %v183 = vtanh.pop %v182
    %185 = vrot.lane.b32.xlu0 %v183, 64
    %v186 = vpop.permute.xlu0 %185
    %v188 = vmul.f32 %v170, %v186
    %v190 = vrot.slane %v188, 1
    %v191 = vperm.slane %v188, 0
    %v192 = vperm.slane %v190, 0
    %211 = vrot.lane.b32.xlu0 %v24, 96
    %v212 = vpop.permute.xlu0 %211
    %213 = vrot.lane.b32.xlu0 %v25, 96
    %v214 = vpop.permute.xlu0 %213
    %215 = vrot.lane.b32.xlu0 %v26, 96
    %v216 = vpop.permute.xlu0 %215
    %217 = vrot.lane.b32.xlu0 %v27, 96
    %v218 = vpop.permute.xlu0 %217
    %219 = vrot.lane.b32.xlu0 %v28, 96
    %v220 = vpop.permute.xlu0 %219
    %221 = vrot.lane.b32.xlu0 %v29, 96
    %v222 = vpop.permute.xlu0 %221
    %223 = vrot.lane.b32.xlu0 %v30, 96
    %v224 = vpop.permute.xlu0 %223
    %225 = vrot.lane.b32.xlu0 %v31, 96
    %v226 = vpop.permute.xlu0 %225
    %227 = vrot.lane.b32.xlu0 %v32, 96
    %v228 = vpop.permute.xlu0 %227
    %229 = vrot.lane.b32.xlu0 %v33, 96
    %v230 = vpop.permute.xlu0 %229
    %231 = vrot.lane.b32.xlu0 %v34, 96
    %v232 = vpop.permute.xlu0 %231
    %233 = vrot.lane.b32.xlu0 %v35, 96
    %v234 = vpop.permute.xlu0 %233
    %235 = vrot.lane.b32.xlu0 %v36, 96
    %v236 = vpop.permute.xlu0 %235
    %237 = vrot.lane.b32.xlu0 %v37, 96
    %v238 = vpop.permute.xlu0 %237
    %239 = vrot.lane.b32.xlu0 %v38, 96
    %v240 = vpop.permute.xlu0 %239
    %241 = vrot.lane.b32.xlu0 %v39, 96
    %v242 = vpop.permute.xlu0 %241
    %v259 = vmul.f32 %v191, %v212
    %v260 = vmul.f32 %v191, %v214
    %v261 = vmul.f32 %v191, %v216
    %v262 = vmul.f32 %v191, %v218
    %v263 = vmul.f32 %v191, %v220
    %v264 = vmul.f32 %v191, %v222
    %v265 = vmul.f32 %v191, %v224
    %v266 = vmul.f32 %v191, %v226
    %v267 = vmul.f32 %v192, %v228
    %v268 = vmul.f32 %v192, %v230
    %v269 = vmul.f32 %v192, %v232
    %v270 = vmul.f32 %v192, %v234
    %v271 = vmul.f32 %v192, %v236
    %v272 = vmul.f32 %v192, %v238
    %v273 = vmul.f32 %v192, %v240
    %v274 = vmul.f32 %v192, %v242
    %291 = vrot.lane.b32.xlu0 %v259, 32
    %v292 = vpop.permute.xlu0 %291
    %293 = vrot.lane.b32.xlu0 %v260, 32
    %v294 = vpop.permute.xlu0 %293
    %295 = vrot.lane.b32.xlu0 %v261, 32
    %v296 = vpop.permute.xlu0 %295
    %297 = vrot.lane.b32.xlu0 %v262, 32
    %v298 = vpop.permute.xlu0 %297
    %299 = vrot.lane.b32.xlu0 %v263, 32
    %v300 = vpop.permute.xlu0 %299
    %301 = vrot.lane.b32.xlu0 %v264, 32
    %v302 = vpop.permute.xlu0 %301
    %303 = vrot.lane.b32.xlu0 %v265, 32
    %v304 = vpop.permute.xlu0 %303
    %305 = vrot.lane.b32.xlu0 %v266, 32
    %v306 = vpop.permute.xlu0 %305
    %307 = vrot.lane.b32.xlu0 %v267, 32
    %v308 = vpop.permute.xlu0 %307
    %309 = vrot.lane.b32.xlu0 %v268, 32
    %v310 = vpop.permute.xlu0 %309
    %311 = vrot.lane.b32.xlu0 %v269, 32
    %v312 = vpop.permute.xlu0 %311
    %313 = vrot.lane.b32.xlu0 %v270, 32
    %v314 = vpop.permute.xlu0 %313
    %315 = vrot.lane.b32.xlu0 %v271, 32
    %v316 = vpop.permute.xlu0 %315
    %317 = vrot.lane.b32.xlu0 %v272, 32
    %v318 = vpop.permute.xlu0 %317
    %319 = vrot.lane.b32.xlu0 %v273, 32
    %v320 = vpop.permute.xlu0 %319
    %321 = vrot.lane.b32.xlu0 %v274, 32
    %v322 = vpop.permute.xlu0 %321
    %v339 = vsel %vm54, %v292, 0.0
    %340 = vadd.xlane.f32.xlu0 %v339
    %v341 = vpop.xlane.xlu0 %340
    %v342 = vsel %vm54, %v294, 0.0
    %343 = vadd.xlane.f32.xlu0 %v342
    %v344 = vpop.xlane.xlu0 %343
    %v345 = vsel %vm54, %v296, 0.0
    %346 = vadd.xlane.f32.xlu0 %v345
    %v347 = vpop.xlane.xlu0 %346
    %v348 = vsel %vm54, %v298, 0.0
    %349 = vadd.xlane.f32.xlu0 %v348
    %v350 = vpop.xlane.xlu0 %349
    %v351 = vsel %vm54, %v300, 0.0
    %352 = vadd.xlane.f32.xlu0 %v351
    %v353 = vpop.xlane.xlu0 %352
    %v354 = vsel %vm54, %v302, 0.0
    %355 = vadd.xlane.f32.xlu0 %v354
    %v356 = vpop.xlane.xlu0 %355
    %v357 = vsel %vm54, %v304, 0.0
    %358 = vadd.xlane.f32.xlu0 %v357
    %v359 = vpop.xlane.xlu0 %358
    %v360 = vsel %vm54, %v306, 0.0
    %361 = vadd.xlane.f32.xlu0 %v360
    %v362 = vpop.xlane.xlu0 %361
    %v363 = vsel %vm54, %v308, 0.0
    %364 = vadd.xlane.f32.xlu0 %v363
    %v365 = vpop.xlane.xlu0 %364
    %v366 = vsel %vm54, %v310, 0.0
    %367 = vadd.xlane.f32.xlu0 %v366
    %v368 = vpop.xlane.xlu0 %367
    %v369 = vsel %vm54, %v312, 0.0
    %370 = vadd.xlane.f32.xlu0 %v369
    %v371 = vpop.xlane.xlu0 %370
    %v372 = vsel %vm54, %v314, 0.0
    %373 = vadd.xlane.f32.xlu0 %v372
    %v374 = vpop.xlane.xlu0 %373
    %v375 = vsel %vm54, %v316, 0.0
    %376 = vadd.xlane.f32.xlu0 %v375
    %v377 = vpop.xlane.xlu0 %376
    %v378 = vsel %vm54, %v318, 0.0
    %379 = vadd.xlane.f32.xlu0 %v378
    %v380 = vpop.xlane.xlu0 %379
    %v381 = vsel %vm54, %v320, 0.0
    %382 = vadd.xlane.f32.xlu0 %v381
    %v383 = vpop.xlane.xlu0 %382
    %v384 = vsel %vm54, %v322, 0.0
    %385 = vadd.xlane.f32.xlu0 %v384
    %v386 = vpop.xlane.xlu0 %385
    %v387 = vxor.u32 %v341, 2147483648
    %v388 = vxor.u32 %v344, 2147483648
    %v389 = vxor.u32 %v347, 2147483648
    %v390 = vxor.u32 %v350, 2147483648
    %v391 = vxor.u32 %v353, 2147483648
    %v392 = vxor.u32 %v356, 2147483648
    %v393 = vxor.u32 %v359, 2147483648
    %v394 = vxor.u32 %v362, 2147483648
    %v395 = vxor.u32 %v365, 2147483648
    %v396 = vxor.u32 %v368, 2147483648
    %v397 = vxor.u32 %v371, 2147483648
    %v398 = vxor.u32 %v374, 2147483648
    %v399 = vxor.u32 %v377, 2147483648
    %v400 = vxor.u32 %v380, 2147483648
    %v401 = vxor.u32 %v383, 2147483648
    %v402 = vxor.u32 %v386, 2147483648
    %v403 = vmul.f32 %v387, 1.442695
    %v404 = vpow.pop %v403
    %v405 = vmul.f32 %v388, 1.442695
    %v406 = vpow.pop %v405
    %v407 = vmul.f32 %v389, 1.442695
    %v408 = vpow.pop %v407
    %v409 = vmul.f32 %v390, 1.442695
    %v410 = vpow.pop %v409
    %v411 = vmul.f32 %v391, 1.442695
    %v412 = vpow.pop %v411
    %v413 = vmul.f32 %v392, 1.442695
    %v414 = vpow.pop %v413
    %v415 = vmul.f32 %v393, 1.442695
    %v416 = vpow.pop %v415
    %v417 = vmul.f32 %v394, 1.442695
    %v418 = vpow.pop %v417
    %v419 = vmul.f32 %v395, 1.442695
    %v420 = vpow.pop %v419
    %v421 = vmul.f32 %v396, 1.442695
    %v422 = vpow.pop %v421
    %v423 = vmul.f32 %v397, 1.442695
    %v424 = vpow.pop %v423
    %v425 = vmul.f32 %v398, 1.442695
    %v426 = vpow.pop %v425
    %v427 = vmul.f32 %v399, 1.442695
    %v428 = vpow.pop %v427
    %v429 = vmul.f32 %v400, 1.442695
    %v430 = vpow.pop %v429
    %v431 = vmul.f32 %v401, 1.442695
    %v432 = vpow.pop %v431
    %v433 = vmul.f32 %v402, 1.442695
    %v434 = vpow.pop %v433
    %v435 = vadd.f32 %v404, 1.0
    %v436 = vadd.f32 %v406, 1.0
    %v437 = vadd.f32 %v408, 1.0
    %v438 = vadd.f32 %v410, 1.0
    %v439 = vadd.f32 %v412, 1.0
    %v440 = vadd.f32 %v414, 1.0
    %v441 = vadd.f32 %v416, 1.0
    %v442 = vadd.f32 %v418, 1.0
    %v443 = vadd.f32 %v420, 1.0
    %v444 = vadd.f32 %v422, 1.0
    %v445 = vadd.f32 %v424, 1.0
    %v446 = vadd.f32 %v426, 1.0
    %v447 = vadd.f32 %v428, 1.0
    %v448 = vadd.f32 %v430, 1.0
    %v449 = vadd.f32 %v432, 1.0
    %v450 = vadd.f32 %v434, 1.0
    %v451 = vrcp.pop %v435
    %v452 = vmul.f32 %v435, %v451
    %v453 = vsub.f32 1.0, %v452
    %v454 = vmul.f32 %v451, %v453
    %v455 = vadd.f32 %v451, %v454
    %vm456 = vweird.f32 %v435
    %vm457 = vweird.f32 %v451
    %vm458 = vmor %vm456, %vm457
    %v459 = vsel %vm458, %v451, %v455
    %v460 = vand.u32 2147483647, %v435
    %vm461 = vcmp.eq.f32.partialorder %v460, 8.507059e+37
    %v462 = vand.u32 %v435, 2147483648
    %v463 = vor.u32 1.1754944e-38, %v462
    %v464 = vsel %vm461, %v463, %v459
    %v465 = vmul.f32 1.0, %v464
    %v466 = vrcp.pop %v436
    %v467 = vmul.f32 %v436, %v466
    %v468 = vsub.f32 1.0, %v467
    %v469 = vmul.f32 %v466, %v468
    %v470 = vadd.f32 %v466, %v469
    %vm471 = vweird.f32 %v436
    %vm472 = vweird.f32 %v466
    %vm473 = vmor %vm471, %vm472
    %v474 = vsel %vm473, %v466, %v470
    %v475 = vand.u32 2147483647, %v436
    %vm476 = vcmp.eq.f32.partialorder %v475, 8.507059e+37
    %v477 = vand.u32 %v436, 2147483648
    %v478 = vor.u32 1.1754944e-38, %v477
    %v479 = vsel %vm476, %v478, %v474
    %v480 = vmul.f32 1.0, %v479
    %v481 = vrcp.pop %v437
    %v482 = vmul.f32 %v437, %v481
    %v483 = vsub.f32 1.0, %v482
    %v484 = vmul.f32 %v481, %v483
    %v485 = vadd.f32 %v481, %v484
    %vm486 = vweird.f32 %v437
    %vm487 = vweird.f32 %v481
    %vm488 = vmor %vm486, %vm487
    %v489 = vsel %vm488, %v481, %v485
    %v490 = vand.u32 2147483647, %v437
    %vm491 = vcmp.eq.f32.partialorder %v490, 8.507059e+37
    %v492 = vand.u32 %v437, 2147483648
    %v493 = vor.u32 1.1754944e-38, %v492
    %v494 = vsel %vm491, %v493, %v489
    %v495 = vmul.f32 1.0, %v494
    %v496 = vrcp.pop %v438
    %v497 = vmul.f32 %v438, %v496
    %v498 = vsub.f32 1.0, %v497
    %v499 = vmul.f32 %v496, %v498
    %v500 = vadd.f32 %v496, %v499
    %vm501 = vweird.f32 %v438
    %vm502 = vweird.f32 %v496
    %vm503 = vmor %vm501, %vm502
    %v504 = vsel %vm503, %v496, %v500
    %v505 = vand.u32 2147483647, %v438
    %vm506 = vcmp.eq.f32.partialorder %v505, 8.507059e+37
    %v507 = vand.u32 %v438, 2147483648
    %v508 = vor.u32 1.1754944e-38, %v507
    %v509 = vsel %vm506, %v508, %v504
    %v510 = vmul.f32 1.0, %v509
    %v511 = vrcp.pop %v439
    %v512 = vmul.f32 %v439, %v511
    %v513 = vsub.f32 1.0, %v512
    %v514 = vmul.f32 %v511, %v513
    %v515 = vadd.f32 %v511, %v514
    %vm516 = vweird.f32 %v439
    %vm517 = vweird.f32 %v511
    %vm518 = vmor %vm516, %vm517
    %v519 = vsel %vm518, %v511, %v515
    %v520 = vand.u32 2147483647, %v439
    %vm521 = vcmp.eq.f32.partialorder %v520, 8.507059e+37
    %v522 = vand.u32 %v439, 2147483648
    %v523 = vor.u32 1.1754944e-38, %v522
    %v524 = vsel %vm521, %v523, %v519
    %v525 = vmul.f32 1.0, %v524
    %v526 = vrcp.pop %v440
    %v527 = vmul.f32 %v440, %v526
    %v528 = vsub.f32 1.0, %v527
    %v529 = vmul.f32 %v526, %v528
    %v530 = vadd.f32 %v526, %v529
    %vm531 = vweird.f32 %v440
    %vm532 = vweird.f32 %v526
    %vm533 = vmor %vm531, %vm532
    %v534 = vsel %vm533, %v526, %v530
    %v535 = vand.u32 2147483647, %v440
    %vm536 = vcmp.eq.f32.partialorder %v535, 8.507059e+37
    %v537 = vand.u32 %v440, 2147483648
    %v538 = vor.u32 1.1754944e-38, %v537
    %v539 = vsel %vm536, %v538, %v534
    %v540 = vmul.f32 1.0, %v539
    %v541 = vrcp.pop %v441
    %v542 = vmul.f32 %v441, %v541
    %v543 = vsub.f32 1.0, %v542
    %v544 = vmul.f32 %v541, %v543
    %v545 = vadd.f32 %v541, %v544
    %vm546 = vweird.f32 %v441
    %vm547 = vweird.f32 %v541
    %vm548 = vmor %vm546, %vm547
    %v549 = vsel %vm548, %v541, %v545
    %v550 = vand.u32 2147483647, %v441
    %vm551 = vcmp.eq.f32.partialorder %v550, 8.507059e+37
    %v552 = vand.u32 %v441, 2147483648
    %v553 = vor.u32 1.1754944e-38, %v552
    %v554 = vsel %vm551, %v553, %v549
    %v555 = vmul.f32 1.0, %v554
    %v556 = vrcp.pop %v442
    %v557 = vmul.f32 %v442, %v556
    %v558 = vsub.f32 1.0, %v557
    %v559 = vmul.f32 %v556, %v558
    %v560 = vadd.f32 %v556, %v559
    %vm561 = vweird.f32 %v442
    %vm562 = vweird.f32 %v556
    %vm563 = vmor %vm561, %vm562
    %v564 = vsel %vm563, %v556, %v560
    %v565 = vand.u32 2147483647, %v442
    %vm566 = vcmp.eq.f32.partialorder %v565, 8.507059e+37
    %v567 = vand.u32 %v442, 2147483648
    %v568 = vor.u32 1.1754944e-38, %v567
    %v569 = vsel %vm566, %v568, %v564
    %v570 = vmul.f32 1.0, %v569
    %v571 = vrcp.pop %v443
    %v572 = vmul.f32 %v443, %v571
    %v573 = vsub.f32 1.0, %v572
    %v574 = vmul.f32 %v571, %v573
    %v575 = vadd.f32 %v571, %v574
    %vm576 = vweird.f32 %v443
    %vm577 = vweird.f32 %v571
    %vm578 = vmor %vm576, %vm577
    %v579 = vsel %vm578, %v571, %v575
    %v580 = vand.u32 2147483647, %v443
    %vm581 = vcmp.eq.f32.partialorder %v580, 8.507059e+37
    %v582 = vand.u32 %v443, 2147483648
    %v583 = vor.u32 1.1754944e-38, %v582
    %v584 = vsel %vm581, %v583, %v579
    %v585 = vmul.f32 1.0, %v584
    %v586 = vrcp.pop %v444
    %v587 = vmul.f32 %v444, %v586
    %v588 = vsub.f32 1.0, %v587
    %v589 = vmul.f32 %v586, %v588
    %v590 = vadd.f32 %v586, %v589
    %vm591 = vweird.f32 %v444
    %vm592 = vweird.f32 %v586
    %vm593 = vmor %vm591, %vm592
    %v594 = vsel %vm593, %v586, %v590
    %v595 = vand.u32 2147483647, %v444
    %vm596 = vcmp.eq.f32.partialorder %v595, 8.507059e+37
    %v597 = vand.u32 %v444, 2147483648
    %v598 = vor.u32 1.1754944e-38, %v597
    %v599 = vsel %vm596, %v598, %v594
    %v600 = vmul.f32 1.0, %v599
    %v601 = vrcp.pop %v445
    %v602 = vmul.f32 %v445, %v601
    %v603 = vsub.f32 1.0, %v602
    %v604 = vmul.f32 %v601, %v603
    %v605 = vadd.f32 %v601, %v604
    %vm606 = vweird.f32 %v445
    %vm607 = vweird.f32 %v601
    %vm608 = vmor %vm606, %vm607
    %v609 = vsel %vm608, %v601, %v605
    %v610 = vand.u32 2147483647, %v445
    %vm611 = vcmp.eq.f32.partialorder %v610, 8.507059e+37
    %v612 = vand.u32 %v445, 2147483648
    %v613 = vor.u32 1.1754944e-38, %v612
    %v614 = vsel %vm611, %v613, %v609
    %v615 = vmul.f32 1.0, %v614
    %v616 = vrcp.pop %v446
    %v617 = vmul.f32 %v446, %v616
    %v618 = vsub.f32 1.0, %v617
    %v619 = vmul.f32 %v616, %v618
    %v620 = vadd.f32 %v616, %v619
    %vm621 = vweird.f32 %v446
    %vm622 = vweird.f32 %v616
    %vm623 = vmor %vm621, %vm622
    %v624 = vsel %vm623, %v616, %v620
    %v625 = vand.u32 2147483647, %v446
    %vm626 = vcmp.eq.f32.partialorder %v625, 8.507059e+37
    %v627 = vand.u32 %v446, 2147483648
    %v628 = vor.u32 1.1754944e-38, %v627
    %v629 = vsel %vm626, %v628, %v624
    %v630 = vmul.f32 1.0, %v629
    %v631 = vrcp.pop %v447
    %v632 = vmul.f32 %v447, %v631
    %v633 = vsub.f32 1.0, %v632
    %v634 = vmul.f32 %v631, %v633
    %v635 = vadd.f32 %v631, %v634
    %vm636 = vweird.f32 %v447
    %vm637 = vweird.f32 %v631
    %vm638 = vmor %vm636, %vm637
    %v639 = vsel %vm638, %v631, %v635
    %v640 = vand.u32 2147483647, %v447
    %vm641 = vcmp.eq.f32.partialorder %v640, 8.507059e+37
    %v642 = vand.u32 %v447, 2147483648
    %v643 = vor.u32 1.1754944e-38, %v642
    %v644 = vsel %vm641, %v643, %v639
    %v645 = vmul.f32 1.0, %v644
    %v646 = vrcp.pop %v448
    %v647 = vmul.f32 %v448, %v646
    %v648 = vsub.f32 1.0, %v647
    %v649 = vmul.f32 %v646, %v648
    %v650 = vadd.f32 %v646, %v649
    %vm651 = vweird.f32 %v448
    %vm652 = vweird.f32 %v646
    %vm653 = vmor %vm651, %vm652
    %v654 = vsel %vm653, %v646, %v650
    %v655 = vand.u32 2147483647, %v448
    %vm656 = vcmp.eq.f32.partialorder %v655, 8.507059e+37
    %v657 = vand.u32 %v448, 2147483648
    %v658 = vor.u32 1.1754944e-38, %v657
    %v659 = vsel %vm656, %v658, %v654
    %v660 = vmul.f32 1.0, %v659
    %v661 = vrcp.pop %v449
    %v662 = vmul.f32 %v449, %v661
    %v663 = vsub.f32 1.0, %v662
    %v664 = vmul.f32 %v661, %v663
    %v665 = vadd.f32 %v661, %v664
    %vm666 = vweird.f32 %v449
    %vm667 = vweird.f32 %v661
    %vm668 = vmor %vm666, %vm667
    %v669 = vsel %vm668, %v661, %v665
    %v670 = vand.u32 2147483647, %v449
    %vm671 = vcmp.eq.f32.partialorder %v670, 8.507059e+37
    %v672 = vand.u32 %v449, 2147483648
    %v673 = vor.u32 1.1754944e-38, %v672
    %v674 = vsel %vm671, %v673, %v669
    %v675 = vmul.f32 1.0, %v674
    %v676 = vrcp.pop %v450
    %v677 = vmul.f32 %v450, %v676
    %v678 = vsub.f32 1.0, %v677
    %v679 = vmul.f32 %v676, %v678
    %v680 = vadd.f32 %v676, %v679
    %vm681 = vweird.f32 %v450
    %vm682 = vweird.f32 %v676
    %vm683 = vmor %vm681, %vm682
    %v684 = vsel %vm683, %v676, %v680
    %v685 = vand.u32 2147483647, %v450
    %vm686 = vcmp.eq.f32.partialorder %v685, 8.507059e+37
    %v687 = vand.u32 %v450, 2147483648
    %v688 = vor.u32 1.1754944e-38, %v687
    %v689 = vsel %vm686, %v688, %v684
    %v690 = vmul.f32 1.0, %v689
    %v691 = vmul.f32 %v465, %v24
    %v692 = vmul.f32 %v480, %v25
    %v693 = vmul.f32 %v495, %v26
    %v694 = vmul.f32 %v510, %v27
    %v695 = vmul.f32 %v525, %v28
    %v696 = vmul.f32 %v540, %v29
    %v697 = vmul.f32 %v555, %v30
    %v698 = vmul.f32 %v570, %v31
    %v699 = vmul.f32 %v585, %v32
    %v700 = vmul.f32 %v600, %v33
    %v701 = vmul.f32 %v615, %v34
    %v702 = vmul.f32 %v630, %v35
    %v703 = vmul.f32 %v645, %v36
    %v704 = vmul.f32 %v660, %v37
    %v705 = vmul.f32 %v675, %v38
    %v706 = vmul.f32 %v690, %v39
    %v707 = vsel %vm54, %v691, 0.0
    %v708 = vsel %vm54, %v692, 0.0
    %v709 = vadd.f32 %v707, %v708
    %v710 = vsel %vm54, %v693, 0.0
    %v711 = vadd.f32 %v709, %v710
    %v712 = vsel %vm54, %v694, 0.0
    %v713 = vadd.f32 %v711, %v712
    %v714 = vsel %vm54, %v695, 0.0
    %v715 = vadd.f32 %v713, %v714
    %v716 = vsel %vm54, %v696, 0.0
    %v717 = vadd.f32 %v715, %v716
    %v718 = vsel %vm54, %v697, 0.0
    %v719 = vadd.f32 %v717, %v718
    %v720 = vsel %vm54, %v698, 0.0
    %v721 = vadd.f32 %v719, %v720
    %v722 = vrot.slane %v721, 4
    %v723 = vadd.f32 %v721, %v722
    %v724 = vrot.slane %v723, 2
    %v725 = vadd.f32 %v723, %v724
    %v726 = vrot.slane %v725, 1
    %v727 = vadd.f32 %v725, %v726
    %v728 = vsel %vm54, %v699, 0.0
    %v729 = vsel %vm54, %v700, 0.0
    %v730 = vadd.f32 %v728, %v729
    %v731 = vsel %vm54, %v701, 0.0
    %v732 = vadd.f32 %v730, %v731
    %v733 = vsel %vm54, %v702, 0.0
    %v734 = vadd.f32 %v732, %v733
    %v735 = vsel %vm54, %v703, 0.0
    %v736 = vadd.f32 %v734, %v735
    %v737 = vsel %vm54, %v704, 0.0
    %v738 = vadd.f32 %v736, %v737
    %v739 = vsel %vm54, %v705, 0.0
    %v740 = vadd.f32 %v738, %v739
    %v741 = vsel %vm54, %v706, 0.0
    %v742 = vadd.f32 %v740, %v741
    %v743 = vrot.slane %v742, 4
    %v744 = vadd.f32 %v742, %v743
    %v745 = vrot.slane %v744, 2
    %v746 = vadd.f32 %v744, %v745
    %v747 = vrot.slane %v746, 1
    %v748 = vadd.f32 %v746, %v747
    %vm751 = vcmask 1041409
    %v752 = vsel %vm751, %v748, %v727
    %754 = vst.msk [vmem:[#allocation3] sm:$0x3] %vm120, %v752
    %v771 = vlaneseq
    %v772 = vand.u32 %v771, 127
    %v773 = vperm.slane %v465, %v772
    %v774 = vadd.s32 %v772, 4294967288
    %v775 = vperm.slane %v480, %v774
    %vm776 = vcmask 130112
    %v777 = vsel %vm776, %v775, %v773
    %v778 = vadd.s32 %v772, 4294967280
    %v779 = vperm.slane %v495, %v778
    %vm780 = vcmask 195712
    %v781 = vsel %vm780, %v779, %v777
    %v782 = vadd.s32 %v772, 4294967272
    %v783 = vperm.slane %v510, %v782
    %vm784 = vcmask 261312
    %v785 = vsel %vm784, %v783, %v781
    %v786 = vadd.s32 %v772, 4294967264
    %v787 = vperm.slane %v525, %v786
    %vm788 = vcmask 326912
    %v789 = vsel %vm788, %v787, %v785
    %v790 = vadd.s32 %v772, 4294967256
    %v791 = vperm.slane %v540, %v790
    %vm792 = vcmask 392512
    %v793 = vsel %vm792, %v791, %v789
    %v794 = vadd.s32 %v772, 4294967248
    %v795 = vperm.slane %v555, %v794
    %vm796 = vcmask 458112
    %v797 = vsel %vm796, %v795, %v793
    %v798 = vadd.s32 %v772, 4294967240
    %v799 = vperm.slane %v570, %v798
    %vm800 = vcmask 523712
    %v801 = vsel %vm800, %v799, %v797
    %v802 = vperm.slane %v585, %v772
    %v803 = vperm.slane %v600, %v774
    %v804 = vsel %vm776, %v803, %v802
    %v805 = vperm.slane %v615, %v778
    %v806 = vsel %vm780, %v805, %v804
    %v807 = vperm.slane %v630, %v782
    %v808 = vsel %vm784, %v807, %v806
    %v809 = vperm.slane %v645, %v786
    %v810 = vsel %vm788, %v809, %v808
    %v811 = vperm.slane %v660, %v790
    %v812 = vsel %vm792, %v811, %v810
    %v813 = vperm.slane %v675, %v794
    %v814 = vsel %vm796, %v813, %v812
    %v815 = vperm.slane %v690, %v798
    %v816 = vsel %vm800, %v815, %v814
    %v817 = vsel %vm751, %v816, %v801
    %vm819 = vcmask 517120
    %820 = vst.msk [vmem:[#allocation5] sm:$0x3] %vm819, %v817
    %s821 = scalar_lea.vmem %s0, 2
    %v822 = vld [vmem:[%s821] sm:$0x3]
    %v823 = vsel %vm54, %v118, 0
    %825 = vmatpush.msra.mxu0 0.0
    %826 = vmatpush.msra.mxu0 0.0
    %827 = vmatpush.msra.mxu0 0.0
    %828 = vmatpush.msra.mxu0 0.0
    %829 = vmatpush.msra.mxu0 0.0
    %830 = vmatpush.msra.mxu0 0.0
    %831 = vmatpush.msra.mxu0 0.0
    %832 = vmatpush.msra.mxu0 0.0
    %833 = vmatpush.msra.mxu0 0.0
    %834 = vmatpush.msra.mxu0 0.0
    %835 = vmatpush.msra.mxu0 0.0
    %836 = vmatpush.msra.mxu0 0.0
    %837 = vmatpush.msra.mxu0 %v43
    %838 = vmatpush.msra.mxu0 %v42
    %839 = vmatpush.msra.mxu0 %v41
    %840 = vmatpush.msra.mxu0 %v40
    %841 = vmatmul.f32.gmra.mxu0 %v823
    %v842 = vpop.f32.mrf.mxu0
    %v843 = vadd.f32 0.0, %v842
    %844 = vdwg.mxu0
    %v845 = vadd.f32 %v822, %v843
    %v846 = vxor.u32 %v845, 2147483648
    %v847 = vmul.f32 %v846, 1.442695
    %v848 = vpow.pop %v847
    %v849 = vadd.f32 %v848, 1.0
    %v850 = vrcp.pop %v849
    %v851 = vmul.f32 %v849, %v850
    %v852 = vsub.f32 1.0, %v851
    %v853 = vmul.f32 %v850, %v852
    %v854 = vadd.f32 %v850, %v853
    %vm855 = vweird.f32 %v849
    %vm856 = vweird.f32 %v850
    %vm857 = vmor %vm855, %vm856
    %v858 = vsel %vm857, %v850, %v854
    %v859 = vand.u32 2147483647, %v849
    %vm860 = vcmp.eq.f32.partialorder %v859, 8.507059e+37
    %v861 = vand.u32 %v849, 2147483648
    %v862 = vor.u32 1.1754944e-38, %v861
    %v863 = vsel %vm860, %v862, %v858
    %v864 = vmul.f32 1.0, %v863
    %v865 = vtanh.pop %v845
    %v866 = vmul.f32 %v864, %v109
    %868 = vrot.lane.b32.xlu0 %v865, 64
    %v869 = vpop.permute.xlu0 %868
    %v871 = vmul.f32 %v864, %v869
    %873 = vrot.lane.b32.xlu0 %v871, 32
    %v874 = vpop.permute.xlu0 %873
    %v876 = vadd.f32 %v866, %v874
    %v877 = vtanh.pop %v876
    %879 = vrot.lane.b32.xlu0 %v877, 64
    %v880 = vpop.permute.xlu0 %879
    %v882 = vmul.f32 %v864, %v880
    %884 = vrot.lane.b32.xlu0 %v882, 32
    %v885 = vpop.permute.xlu0 %884
    %887 = vst.msk [vmem:[#allocation2] sm:$0x3] %vm120, %v885
    %888 = vrot.lane.b32.xlu0 %v188, 64
    %v889 = vpop.permute.xlu0 %888
    %891 = vst.msk [vmem:[#allocation2] sm:$0x3] %vm122, %v889
    %v892 = vld [vmem:[#allocation2] sm:$0x3]
    %v894 = vsel %vm128, %v892, 0
    %896 = vmatpush.msra.mxu0 0.0
    %897 = vmatpush.msra.mxu0 0.0
    %898 = vmatpush.msra.mxu0 0.0
    %899 = vmatpush.msra.mxu0 0.0
    %900 = vmatpush.msra.mxu0 0.0
    %901 = vmatpush.msra.mxu0 0.0
    %902 = vmatpush.msra.mxu0 0.0
    %903 = vmatpush.msra.mxu0 0.0
    %904 = vmatpush.msra.mxu0 %v51
    %905 = vmatpush.msra.mxu0 %v50
    %906 = vmatpush.msra.mxu0 %v49
    %907 = vmatpush.msra.mxu0 %v48
    %908 = vmatpush.msra.mxu0 %v47
    %909 = vmatpush.msra.mxu0 %v46
    %910 = vmatpush.msra.mxu0 %v45
    %911 = vmatpush.msra.mxu0 %v44
    %912 = vmatmul.f32.gmra.mxu0 %v894
    %v913 = vpop.f32.mrf.mxu0
    %v914 = vadd.f32 %v126, %v913
    %915 = vdwg.mxu0
    %v916 = vxor.u32 %v914, 2147483648
    %v917 = vmul.f32 %v916, 1.442695
    %v918 = vpow.pop %v917
    %v919 = vadd.f32 %v918, 1.0
    %v920 = vrcp.pop %v919
    %v921 = vmul.f32 %v919, %v920
    %v922 = vsub.f32 1.0, %v921
    %v923 = vmul.f32 %v920, %v922
    %v924 = vadd.f32 %v920, %v923
    %vm925 = vweird.f32 %v919
    %vm926 = vweird.f32 %v920
    %vm927 = vmor %vm925, %vm926
    %v928 = vsel %vm927, %v920, %v924
    %v929 = vand.u32 2147483647, %v919
    %vm930 = vcmp.eq.f32.partialorder %v929, 8.507059e+37
    %v931 = vand.u32 %v919, 2147483648
    %v932 = vor.u32 1.1754944e-38, %v931
    %v933 = vsel %vm930, %v932, %v928
    %v934 = vmul.f32 1.0, %v933
    %v935 = vtanh.pop %v914
    %v936 = vmul.f32 %v934, %v182
    %938 = vrot.lane.b32.xlu0 %v935, 64
    %v939 = vpop.permute.xlu0 %938
    %v941 = vmul.f32 %v934, %v939
    %943 = vrot.lane.b32.xlu0 %v941, 32
    %v944 = vpop.permute.xlu0 %943
    %v946 = vadd.f32 %v936, %v944
    %v947 = vtanh.pop %v946
    %949 = vrot.lane.b32.xlu0 %v947, 64
    %v950 = vpop.permute.xlu0 %949
    %v952 = vmul.f32 %v934, %v950
    %v954 = vrot.slane %v952, 1
    %v955 = vperm.slane %v952, 0
    %v956 = vperm.slane %v954, 0
    %v959 = vmul.f32 %v955, %v212
    %v960 = vmul.f32 %v955, %v214
    %v961 = vmul.f32 %v955, %v216
    %v962 = vmul.f32 %v955, %v218
    %v963 = vmul.f32 %v955, %v220
    %v964 = vmul.f32 %v955, %v222
    %v965 = vmul.f32 %v955, %v224
    %v966 = vmul.f32 %v955, %v226
    %v967 = vmul.f32 %v956, %v228
    %v968 = vmul.f32 %v956, %v230
    %v969 = vmul.f32 %v956, %v232
    %v970 = vmul.f32 %v956, %v234
    %v971 = vmul.f32 %v956, %v236
    %v972 = vmul.f32 %v956, %v238
    %v973 = vmul.f32 %v956, %v240
    %v974 = vmul.f32 %v956, %v242
    %991 = vrot.lane.b32.xlu0 %v959, 32
    %v992 = vpop.permute.xlu0 %991
    %993 = vrot.lane.b32.xlu0 %v960, 32
    %v994 = vpop.permute.xlu0 %993
    %995 = vrot.lane.b32.xlu0 %v961, 32
    %v996 = vpop.permute.xlu0 %995
    %997 = vrot.lane.b32.xlu0 %v962, 32
    %v998 = vpop.permute.xlu0 %997
    %999 = vrot.lane.b32.xlu0 %v963, 32
    %v1000 = vpop.permute.xlu0 %999
    %1001 = vrot.lane.b32.xlu0 %v964, 32
    %v1002 = vpop.permute.xlu0 %1001
    %1003 = vrot.lane.b32.xlu0 %v965, 32
    %v1004 = vpop.permute.xlu0 %1003
    %1005 = vrot.lane.b32.xlu0 %v966, 32
    %v1006 = vpop.permute.xlu0 %1005
    %1007 = vrot.lane.b32.xlu0 %v967, 32
    %v1008 = vpop.permute.xlu0 %1007
    %1009 = vrot.lane.b32.xlu0 %v968, 32
    %v1010 = vpop.permute.xlu0 %1009
    %1011 = vrot.lane.b32.xlu0 %v969, 32
    %v1012 = vpop.permute.xlu0 %1011
    %1013 = vrot.lane.b32.xlu0 %v970, 32
    %v1014 = vpop.permute.xlu0 %1013
    %1015 = vrot.lane.b32.xlu0 %v971, 32
    %v1016 = vpop.permute.xlu0 %1015
    %1017 = vrot.lane.b32.xlu0 %v972, 32
    %v1018 = vpop.permute.xlu0 %1017
    %1019 = vrot.lane.b32.xlu0 %v973, 32
    %v1020 = vpop.permute.xlu0 %1019
    %1021 = vrot.lane.b32.xlu0 %v974, 32
    %v1022 = vpop.permute.xlu0 %1021
    %v1039 = vsel %vm54, %v992, 0.0
    %1040 = vadd.xlane.f32.xlu0 %v1039
    %v1041 = vpop.xlane.xlu0 %1040
    %v1042 = vsel %vm54, %v994, 0.0
    %1043 = vadd.xlane.f32.xlu0 %v1042
    %v1044 = vpop.xlane.xlu0 %1043
    %v1045 = vsel %vm54, %v996, 0.0
    %1046 = vadd.xlane.f32.xlu0 %v1045
    %v1047 = vpop.xlane.xlu0 %1046
    %v1048 = vsel %vm54, %v998, 0.0
    %1049 = vadd.xlane.f32.xlu0 %v1048
    %v1050 = vpop.xlane.xlu0 %1049
    %v1051 = vsel %vm54, %v1000, 0.0
    %1052 = vadd.xlane.f32.xlu0 %v1051
    %v1053 = vpop.xlane.xlu0 %1052
    %v1054 = vsel %vm54, %v1002, 0.0
    %1055 = vadd.xlane.f32.xlu0 %v1054
    %v1056 = vpop.xlane.xlu0 %1055
    %v1057 = vsel %vm54, %v1004, 0.0
    %1058 = vadd.xlane.f32.xlu0 %v1057
    %v1059 = vpop.xlane.xlu0 %1058
    %v1060 = vsel %vm54, %v1006, 0.0
    %1061 = vadd.xlane.f32.xlu0 %v1060
    %v1062 = vpop.xlane.xlu0 %1061
    %v1063 = vsel %vm54, %v1008, 0.0
    %1064 = vadd.xlane.f32.xlu0 %v1063
    %v1065 = vpop.xlane.xlu0 %1064
    %v1066 = vsel %vm54, %v1010, 0.0
    %1067 = vadd.xlane.f32.xlu0 %v1066
    %v1068 = vpop.xlane.xlu0 %1067
    %v1069 = vsel %vm54, %v1012, 0.0
    %1070 = vadd.xlane.f32.xlu0 %v1069
    %v1071 = vpop.xlane.xlu0 %1070
    %v1072 = vsel %vm54, %v1014, 0.0
    %1073 = vadd.xlane.f32.xlu0 %v1072
    %v1074 = vpop.xlane.xlu0 %1073
    %v1075 = vsel %vm54, %v1016, 0.0
    %1076 = vadd.xlane.f32.xlu0 %v1075
    %v1077 = vpop.xlane.xlu0 %1076
    %v1078 = vsel %vm54, %v1018, 0.0
    %1079 = vadd.xlane.f32.xlu0 %v1078
    %v1080 = vpop.xlane.xlu0 %1079
    %v1081 = vsel %vm54, %v1020, 0.0
    %1082 = vadd.xlane.f32.xlu0 %v1081
    %v1083 = vpop.xlane.xlu0 %1082
    %v1084 = vsel %vm54, %v1022, 0.0
    %1085 = vadd.xlane.f32.xlu0 %v1084
    %v1086 = vpop.xlane.xlu0 %1085
    %v1087 = vxor.u32 %v1041, 2147483648
    %v1088 = vxor.u32 %v1044, 2147483648
    %v1089 = vxor.u32 %v1047, 2147483648
    %v1090 = vxor.u32 %v1050, 2147483648
    %v1091 = vxor.u32 %v1053, 2147483648
    %v1092 = vxor.u32 %v1056, 2147483648
    %v1093 = vxor.u32 %v1059, 2147483648
    %v1094 = vxor.u32 %v1062, 2147483648
    %v1095 = vxor.u32 %v1065, 2147483648
    %v1096 = vxor.u32 %v1068, 2147483648
    %v1097 = vxor.u32 %v1071, 2147483648
    %v1098 = vxor.u32 %v1074, 2147483648
    %v1099 = vxor.u32 %v1077, 2147483648
    %v1100 = vxor.u32 %v1080, 2147483648
    %v1101 = vxor.u32 %v1083, 2147483648
    %v1102 = vxor.u32 %v1086, 2147483648
    %v1103 = vmul.f32 %v1087, 1.442695
    %v1104 = vpow.pop %v1103
    %v1105 = vmul.f32 %v1088, 1.442695
    %v1106 = vpow.pop %v1105
    %v1107 = vmul.f32 %v1089, 1.442695
    %v1108 = vpow.pop %v1107
    %v1109 = vmul.f32 %v1090, 1.442695
    %v1110 = vpow.pop %v1109
    %v1111 = vmul.f32 %v1091, 1.442695
    %v1112 = vpow.pop %v1111
    %v1113 = vmul.f32 %v1092, 1.442695
    %v1114 = vpow.pop %v1113
    %v1115 = vmul.f32 %v1093, 1.442695
    %v1116 = vpow.pop %v1115
    %v1117 = vmul.f32 %v1094, 1.442695
    %v1118 = vpow.pop %v1117
    %v1119 = vmul.f32 %v1095, 1.442695
    %v1120 = vpow.pop %v1119
    %v1121 = vmul.f32 %v1096, 1.442695
    %v1122 = vpow.pop %v1121
    %v1123 = vmul.f32 %v1097, 1.442695
    %v1124 = vpow.pop %v1123
    %v1125 = vmul.f32 %v1098, 1.442695
    %v1126 = vpow.pop %v1125
    %v1127 = vmul.f32 %v1099, 1.442695
    %v1128 = vpow.pop %v1127
    %v1129 = vmul.f32 %v1100, 1.442695
    %v1130 = vpow.pop %v1129
    %v1131 = vmul.f32 %v1101, 1.442695
    %v1132 = vpow.pop %v1131
    %v1133 = vmul.f32 %v1102, 1.442695
    %v1134 = vpow.pop %v1133
    %v1135 = vadd.f32 %v1104, 1.0
    %v1136 = vadd.f32 %v1106, 1.0
    %v1137 = vadd.f32 %v1108, 1.0
    %v1138 = vadd.f32 %v1110, 1.0
    %v1139 = vadd.f32 %v1112, 1.0
    %v1140 = vadd.f32 %v1114, 1.0
    %v1141 = vadd.f32 %v1116, 1.0
    %v1142 = vadd.f32 %v1118, 1.0
    %v1143 = vadd.f32 %v1120, 1.0
    %v1144 = vadd.f32 %v1122, 1.0
    %v1145 = vadd.f32 %v1124, 1.0
    %v1146 = vadd.f32 %v1126, 1.0
    %v1147 = vadd.f32 %v1128, 1.0
    %v1148 = vadd.f32 %v1130, 1.0
    %v1149 = vadd.f32 %v1132, 1.0
    %v1150 = vadd.f32 %v1134, 1.0
    %v1151 = vrcp.pop %v1135
    %v1152 = vmul.f32 %v1135, %v1151
    %v1153 = vsub.f32 1.0, %v1152
    %v1154 = vmul.f32 %v1151, %v1153
    %v1155 = vadd.f32 %v1151, %v1154
    %vm1156 = vweird.f32 %v1135
    %vm1157 = vweird.f32 %v1151
    %vm1158 = vmor %vm1156, %vm1157
    %v1159 = vsel %vm1158, %v1151, %v1155
    %v1160 = vand.u32 2147483647, %v1135
    %vm1161 = vcmp.eq.f32.partialorder %v1160, 8.507059e+37
    %v1162 = vand.u32 %v1135, 2147483648
    %v1163 = vor.u32 1.1754944e-38, %v1162
    %v1164 = vsel %vm1161, %v1163, %v1159
    %v1165 = vmul.f32 1.0, %v1164
    %v1166 = vrcp.pop %v1136
    %v1167 = vmul.f32 %v1136, %v1166
    %v1168 = vsub.f32 1.0, %v1167
    %v1169 = vmul.f32 %v1166, %v1168
    %v1170 = vadd.f32 %v1166, %v1169
    %vm1171 = vweird.f32 %v1136
    %vm1172 = vweird.f32 %v1166
    %vm1173 = vmor %vm1171, %vm1172
    %v1174 = vsel %vm1173, %v1166, %v1170
    %v1175 = vand.u32 2147483647, %v1136
    %vm1176 = vcmp.eq.f32.partialorder %v1175, 8.507059e+37
    %v1177 = vand.u32 %v1136, 2147483648
    %v1178 = vor.u32 1.1754944e-38, %v1177
    %v1179 = vsel %vm1176, %v1178, %v1174
    %v1180 = vmul.f32 1.0, %v1179
    %v1181 = vrcp.pop %v1137
    %v1182 = vmul.f32 %v1137, %v1181
    %v1183 = vsub.f32 1.0, %v1182
    %v1184 = vmul.f32 %v1181, %v1183
    %v1185 = vadd.f32 %v1181, %v1184
    %vm1186 = vweird.f32 %v1137
    %vm1187 = vweird.f32 %v1181
    %vm1188 = vmor %vm1186, %vm1187
    %v1189 = vsel %vm1188, %v1181, %v1185
    %v1190 = vand.u32 2147483647, %v1137
    %vm1191 = vcmp.eq.f32.partialorder %v1190, 8.507059e+37
    %v1192 = vand.u32 %v1137, 2147483648
    %v1193 = vor.u32 1.1754944e-38, %v1192
    %v1194 = vsel %vm1191, %v1193, %v1189
    %v1195 = vmul.f32 1.0, %v1194
    %v1196 = vrcp.pop %v1138
    %v1197 = vmul.f32 %v1138, %v1196
    %v1198 = vsub.f32 1.0, %v1197
    %v1199 = vmul.f32 %v1196, %v1198
    %v1200 = vadd.f32 %v1196, %v1199
    %vm1201 = vweird.f32 %v1138
    %vm1202 = vweird.f32 %v1196
    %vm1203 = vmor %vm1201, %vm1202
    %v1204 = vsel %vm1203, %v1196, %v1200
    %v1205 = vand.u32 2147483647, %v1138
    %vm1206 = vcmp.eq.f32.partialorder %v1205, 8.507059e+37
    %v1207 = vand.u32 %v1138, 2147483648
    %v1208 = vor.u32 1.1754944e-38, %v1207
    %v1209 = vsel %vm1206, %v1208, %v1204
    %v1210 = vmul.f32 1.0, %v1209
    %v1211 = vrcp.pop %v1139
    %v1212 = vmul.f32 %v1139, %v1211
    %v1213 = vsub.f32 1.0, %v1212
    %v1214 = vmul.f32 %v1211, %v1213
    %v1215 = vadd.f32 %v1211, %v1214
    %vm1216 = vweird.f32 %v1139
    %vm1217 = vweird.f32 %v1211
    %vm1218 = vmor %vm1216, %vm1217
    %v1219 = vsel %vm1218, %v1211, %v1215
    %v1220 = vand.u32 2147483647, %v1139
    %vm1221 = vcmp.eq.f32.partialorder %v1220, 8.507059e+37
    %v1222 = vand.u32 %v1139, 2147483648
    %v1223 = vor.u32 1.1754944e-38, %v1222
    %v1224 = vsel %vm1221, %v1223, %v1219
    %v1225 = vmul.f32 1.0, %v1224
    %v1226 = vrcp.pop %v1140
    %v1227 = vmul.f32 %v1140, %v1226
    %v1228 = vsub.f32 1.0, %v1227
    %v1229 = vmul.f32 %v1226, %v1228
    %v1230 = vadd.f32 %v1226, %v1229
    %vm1231 = vweird.f32 %v1140
    %vm1232 = vweird.f32 %v1226
    %vm1233 = vmor %vm1231, %vm1232
    %v1234 = vsel %vm1233, %v1226, %v1230
    %v1235 = vand.u32 2147483647, %v1140
    %vm1236 = vcmp.eq.f32.partialorder %v1235, 8.507059e+37
    %v1237 = vand.u32 %v1140, 2147483648
    %v1238 = vor.u32 1.1754944e-38, %v1237
    %v1239 = vsel %vm1236, %v1238, %v1234
    %v1240 = vmul.f32 1.0, %v1239
    %v1241 = vrcp.pop %v1141
    %v1242 = vmul.f32 %v1141, %v1241
    %v1243 = vsub.f32 1.0, %v1242
    %v1244 = vmul.f32 %v1241, %v1243
    %v1245 = vadd.f32 %v1241, %v1244
    %vm1246 = vweird.f32 %v1141
    %vm1247 = vweird.f32 %v1241
    %vm1248 = vmor %vm1246, %vm1247
    %v1249 = vsel %vm1248, %v1241, %v1245
    %v1250 = vand.u32 2147483647, %v1141
    %vm1251 = vcmp.eq.f32.partialorder %v1250, 8.507059e+37
    %v1252 = vand.u32 %v1141, 2147483648
    %v1253 = vor.u32 1.1754944e-38, %v1252
    %v1254 = vsel %vm1251, %v1253, %v1249
    %v1255 = vmul.f32 1.0, %v1254
    %v1256 = vrcp.pop %v1142
    %v1257 = vmul.f32 %v1142, %v1256
    %v1258 = vsub.f32 1.0, %v1257
    %v1259 = vmul.f32 %v1256, %v1258
    %v1260 = vadd.f32 %v1256, %v1259
    %vm1261 = vweird.f32 %v1142
    %vm1262 = vweird.f32 %v1256
    %vm1263 = vmor %vm1261, %vm1262
    %v1264 = vsel %vm1263, %v1256, %v1260
    %v1265 = vand.u32 2147483647, %v1142
    %vm1266 = vcmp.eq.f32.partialorder %v1265, 8.507059e+37
    %v1267 = vand.u32 %v1142, 2147483648
    %v1268 = vor.u32 1.1754944e-38, %v1267
    %v1269 = vsel %vm1266, %v1268, %v1264
    %v1270 = vmul.f32 1.0, %v1269
    %v1271 = vrcp.pop %v1143
    %v1272 = vmul.f32 %v1143, %v1271
    %v1273 = vsub.f32 1.0, %v1272
    %v1274 = vmul.f32 %v1271, %v1273
    %v1275 = vadd.f32 %v1271, %v1274
    %vm1276 = vweird.f32 %v1143
    %vm1277 = vweird.f32 %v1271
    %vm1278 = vmor %vm1276, %vm1277
    %v1279 = vsel %vm1278, %v1271, %v1275
    %v1280 = vand.u32 2147483647, %v1143
    %vm1281 = vcmp.eq.f32.partialorder %v1280, 8.507059e+37
    %v1282 = vand.u32 %v1143, 2147483648
    %v1283 = vor.u32 1.1754944e-38, %v1282
    %v1284 = vsel %vm1281, %v1283, %v1279
    %v1285 = vmul.f32 1.0, %v1284
    %v1286 = vrcp.pop %v1144
    %v1287 = vmul.f32 %v1144, %v1286
    %v1288 = vsub.f32 1.0, %v1287
    %v1289 = vmul.f32 %v1286, %v1288
    %v1290 = vadd.f32 %v1286, %v1289
    %vm1291 = vweird.f32 %v1144
    %vm1292 = vweird.f32 %v1286
    %vm1293 = vmor %vm1291, %vm1292
    %v1294 = vsel %vm1293, %v1286, %v1290
    %v1295 = vand.u32 2147483647, %v1144
    %vm1296 = vcmp.eq.f32.partialorder %v1295, 8.507059e+37
    %v1297 = vand.u32 %v1144, 2147483648
    %v1298 = vor.u32 1.1754944e-38, %v1297
    %v1299 = vsel %vm1296, %v1298, %v1294
    %v1300 = vmul.f32 1.0, %v1299
    %v1301 = vrcp.pop %v1145
    %v1302 = vmul.f32 %v1145, %v1301
    %v1303 = vsub.f32 1.0, %v1302
    %v1304 = vmul.f32 %v1301, %v1303
    %v1305 = vadd.f32 %v1301, %v1304
    %vm1306 = vweird.f32 %v1145
    %vm1307 = vweird.f32 %v1301
    %vm1308 = vmor %vm1306, %vm1307
    %v1309 = vsel %vm1308, %v1301, %v1305
    %v1310 = vand.u32 2147483647, %v1145
    %vm1311 = vcmp.eq.f32.partialorder %v1310, 8.507059e+37
    %v1312 = vand.u32 %v1145, 2147483648
    %v1313 = vor.u32 1.1754944e-38, %v1312
    %v1314 = vsel %vm1311, %v1313, %v1309
    %v1315 = vmul.f32 1.0, %v1314
    %v1316 = vrcp.pop %v1146
    %v1317 = vmul.f32 %v1146, %v1316
    %v1318 = vsub.f32 1.0, %v1317
    %v1319 = vmul.f32 %v1316, %v1318
    %v1320 = vadd.f32 %v1316, %v1319
    %vm1321 = vweird.f32 %v1146
    %vm1322 = vweird.f32 %v1316
    %vm1323 = vmor %vm1321, %vm1322
    %v1324 = vsel %vm1323, %v1316, %v1320
    %v1325 = vand.u32 2147483647, %v1146
    %vm1326 = vcmp.eq.f32.partialorder %v1325, 8.507059e+37
    %v1327 = vand.u32 %v1146, 2147483648
    %v1328 = vor.u32 1.1754944e-38, %v1327
    %v1329 = vsel %vm1326, %v1328, %v1324
    %v1330 = vmul.f32 1.0, %v1329
    %v1331 = vrcp.pop %v1147
    %v1332 = vmul.f32 %v1147, %v1331
    %v1333 = vsub.f32 1.0, %v1332
    %v1334 = vmul.f32 %v1331, %v1333
    %v1335 = vadd.f32 %v1331, %v1334
    %vm1336 = vweird.f32 %v1147
    %vm1337 = vweird.f32 %v1331
    %vm1338 = vmor %vm1336, %vm1337
    %v1339 = vsel %vm1338, %v1331, %v1335
    %v1340 = vand.u32 2147483647, %v1147
    %vm1341 = vcmp.eq.f32.partialorder %v1340, 8.507059e+37
    %v1342 = vand.u32 %v1147, 2147483648
    %v1343 = vor.u32 1.1754944e-38, %v1342
    %v1344 = vsel %vm1341, %v1343, %v1339
    %v1345 = vmul.f32 1.0, %v1344
    %v1346 = vrcp.pop %v1148
    %v1347 = vmul.f32 %v1148, %v1346
    %v1348 = vsub.f32 1.0, %v1347
    %v1349 = vmul.f32 %v1346, %v1348
    %v1350 = vadd.f32 %v1346, %v1349
    %vm1351 = vweird.f32 %v1148
    %vm1352 = vweird.f32 %v1346
    %vm1353 = vmor %vm1351, %vm1352
    %v1354 = vsel %vm1353, %v1346, %v1350
    %v1355 = vand.u32 2147483647, %v1148
    %vm1356 = vcmp.eq.f32.partialorder %v1355, 8.507059e+37
    %v1357 = vand.u32 %v1148, 2147483648
    %v1358 = vor.u32 1.1754944e-38, %v1357
    %v1359 = vsel %vm1356, %v1358, %v1354
    %v1360 = vmul.f32 1.0, %v1359
    %v1361 = vrcp.pop %v1149
    %v1362 = vmul.f32 %v1149, %v1361
    %v1363 = vsub.f32 1.0, %v1362
    %v1364 = vmul.f32 %v1361, %v1363
    %v1365 = vadd.f32 %v1361, %v1364
    %vm1366 = vweird.f32 %v1149
    %vm1367 = vweird.f32 %v1361
    %vm1368 = vmor %vm1366, %vm1367
    %v1369 = vsel %vm1368, %v1361, %v1365
    %v1370 = vand.u32 2147483647, %v1149
    %vm1371 = vcmp.eq.f32.partialorder %v1370, 8.507059e+37
    %v1372 = vand.u32 %v1149, 2147483648
    %v1373 = vor.u32 1.1754944e-38, %v1372
    %v1374 = vsel %vm1371, %v1373, %v1369
    %v1375 = vmul.f32 1.0, %v1374
    %v1376 = vrcp.pop %v1150
    %v1377 = vmul.f32 %v1150, %v1376
    %v1378 = vsub.f32 1.0, %v1377
    %v1379 = vmul.f32 %v1376, %v1378
    %v1380 = vadd.f32 %v1376, %v1379
    %vm1381 = vweird.f32 %v1150
    %vm1382 = vweird.f32 %v1376
    %vm1383 = vmor %vm1381, %vm1382
    %v1384 = vsel %vm1383, %v1376, %v1380
    %v1385 = vand.u32 2147483647, %v1150
    %vm1386 = vcmp.eq.f32.partialorder %v1385, 8.507059e+37
    %v1387 = vand.u32 %v1150, 2147483648
    %v1388 = vor.u32 1.1754944e-38, %v1387
    %v1389 = vsel %vm1386, %v1388, %v1384
    %v1390 = vmul.f32 1.0, %v1389
    %v1391 = vmul.f32 %v1165, %v24
    %v1392 = vmul.f32 %v1180, %v25
    %v1393 = vmul.f32 %v1195, %v26
    %v1394 = vmul.f32 %v1210, %v27
    %v1395 = vmul.f32 %v1225, %v28
    %v1396 = vmul.f32 %v1240, %v29
    %v1397 = vmul.f32 %v1255, %v30
    %v1398 = vmul.f32 %v1270, %v31
    %v1399 = vmul.f32 %v1285, %v32
    %v1400 = vmul.f32 %v1300, %v33
    %v1401 = vmul.f32 %v1315, %v34
    %v1402 = vmul.f32 %v1330, %v35
    %v1403 = vmul.f32 %v1345, %v36
    %v1404 = vmul.f32 %v1360, %v37
    %v1405 = vmul.f32 %v1375, %v38
    %v1406 = vmul.f32 %v1390, %v39
    %v1407 = vsel %vm54, %v1391, 0.0
    %v1408 = vsel %vm54, %v1392, 0.0
    %v1409 = vadd.f32 %v1407, %v1408
    %v1410 = vsel %vm54, %v1393, 0.0
    %v1411 = vadd.f32 %v1409, %v1410
    %v1412 = vsel %vm54, %v1394, 0.0
    %v1413 = vadd.f32 %v1411, %v1412
    %v1414 = vsel %vm54, %v1395, 0.0
    %v1415 = vadd.f32 %v1413, %v1414
    %v1416 = vsel %vm54, %v1396, 0.0
    %v1417 = vadd.f32 %v1415, %v1416
    %v1418 = vsel %vm54, %v1397, 0.0
    %v1419 = vadd.f32 %v1417, %v1418
    %v1420 = vsel %vm54, %v1398, 0.0
    %v1421 = vadd.f32 %v1419, %v1420
    %v1422 = vrot.slane %v1421, 4
    %v1423 = vadd.f32 %v1421, %v1422
    %v1424 = vrot.slane %v1423, 2
    %v1425 = vadd.f32 %v1423, %v1424
    %v1426 = vrot.slane %v1425, 1
    %v1427 = vadd.f32 %v1425, %v1426
    %v1428 = vsel %vm54, %v1399, 0.0
    %v1429 = vsel %vm54, %v1400, 0.0
    %v1430 = vadd.f32 %v1428, %v1429
    %v1431 = vsel %vm54, %v1401, 0.0
    %v1432 = vadd.f32 %v1430, %v1431
    %v1433 = vsel %vm54, %v1402, 0.0
    %v1434 = vadd.f32 %v1432, %v1433
    %v1435 = vsel %vm54, %v1403, 0.0
    %v1436 = vadd.f32 %v1434, %v1435
    %v1437 = vsel %vm54, %v1404, 0.0
    %v1438 = vadd.f32 %v1436, %v1437
    %v1439 = vsel %vm54, %v1405, 0.0
    %v1440 = vadd.f32 %v1438, %v1439
    %v1441 = vsel %vm54, %v1406, 0.0
    %v1442 = vadd.f32 %v1440, %v1441
    %v1443 = vrot.slane %v1442, 4
    %v1444 = vadd.f32 %v1442, %v1443
    %v1445 = vrot.slane %v1444, 2
    %v1446 = vadd.f32 %v1444, %v1445
    %v1447 = vrot.slane %v1446, 1
    %v1448 = vadd.f32 %v1446, %v1447
    %v1451 = vsel %vm751, %v1448, %v1427
    %s1453 = scalar_lea.vmem [#allocation3], 2
    %1454 = vst.msk [vmem:[%s1453] sm:$0x3] %vm120, %v1451
    %v1471 = vperm.slane %v1165, %v772
    %v1472 = vperm.slane %v1180, %v774
    %v1473 = vsel %vm776, %v1472, %v1471
    %v1474 = vperm.slane %v1195, %v778
    %v1475 = vsel %vm780, %v1474, %v1473
    %v1476 = vperm.slane %v1210, %v782
    %v1477 = vsel %vm784, %v1476, %v1475
    %v1478 = vperm.slane %v1225, %v786
    %v1479 = vsel %vm788, %v1478, %v1477
    %v1480 = vperm.slane %v1240, %v790
    %v1481 = vsel %vm792, %v1480, %v1479
    %v1482 = vperm.slane %v1255, %v794
    %v1483 = vsel %vm796, %v1482, %v1481
    %v1484 = vperm.slane %v1270, %v798
    %v1485 = vsel %vm800, %v1484, %v1483
    %v1486 = vperm.slane %v1285, %v772
    %v1487 = vperm.slane %v1300, %v774
    %v1488 = vsel %vm776, %v1487, %v1486
    %v1489 = vperm.slane %v1315, %v778
    %v1490 = vsel %vm780, %v1489, %v1488
    %v1491 = vperm.slane %v1330, %v782
    %v1492 = vsel %vm784, %v1491, %v1490
    %v1493 = vperm.slane %v1345, %v786
    %v1494 = vsel %vm788, %v1493, %v1492
    %v1495 = vperm.slane %v1360, %v790
    %v1496 = vsel %vm792, %v1495, %v1494
    %v1497 = vperm.slane %v1375, %v794
    %v1498 = vsel %vm796, %v1497, %v1496
    %v1499 = vperm.slane %v1390, %v798
    %v1500 = vsel %vm800, %v1499, %v1498
    %v1501 = vsel %vm751, %v1500, %v1485
    %s1503 = scalar_lea.vmem [#allocation5], 2
    %1504 = vst.msk [vmem:[%s1503] sm:$0x3] %vm819, %v1501
    %s1505 = scalar_lea.vmem %s0, 4
    %v1506 = vld [vmem:[%s1505] sm:$0x3]
    %v1507 = vsel %vm54, %v885, 0
    %1509 = vmatpush.msra.mxu0 0.0
    %1510 = vmatpush.msra.mxu0 0.0
    %1511 = vmatpush.msra.mxu0 0.0
    %1512 = vmatpush.msra.mxu0 0.0
    %1513 = vmatpush.msra.mxu0 0.0
    %1514 = vmatpush.msra.mxu0 0.0
    %1515 = vmatpush.msra.mxu0 0.0
    %1516 = vmatpush.msra.mxu0 0.0
    %1517 = vmatpush.msra.mxu0 0.0
    %1518 = vmatpush.msra.mxu0 0.0
    %1519 = vmatpush.msra.mxu0 0.0
    %1520 = vmatpush.msra.mxu0 0.0
    %1521 = vmatpush.msra.mxu0 %v43
    %1522 = vmatpush.msra.mxu0 %v42
    %1523 = vmatpush.msra.mxu0 %v41
    %1524 = vmatpush.msra.mxu0 %v40
    %1525 = vmatmul.f32.gmra.mxu0 %v1507
    %v1526 = vpop.f32.mrf.mxu0
    %v1527 = vadd.f32 0.0, %v1526
    %1528 = vdwg.mxu0
    %v1529 = vadd.f32 %v1506, %v1527
    %v1530 = vxor.u32 %v1529, 2147483648
    %v1531 = vmul.f32 %v1530, 1.442695
    %v1532 = vpow.pop %v1531
    %v1533 = vadd.f32 %v1532, 1.0
    %v1534 = vrcp.pop %v1533
    %v1535 = vmul.f32 %v1533, %v1534
    %v1536 = vsub.f32 1.0, %v1535
    %v1537 = vmul.f32 %v1534, %v1536
    %v1538 = vadd.f32 %v1534, %v1537
    %vm1539 = vweird.f32 %v1533
    %vm1540 = vweird.f32 %v1534
    %vm1541 = vmor %vm1539, %vm1540
    %v1542 = vsel %vm1541, %v1534, %v1538
    %v1543 = vand.u32 2147483647, %v1533
    %vm1544 = vcmp.eq.f32.partialorder %v1543, 8.507059e+37
    %v1545 = vand.u32 %v1533, 2147483648
    %v1546 = vor.u32 1.1754944e-38, %v1545
    %v1547 = vsel %vm1544, %v1546, %v1542
    %v1548 = vmul.f32 1.0, %v1547
    %v1549 = vtanh.pop %v1529
    %v1550 = vmul.f32 %v1548, %v876
    %1552 = vrot.lane.b32.xlu0 %v1549, 64
    %v1553 = vpop.permute.xlu0 %1552
    %v1555 = vmul.f32 %v1548, %v1553
    %1557 = vrot.lane.b32.xlu0 %v1555, 32
    %v1558 = vpop.permute.xlu0 %1557
    %v1560 = vadd.f32 %v1550, %v1558
    %v1561 = vtanh.pop %v1560
    %1563 = vrot.lane.b32.xlu0 %v1561, 64
    %v1564 = vpop.permute.xlu0 %1563
    %v1566 = vmul.f32 %v1548, %v1564
    %1568 = vrot.lane.b32.xlu0 %v1566, 32
    %v1569 = vpop.permute.xlu0 %1568
    %1571 = vst.msk [vmem:[#allocation2] sm:$0x3] %vm120, %v1569
    %1572 = vrot.lane.b32.xlu0 %v952, 64
    %v1573 = vpop.permute.xlu0 %1572
    %1575 = vst.msk [vmem:[#allocation2] sm:$0x3] %vm122, %v1573
    %v1576 = vld [vmem:[#allocation2] sm:$0x3]
    %v1578 = vsel %vm128, %v1576, 0
    %1580 = vmatpush.msra.mxu0 0.0
    %1581 = vmatpush.msra.mxu0 0.0
    %1582 = vmatpush.msra.mxu0 0.0
    %1583 = vmatpush.msra.mxu0 0.0
    %1584 = vmatpush.msra.mxu0 0.0
    %1585 = vmatpush.msra.mxu0 0.0
    %1586 = vmatpush.msra.mxu0 0.0
    %1587 = vmatpush.msra.mxu0 0.0
    %1588 = vmatpush.msra.mxu0 %v51
    %1589 = vmatpush.msra.mxu0 %v50
    %1590 = vmatpush.msra.mxu0 %v49
    %1591 = vmatpush.msra.mxu0 %v48
    %1592 = vmatpush.msra.mxu0 %v47
    %1593 = vmatpush.msra.mxu0 %v46
    %1594 = vmatpush.msra.mxu0 %v45
    %1595 = vmatpush.msra.mxu0 %v44
    %1596 = vmatmul.f32.gmra.mxu0 %v1578
    %v1597 = vpop.f32.mrf.mxu0
    %v1598 = vadd.f32 %v126, %v1597
    %1599 = vdwg.mxu0
    %v1600 = vxor.u32 %v1598, 2147483648
    %v1601 = vmul.f32 %v1600, 1.442695
    %v1602 = vpow.pop %v1601
    %v1603 = vadd.f32 %v1602, 1.0
    %v1604 = vrcp.pop %v1603
    %v1605 = vmul.f32 %v1603, %v1604
    %v1606 = vsub.f32 1.0, %v1605
    %v1607 = vmul.f32 %v1604, %v1606
    %v1608 = vadd.f32 %v1604, %v1607
    %vm1609 = vweird.f32 %v1603
    %vm1610 = vweird.f32 %v1604
    %vm1611 = vmor %vm1609, %vm1610
    %v1612 = vsel %vm1611, %v1604, %v1608
    %v1613 = vand.u32 2147483647, %v1603
    %vm1614 = vcmp.eq.f32.partialorder %v1613, 8.507059e+37
    %v1615 = vand.u32 %v1603, 2147483648
    %v1616 = vor.u32 1.1754944e-38, %v1615
    %v1617 = vsel %vm1614, %v1616, %v1612
    %v1618 = vmul.f32 1.0, %v1617
    %v1619 = vtanh.pop %v1598
    %v1620 = vmul.f32 %v1618, %v946
    %1622 = vrot.lane.b32.xlu0 %v1619, 64
    %v1623 = vpop.permute.xlu0 %1622
    %v1625 = vmul.f32 %v1618, %v1623
    %1627 = vrot.lane.b32.xlu0 %v1625, 32
    %v1628 = vpop.permute.xlu0 %1627
    %v1630 = vadd.f32 %v1620, %v1628
    %v1631 = vtanh.pop %v1630
    %1633 = vrot.lane.b32.xlu0 %v1631, 64
    %v1634 = vpop.permute.xlu0 %1633
    %v1636 = vmul.f32 %v1618, %v1634
    %v1638 = vrot.slane %v1636, 1
    %v1639 = vperm.slane %v1636, 0
    %v1640 = vperm.slane %v1638, 0
    %v1643 = vmul.f32 %v1639, %v212
    %v1644 = vmul.f32 %v1639, %v214
    %v1645 = vmul.f32 %v1639, %v216
    %v1646 = vmul.f32 %v1639, %v218
    %v1647 = vmul.f32 %v1639, %v220
    %v1648 = vmul.f32 %v1639, %v222
    %v1649 = vmul.f32 %v1639, %v224
    %v1650 = vmul.f32 %v1639, %v226
    %v1651 = vmul.f32 %v1640, %v228
    %v1652 = vmul.f32 %v1640, %v230
    %v1653 = vmul.f32 %v1640, %v232
    %v1654 = vmul.f32 %v1640, %v234
    %v1655 = vmul.f32 %v1640, %v236
    %v1656 = vmul.f32 %v1640, %v238
    %v1657 = vmul.f32 %v1640, %v240
    %v1658 = vmul.f32 %v1640, %v242
    %1675 = vrot.lane.b32.xlu0 %v1643, 32
    %v1676 = vpop.permute.xlu0 %1675
    %1677 = vrot.lane.b32.xlu0 %v1644, 32
    %v1678 = vpop.permute.xlu0 %1677
    %1679 = vrot.lane.b32.xlu0 %v1645, 32
    %v1680 = vpop.permute.xlu0 %1679
    %1681 = vrot.lane.b32.xlu0 %v1646, 32
    %v1682 = vpop.permute.xlu0 %1681
    %1683 = vrot.lane.b32.xlu0 %v1647, 32
    %v1684 = vpop.permute.xlu0 %1683
    %1685 = vrot.lane.b32.xlu0 %v1648, 32
    %v1686 = vpop.permute.xlu0 %1685
    %1687 = vrot.lane.b32.xlu0 %v1649, 32
    %v1688 = vpop.permute.xlu0 %1687
    %1689 = vrot.lane.b32.xlu0 %v1650, 32
    %v1690 = vpop.permute.xlu0 %1689
    %1691 = vrot.lane.b32.xlu0 %v1651, 32
    %v1692 = vpop.permute.xlu0 %1691
    %1693 = vrot.lane.b32.xlu0 %v1652, 32
    %v1694 = vpop.permute.xlu0 %1693
    %1695 = vrot.lane.b32.xlu0 %v1653, 32
    %v1696 = vpop.permute.xlu0 %1695
    %1697 = vrot.lane.b32.xlu0 %v1654, 32
    %v1698 = vpop.permute.xlu0 %1697
    %1699 = vrot.lane.b32.xlu0 %v1655, 32
    %v1700 = vpop.permute.xlu0 %1699
    %1701 = vrot.lane.b32.xlu0 %v1656, 32
    %v1702 = vpop.permute.xlu0 %1701
    %1703 = vrot.lane.b32.xlu0 %v1657, 32
    %v1704 = vpop.permute.xlu0 %1703
    %1705 = vrot.lane.b32.xlu0 %v1658, 32
    %v1706 = vpop.permute.xlu0 %1705
    %v1723 = vsel %vm54, %v1676, 0.0
    %1724 = vadd.xlane.f32.xlu0 %v1723
    %v1725 = vpop.xlane.xlu0 %1724
    %v1726 = vsel %vm54, %v1678, 0.0
    %1727 = vadd.xlane.f32.xlu0 %v1726
    %v1728 = vpop.xlane.xlu0 %1727
    %v1729 = vsel %vm54, %v1680, 0.0
    %1730 = vadd.xlane.f32.xlu0 %v1729
    %v1731 = vpop.xlane.xlu0 %1730
    %v1732 = vsel %vm54, %v1682, 0.0
    %1733 = vadd.xlane.f32.xlu0 %v1732
    %v1734 = vpop.xlane.xlu0 %1733
    %v1735 = vsel %vm54, %v1684, 0.0
    %1736 = vadd.xlane.f32.xlu0 %v1735
    %v1737 = vpop.xlane.xlu0 %1736
    %v1738 = vsel %vm54, %v1686, 0.0
    %1739 = vadd.xlane.f32.xlu0 %v1738
    %v1740 = vpop.xlane.xlu0 %1739
    %v1741 = vsel %vm54, %v1688, 0.0
    %1742 = vadd.xlane.f32.xlu0 %v1741
    %v1743 = vpop.xlane.xlu0 %1742
    %v1744 = vsel %vm54, %v1690, 0.0
    %1745 = vadd.xlane.f32.xlu0 %v1744
    %v1746 = vpop.xlane.xlu0 %1745
    %v1747 = vsel %vm54, %v1692, 0.0
    %1748 = vadd.xlane.f32.xlu0 %v1747
    %v1749 = vpop.xlane.xlu0 %1748
    %v1750 = vsel %vm54, %v1694, 0.0
    %1751 = vadd.xlane.f32.xlu0 %v1750
    %v1752 = vpop.xlane.xlu0 %1751
    %v1753 = vsel %vm54, %v1696, 0.0
    %1754 = vadd.xlane.f32.xlu0 %v1753
    %v1755 = vpop.xlane.xlu0 %1754
    %v1756 = vsel %vm54, %v1698, 0.0
    %1757 = vadd.xlane.f32.xlu0 %v1756
    %v1758 = vpop.xlane.xlu0 %1757
    %v1759 = vsel %vm54, %v1700, 0.0
    %1760 = vadd.xlane.f32.xlu0 %v1759
    %v1761 = vpop.xlane.xlu0 %1760
    %v1762 = vsel %vm54, %v1702, 0.0
    %1763 = vadd.xlane.f32.xlu0 %v1762
    %v1764 = vpop.xlane.xlu0 %1763
    %v1765 = vsel %vm54, %v1704, 0.0
    %1766 = vadd.xlane.f32.xlu0 %v1765
    %v1767 = vpop.xlane.xlu0 %1766
    %v1768 = vsel %vm54, %v1706, 0.0
    %1769 = vadd.xlane.f32.xlu0 %v1768
    %v1770 = vpop.xlane.xlu0 %1769
    %v1771 = vxor.u32 %v1725, 2147483648
    %v1772 = vxor.u32 %v1728, 2147483648
    %v1773 = vxor.u32 %v1731, 2147483648
    %v1774 = vxor.u32 %v1734, 2147483648
    %v1775 = vxor.u32 %v1737, 2147483648
    %v1776 = vxor.u32 %v1740, 2147483648
    %v1777 = vxor.u32 %v1743, 2147483648
    %v1778 = vxor.u32 %v1746, 2147483648
    %v1779 = vxor.u32 %v1749, 2147483648
    %v1780 = vxor.u32 %v1752, 2147483648
    %v1781 = vxor.u32 %v1755, 2147483648
    %v1782 = vxor.u32 %v1758, 2147483648
    %v1783 = vxor.u32 %v1761, 2147483648
    %v1784 = vxor.u32 %v1764, 2147483648
    %v1785 = vxor.u32 %v1767, 2147483648
    %v1786 = vxor.u32 %v1770, 2147483648
    %v1787 = vmul.f32 %v1771, 1.442695
    %v1788 = vpow.pop %v1787
    %v1789 = vmul.f32 %v1772, 1.442695
    %v1790 = vpow.pop %v1789
    %v1791 = vmul.f32 %v1773, 1.442695
    %v1792 = vpow.pop %v1791
    %v1793 = vmul.f32 %v1774, 1.442695
    %v1794 = vpow.pop %v1793
    %v1795 = vmul.f32 %v1775, 1.442695
    %v1796 = vpow.pop %v1795
    %v1797 = vmul.f32 %v1776, 1.442695
    %v1798 = vpow.pop %v1797
    %v1799 = vmul.f32 %v1777, 1.442695
    %v1800 = vpow.pop %v1799
    %v1801 = vmul.f32 %v1778, 1.442695
    %v1802 = vpow.pop %v1801
    %v1803 = vmul.f32 %v1779, 1.442695
    %v1804 = vpow.pop %v1803
    %v1805 = vmul.f32 %v1780, 1.442695
    %v1806 = vpow.pop %v1805
    %v1807 = vmul.f32 %v1781, 1.442695
    %v1808 = vpow.pop %v1807
    %v1809 = vmul.f32 %v1782, 1.442695
    %v1810 = vpow.pop %v1809
    %v1811 = vmul.f32 %v1783, 1.442695
    %v1812 = vpow.pop %v1811
    %v1813 = vmul.f32 %v1784, 1.442695
    %v1814 = vpow.pop %v1813
    %v1815 = vmul.f32 %v1785, 1.442695
    %v1816 = vpow.pop %v1815
    %v1817 = vmul.f32 %v1786, 1.442695
    %v1818 = vpow.pop %v1817
    %v1819 = vadd.f32 %v1788, 1.0
    %v1820 = vadd.f32 %v1790, 1.0
    %v1821 = vadd.f32 %v1792, 1.0
    %v1822 = vadd.f32 %v1794, 1.0
    %v1823 = vadd.f32 %v1796, 1.0
    %v1824 = vadd.f32 %v1798, 1.0
    %v1825 = vadd.f32 %v1800, 1.0
    %v1826 = vadd.f32 %v1802, 1.0
    %v1827 = vadd.f32 %v1804, 1.0
    %v1828 = vadd.f32 %v1806, 1.0
    %v1829 = vadd.f32 %v1808, 1.0
    %v1830 = vadd.f32 %v1810, 1.0
    %v1831 = vadd.f32 %v1812, 1.0
    %v1832 = vadd.f32 %v1814, 1.0
    %v1833 = vadd.f32 %v1816, 1.0
    %v1834 = vadd.f32 %v1818, 1.0
    %v1835 = vrcp.pop %v1819
    %v1836 = vmul.f32 %v1819, %v1835
    %v1837 = vsub.f32 1.0, %v1836
    %v1838 = vmul.f32 %v1835, %v1837
    %v1839 = vadd.f32 %v1835, %v1838
    %vm1840 = vweird.f32 %v1819
    %vm1841 = vweird.f32 %v1835
    %vm1842 = vmor %vm1840, %vm1841
    %v1843 = vsel %vm1842, %v1835, %v1839
    %v1844 = vand.u32 2147483647, %v1819
    %vm1845 = vcmp.eq.f32.partialorder %v1844, 8.507059e+37
    %v1846 = vand.u32 %v1819, 2147483648
    %v1847 = vor.u32 1.1754944e-38, %v1846
    %v1848 = vsel %vm1845, %v1847, %v1843
    %v1849 = vmul.f32 1.0, %v1848
    %v1850 = vrcp.pop %v1820
    %v1851 = vmul.f32 %v1820, %v1850
    %v1852 = vsub.f32 1.0, %v1851
    %v1853 = vmul.f32 %v1850, %v1852
    %v1854 = vadd.f32 %v1850, %v1853
    %vm1855 = vweird.f32 %v1820
    %vm1856 = vweird.f32 %v1850
    %vm1857 = vmor %vm1855, %vm1856
    %v1858 = vsel %vm1857, %v1850, %v1854
    %v1859 = vand.u32 2147483647, %v1820
    %vm1860 = vcmp.eq.f32.partialorder %v1859, 8.507059e+37
    %v1861 = vand.u32 %v1820, 2147483648
    %v1862 = vor.u32 1.1754944e-38, %v1861
    %v1863 = vsel %vm1860, %v1862, %v1858
    %v1864 = vmul.f32 1.0, %v1863
    %v1865 = vrcp.pop %v1821
    %v1866 = vmul.f32 %v1821, %v1865
    %v1867 = vsub.f32 1.0, %v1866
    %v1868 = vmul.f32 %v1865, %v1867
    %v1869 = vadd.f32 %v1865, %v1868
    %vm1870 = vweird.f32 %v1821
    %vm1871 = vweird.f32 %v1865
    %vm1872 = vmor %vm1870, %vm1871
    %v1873 = vsel %vm1872, %v1865, %v1869
    %v1874 = vand.u32 2147483647, %v1821
    %vm1875 = vcmp.eq.f32.partialorder %v1874, 8.507059e+37
    %v1876 = vand.u32 %v1821, 2147483648
    %v1877 = vor.u32 1.1754944e-38, %v1876
    %v1878 = vsel %vm1875, %v1877, %v1873
    %v1879 = vmul.f32 1.0, %v1878
    %v1880 = vrcp.pop %v1822
    %v1881 = vmul.f32 %v1822, %v1880
    %v1882 = vsub.f32 1.0, %v1881
    %v1883 = vmul.f32 %v1880, %v1882
    %v1884 = vadd.f32 %v1880, %v1883
    %vm1885 = vweird.f32 %v1822
    %vm1886 = vweird.f32 %v1880
    %vm1887 = vmor %vm1885, %vm1886
    %v1888 = vsel %vm1887, %v1880, %v1884
    %v1889 = vand.u32 2147483647, %v1822
    %vm1890 = vcmp.eq.f32.partialorder %v1889, 8.507059e+37
    %v1891 = vand.u32 %v1822, 2147483648
    %v1892 = vor.u32 1.1754944e-38, %v1891
    %v1893 = vsel %vm1890, %v1892, %v1888
    %v1894 = vmul.f32 1.0, %v1893
    %v1895 = vrcp.pop %v1823
    %v1896 = vmul.f32 %v1823, %v1895
    %v1897 = vsub.f32 1.0, %v1896
    %v1898 = vmul.f32 %v1895, %v1897
    %v1899 = vadd.f32 %v1895, %v1898
    %vm1900 = vweird.f32 %v1823
    %vm1901 = vweird.f32 %v1895
    %vm1902 = vmor %vm1900, %vm1901
    %v1903 = vsel %vm1902, %v1895, %v1899
    %v1904 = vand.u32 2147483647, %v1823
    %vm1905 = vcmp.eq.f32.partialorder %v1904, 8.507059e+37
    %v1906 = vand.u32 %v1823, 2147483648
    %v1907 = vor.u32 1.1754944e-38, %v1906
    %v1908 = vsel %vm1905, %v1907, %v1903
    %v1909 = vmul.f32 1.0, %v1908
    %v1910 = vrcp.pop %v1824
    %v1911 = vmul.f32 %v1824, %v1910
    %v1912 = vsub.f32 1.0, %v1911
    %v1913 = vmul.f32 %v1910, %v1912
    %v1914 = vadd.f32 %v1910, %v1913
    %vm1915 = vweird.f32 %v1824
    %vm1916 = vweird.f32 %v1910
    %vm1917 = vmor %vm1915, %vm1916
    %v1918 = vsel %vm1917, %v1910, %v1914
    %v1919 = vand.u32 2147483647, %v1824
    %vm1920 = vcmp.eq.f32.partialorder %v1919, 8.507059e+37
    %v1921 = vand.u32 %v1824, 2147483648
    %v1922 = vor.u32 1.1754944e-38, %v1921
    %v1923 = vsel %vm1920, %v1922, %v1918
    %v1924 = vmul.f32 1.0, %v1923
    %v1925 = vrcp.pop %v1825
    %v1926 = vmul.f32 %v1825, %v1925
    %v1927 = vsub.f32 1.0, %v1926
    %v1928 = vmul.f32 %v1925, %v1927
    %v1929 = vadd.f32 %v1925, %v1928
    %vm1930 = vweird.f32 %v1825
    %vm1931 = vweird.f32 %v1925
    %vm1932 = vmor %vm1930, %vm1931
    %v1933 = vsel %vm1932, %v1925, %v1929
    %v1934 = vand.u32 2147483647, %v1825
    %vm1935 = vcmp.eq.f32.partialorder %v1934, 8.507059e+37
    %v1936 = vand.u32 %v1825, 2147483648
    %v1937 = vor.u32 1.1754944e-38, %v1936
    %v1938 = vsel %vm1935, %v1937, %v1933
    %v1939 = vmul.f32 1.0, %v1938
    %v1940 = vrcp.pop %v1826
    %v1941 = vmul.f32 %v1826, %v1940
    %v1942 = vsub.f32 1.0, %v1941
    %v1943 = vmul.f32 %v1940, %v1942
    %v1944 = vadd.f32 %v1940, %v1943
    %vm1945 = vweird.f32 %v1826
    %vm1946 = vweird.f32 %v1940
    %vm1947 = vmor %vm1945, %vm1946
    %v1948 = vsel %vm1947, %v1940, %v1944
    %v1949 = vand.u32 2147483647, %v1826
    %vm1950 = vcmp.eq.f32.partialorder %v1949, 8.507059e+37
    %v1951 = vand.u32 %v1826, 2147483648
    %v1952 = vor.u32 1.1754944e-38, %v1951
    %v1953 = vsel %vm1950, %v1952, %v1948
    %v1954 = vmul.f32 1.0, %v1953
    %v1955 = vrcp.pop %v1827
    %v1956 = vmul.f32 %v1827, %v1955
    %v1957 = vsub.f32 1.0, %v1956
    %v1958 = vmul.f32 %v1955, %v1957
    %v1959 = vadd.f32 %v1955, %v1958
    %vm1960 = vweird.f32 %v1827
    %vm1961 = vweird.f32 %v1955
    %vm1962 = vmor %vm1960, %vm1961
    %v1963 = vsel %vm1962, %v1955, %v1959
    %v1964 = vand.u32 2147483647, %v1827
    %vm1965 = vcmp.eq.f32.partialorder %v1964, 8.507059e+37
    %v1966 = vand.u32 %v1827, 2147483648
    %v1967 = vor.u32 1.1754944e-38, %v1966
    %v1968 = vsel %vm1965, %v1967, %v1963
    %v1969 = vmul.f32 1.0, %v1968
    %v1970 = vrcp.pop %v1828
    %v1971 = vmul.f32 %v1828, %v1970
    %v1972 = vsub.f32 1.0, %v1971
    %v1973 = vmul.f32 %v1970, %v1972
    %v1974 = vadd.f32 %v1970, %v1973
    %vm1975 = vweird.f32 %v1828
    %vm1976 = vweird.f32 %v1970
    %vm1977 = vmor %vm1975, %vm1976
    %v1978 = vsel %vm1977, %v1970, %v1974
    %v1979 = vand.u32 2147483647, %v1828
    %vm1980 = vcmp.eq.f32.partialorder %v1979, 8.507059e+37
    %v1981 = vand.u32 %v1828, 2147483648
    %v1982 = vor.u32 1.1754944e-38, %v1981
    %v1983 = vsel %vm1980, %v1982, %v1978
    %v1984 = vmul.f32 1.0, %v1983
    %v1985 = vrcp.pop %v1829
    %v1986 = vmul.f32 %v1829, %v1985
    %v1987 = vsub.f32 1.0, %v1986
    %v1988 = vmul.f32 %v1985, %v1987
    %v1989 = vadd.f32 %v1985, %v1988
    %vm1990 = vweird.f32 %v1829
    %vm1991 = vweird.f32 %v1985
    %vm1992 = vmor %vm1990, %vm1991
    %v1993 = vsel %vm1992, %v1985, %v1989
    %v1994 = vand.u32 2147483647, %v1829
    %vm1995 = vcmp.eq.f32.partialorder %v1994, 8.507059e+37
    %v1996 = vand.u32 %v1829, 2147483648
    %v1997 = vor.u32 1.1754944e-38, %v1996
    %v1998 = vsel %vm1995, %v1997, %v1993
    %v1999 = vmul.f32 1.0, %v1998
    %v2000 = vrcp.pop %v1830
    %v2001 = vmul.f32 %v1830, %v2000
    %v2002 = vsub.f32 1.0, %v2001
    %v2003 = vmul.f32 %v2000, %v2002
    %v2004 = vadd.f32 %v2000, %v2003
    %vm2005 = vweird.f32 %v1830
    %vm2006 = vweird.f32 %v2000
    %vm2007 = vmor %vm2005, %vm2006
    %v2008 = vsel %vm2007, %v2000, %v2004
    %v2009 = vand.u32 2147483647, %v1830
    %vm2010 = vcmp.eq.f32.partialorder %v2009, 8.507059e+37
    %v2011 = vand.u32 %v1830, 2147483648
    %v2012 = vor.u32 1.1754944e-38, %v2011
    %v2013 = vsel %vm2010, %v2012, %v2008
    %v2014 = vmul.f32 1.0, %v2013
    %v2015 = vrcp.pop %v1831
    %v2016 = vmul.f32 %v1831, %v2015
    %v2017 = vsub.f32 1.0, %v2016
    %v2018 = vmul.f32 %v2015, %v2017
    %v2019 = vadd.f32 %v2015, %v2018
    %vm2020 = vweird.f32 %v1831
    %vm2021 = vweird.f32 %v2015
    %vm2022 = vmor %vm2020, %vm2021
    %v2023 = vsel %vm2022, %v2015, %v2019
    %v2024 = vand.u32 2147483647, %v1831
    %vm2025 = vcmp.eq.f32.partialorder %v2024, 8.507059e+37
    %v2026 = vand.u32 %v1831, 2147483648
    %v2027 = vor.u32 1.1754944e-38, %v2026
    %v2028 = vsel %vm2025, %v2027, %v2023
    %v2029 = vmul.f32 1.0, %v2028
    %v2030 = vrcp.pop %v1832
    %v2031 = vmul.f32 %v1832, %v2030
    %v2032 = vsub.f32 1.0, %v2031
    %v2033 = vmul.f32 %v2030, %v2032
    %v2034 = vadd.f32 %v2030, %v2033
    %vm2035 = vweird.f32 %v1832
    %vm2036 = vweird.f32 %v2030
    %vm2037 = vmor %vm2035, %vm2036
    %v2038 = vsel %vm2037, %v2030, %v2034
    %v2039 = vand.u32 2147483647, %v1832
    %vm2040 = vcmp.eq.f32.partialorder %v2039, 8.507059e+37
    %v2041 = vand.u32 %v1832, 2147483648
    %v2042 = vor.u32 1.1754944e-38, %v2041
    %v2043 = vsel %vm2040, %v2042, %v2038
    %v2044 = vmul.f32 1.0, %v2043
    %v2045 = vrcp.pop %v1833
    %v2046 = vmul.f32 %v1833, %v2045
    %v2047 = vsub.f32 1.0, %v2046
    %v2048 = vmul.f32 %v2045, %v2047
    %v2049 = vadd.f32 %v2045, %v2048
    %vm2050 = vweird.f32 %v1833
    %vm2051 = vweird.f32 %v2045
    %vm2052 = vmor %vm2050, %vm2051
    %v2053 = vsel %vm2052, %v2045, %v2049
    %v2054 = vand.u32 2147483647, %v1833
    %vm2055 = vcmp.eq.f32.partialorder %v2054, 8.507059e+37
    %v2056 = vand.u32 %v1833, 2147483648
    %v2057 = vor.u32 1.1754944e-38, %v2056
    %v2058 = vsel %vm2055, %v2057, %v2053
    %v2059 = vmul.f32 1.0, %v2058
    %v2060 = vrcp.pop %v1834
    %v2061 = vmul.f32 %v1834, %v2060
    %v2062 = vsub.f32 1.0, %v2061
    %v2063 = vmul.f32 %v2060, %v2062
    %v2064 = vadd.f32 %v2060, %v2063
    %vm2065 = vweird.f32 %v1834
    %vm2066 = vweird.f32 %v2060
    %vm2067 = vmor %vm2065, %vm2066
    %v2068 = vsel %vm2067, %v2060, %v2064
    %v2069 = vand.u32 2147483647, %v1834
    %vm2070 = vcmp.eq.f32.partialorder %v2069, 8.507059e+37
    %v2071 = vand.u32 %v1834, 2147483648
    %v2072 = vor.u32 1.1754944e-38, %v2071
    %v2073 = vsel %vm2070, %v2072, %v2068
    %v2074 = vmul.f32 1.0, %v2073
    %v2075 = vmul.f32 %v1849, %v24
    %v2076 = vmul.f32 %v1864, %v25
    %v2077 = vmul.f32 %v1879, %v26
    %v2078 = vmul.f32 %v1894, %v27
    %v2079 = vmul.f32 %v1909, %v28
    %v2080 = vmul.f32 %v1924, %v29
    %v2081 = vmul.f32 %v1939, %v30
    %v2082 = vmul.f32 %v1954, %v31
    %v2083 = vmul.f32 %v1969, %v32
    %v2084 = vmul.f32 %v1984, %v33
    %v2085 = vmul.f32 %v1999, %v34
    %v2086 = vmul.f32 %v2014, %v35
    %v2087 = vmul.f32 %v2029, %v36
    %v2088 = vmul.f32 %v2044, %v37
    %v2089 = vmul.f32 %v2059, %v38
    %v2090 = vmul.f32 %v2074, %v39
    %v2091 = vsel %vm54, %v2075, 0.0
    %v2092 = vsel %vm54, %v2076, 0.0
    %v2093 = vadd.f32 %v2091, %v2092
    %v2094 = vsel %vm54, %v2077, 0.0
    %v2095 = vadd.f32 %v2093, %v2094
    %v2096 = vsel %vm54, %v2078, 0.0
    %v2097 = vadd.f32 %v2095, %v2096
    %v2098 = vsel %vm54, %v2079, 0.0
    %v2099 = vadd.f32 %v2097, %v2098
    %v2100 = vsel %vm54, %v2080, 0.0
    %v2101 = vadd.f32 %v2099, %v2100
    %v2102 = vsel %vm54, %v2081, 0.0
    %v2103 = vadd.f32 %v2101, %v2102
    %v2104 = vsel %vm54, %v2082, 0.0
    %v2105 = vadd.f32 %v2103, %v2104
    %v2106 = vrot.slane %v2105, 4
    %v2107 = vadd.f32 %v2105, %v2106
    %v2108 = vrot.slane %v2107, 2
    %v2109 = vadd.f32 %v2107, %v2108
    %v2110 = vrot.slane %v2109, 1
    %v2111 = vadd.f32 %v2109, %v2110
    %v2112 = vsel %vm54, %v2083, 0.0
    %v2113 = vsel %vm54, %v2084, 0.0
    %v2114 = vadd.f32 %v2112, %v2113
    %v2115 = vsel %vm54, %v2085, 0.0
    %v2116 = vadd.f32 %v2114, %v2115
    %v2117 = vsel %vm54, %v2086, 0.0
    %v2118 = vadd.f32 %v2116, %v2117
    %v2119 = vsel %vm54, %v2087, 0.0
    %v2120 = vadd.f32 %v2118, %v2119
    %v2121 = vsel %vm54, %v2088, 0.0
    %v2122 = vadd.f32 %v2120, %v2121
    %v2123 = vsel %vm54, %v2089, 0.0
    %v2124 = vadd.f32 %v2122, %v2123
    %v2125 = vsel %vm54, %v2090, 0.0
    %v2126 = vadd.f32 %v2124, %v2125
    %v2127 = vrot.slane %v2126, 4
    %v2128 = vadd.f32 %v2126, %v2127
    %v2129 = vrot.slane %v2128, 2
    %v2130 = vadd.f32 %v2128, %v2129
    %v2131 = vrot.slane %v2130, 1
    %v2132 = vadd.f32 %v2130, %v2131
    %v2135 = vsel %vm751, %v2132, %v2111
    %s2137 = scalar_lea.vmem [#allocation3], 4
    %2138 = vst.msk [vmem:[%s2137] sm:$0x3] %vm120, %v2135
    %v2155 = vperm.slane %v1849, %v772
    %v2156 = vperm.slane %v1864, %v774
    %v2157 = vsel %vm776, %v2156, %v2155
    %v2158 = vperm.slane %v1879, %v778
    %v2159 = vsel %vm780, %v2158, %v2157
    %v2160 = vperm.slane %v1894, %v782
    %v2161 = vsel %vm784, %v2160, %v2159
    %v2162 = vperm.slane %v1909, %v786
    %v2163 = vsel %vm788, %v2162, %v2161
    %v2164 = vperm.slane %v1924, %v790
    %v2165 = vsel %vm792, %v2164, %v2163
    %v2166 = vperm.slane %v1939, %v794
    %v2167 = vsel %vm796, %v2166, %v2165
    %v2168 = vperm.slane %v1954, %v798
    %v2169 = vsel %vm800, %v2168, %v2167
    %v2170 = vperm.slane %v1969, %v772
    %v2171 = vperm.slane %v1984, %v774
    %v2172 = vsel %vm776, %v2171, %v2170
    %v2173 = vperm.slane %v1999, %v778
    %v2174 = vsel %vm780, %v2173, %v2172
    %v2175 = vperm.slane %v2014, %v782
    %v2176 = vsel %vm784, %v2175, %v2174
    %v2177 = vperm.slane %v2029, %v786
    %v2178 = vsel %vm788, %v2177, %v2176
    %v2179 = vperm.slane %v2044, %v790
    %v2180 = vsel %vm792, %v2179, %v2178
    %v2181 = vperm.slane %v2059, %v794
    %v2182 = vsel %vm796, %v2181, %v2180
    %v2183 = vperm.slane %v2074, %v798
    %v2184 = vsel %vm800, %v2183, %v2182
    %v2185 = vsel %vm751, %v2184, %v2169
    %s2187 = scalar_lea.vmem [#allocation5], 4
    %2188 = vst.msk [vmem:[%s2187] sm:$0x3] %vm819, %v2185
    %s2189 = scalar_lea.vmem %s0, 6
    %v2190 = vld [vmem:[%s2189] sm:$0x3]
    %v2191 = vsel %vm54, %v1569, 0
    %2193 = vmatpush.msra.mxu0 0.0
    %2194 = vmatpush.msra.mxu0 0.0
    %2195 = vmatpush.msra.mxu0 0.0
    %2196 = vmatpush.msra.mxu0 0.0
    %2197 = vmatpush.msra.mxu0 0.0
    %2198 = vmatpush.msra.mxu0 0.0
    %2199 = vmatpush.msra.mxu0 0.0
    %2200 = vmatpush.msra.mxu0 0.0
    %2201 = vmatpush.msra.mxu0 0.0
    %2202 = vmatpush.msra.mxu0 0.0
    %2203 = vmatpush.msra.mxu0 0.0
    %2204 = vmatpush.msra.mxu0 0.0
    %2205 = vmatpush.msra.mxu0 %v43
    %2206 = vmatpush.msra.mxu0 %v42
    %2207 = vmatpush.msra.mxu0 %v41
    %2208 = vmatpush.msra.mxu0 %v40
    %2209 = vmatmul.f32.gmra.mxu0 %v2191
    %v2210 = vpop.f32.mrf.mxu0
    %v2211 = vadd.f32 0.0, %v2210
    %2212 = vdwg.mxu0
    %v2213 = vadd.f32 %v2190, %v2211
    %v2214 = vxor.u32 %v2213, 2147483648
    %v2215 = vmul.f32 %v2214, 1.442695
    %v2216 = vpow.pop %v2215
    %v2217 = vadd.f32 %v2216, 1.0
    %v2218 = vrcp.pop %v2217
    %v2219 = vmul.f32 %v2217, %v2218
    %v2220 = vsub.f32 1.0, %v2219
    %v2221 = vmul.f32 %v2218, %v2220
    %v2222 = vadd.f32 %v2218, %v2221
    %vm2223 = vweird.f32 %v2217
    %vm2224 = vweird.f32 %v2218
    %vm2225 = vmor %vm2223, %vm2224
    %v2226 = vsel %vm2225, %v2218, %v2222
    %v2227 = vand.u32 2147483647, %v2217
    %vm2228 = vcmp.eq.f32.partialorder %v2227, 8.507059e+37
    %v2229 = vand.u32 %v2217, 2147483648
    %v2230 = vor.u32 1.1754944e-38, %v2229
    %v2231 = vsel %vm2228, %v2230, %v2226
    %v2232 = vmul.f32 1.0, %v2231
    %v2233 = vtanh.pop %v2213
    %v2234 = vmul.f32 %v2232, %v1560
    %2236 = vrot.lane.b32.xlu0 %v2233, 64
    %v2237 = vpop.permute.xlu0 %2236
    %v2239 = vmul.f32 %v2232, %v2237
    %2241 = vrot.lane.b32.xlu0 %v2239, 32
    %v2242 = vpop.permute.xlu0 %2241
    %v2244 = vadd.f32 %v2234, %v2242
    %v2245 = vtanh.pop %v2244
    %2247 = vrot.lane.b32.xlu0 %v2245, 64
    %v2248 = vpop.permute.xlu0 %2247
    %v2250 = vmul.f32 %v2232, %v2248
    %2252 = vrot.lane.b32.xlu0 %v2250, 32
    %v2253 = vpop.permute.xlu0 %2252
    %2255 = vst.msk [vmem:[#allocation2] sm:$0x3] %vm120, %v2253
    %2256 = vrot.lane.b32.xlu0 %v1636, 64
    %v2257 = vpop.permute.xlu0 %2256
    %2259 = vst.msk [vmem:[#allocation2] sm:$0x3] %vm122, %v2257
    %v2260 = vld [vmem:[#allocation2] sm:$0x3]
    %v2262 = vsel %vm128, %v2260, 0
    %2264 = vmatpush.msra.mxu0 0.0
    %2265 = vmatpush.msra.mxu0 0.0
    %2266 = vmatpush.msra.mxu0 0.0
    %2267 = vmatpush.msra.mxu0 0.0
    %2268 = vmatpush.msra.mxu0 0.0
    %2269 = vmatpush.msra.mxu0 0.0
    %2270 = vmatpush.msra.mxu0 0.0
    %2271 = vmatpush.msra.mxu0 0.0
    %2272 = vmatpush.msra.mxu0 %v51
    %2273 = vmatpush.msra.mxu0 %v50
    %2274 = vmatpush.msra.mxu0 %v49
    %2275 = vmatpush.msra.mxu0 %v48
    %2276 = vmatpush.msra.mxu0 %v47
    %2277 = vmatpush.msra.mxu0 %v46
    %2278 = vmatpush.msra.mxu0 %v45
    %2279 = vmatpush.msra.mxu0 %v44
    %2280 = vmatmul.f32.gmra.mxu0 %v2262
    %v2281 = vpop.f32.mrf.mxu0
    %v2282 = vadd.f32 %v126, %v2281
    %2283 = vdwg.mxu0
    %v2284 = vxor.u32 %v2282, 2147483648
    %v2285 = vmul.f32 %v2284, 1.442695
    %v2286 = vpow.pop %v2285
    %v2287 = vadd.f32 %v2286, 1.0
    %v2288 = vrcp.pop %v2287
    %v2289 = vmul.f32 %v2287, %v2288
    %v2290 = vsub.f32 1.0, %v2289
    %v2291 = vmul.f32 %v2288, %v2290
    %v2292 = vadd.f32 %v2288, %v2291
    %vm2293 = vweird.f32 %v2287
    %vm2294 = vweird.f32 %v2288
    %vm2295 = vmor %vm2293, %vm2294
    %v2296 = vsel %vm2295, %v2288, %v2292
    %v2297 = vand.u32 2147483647, %v2287
    %vm2298 = vcmp.eq.f32.partialorder %v2297, 8.507059e+37
    %v2299 = vand.u32 %v2287, 2147483648
    %v2300 = vor.u32 1.1754944e-38, %v2299
    %v2301 = vsel %vm2298, %v2300, %v2296
    %v2302 = vmul.f32 1.0, %v2301
    %v2303 = vtanh.pop %v2282
    %v2304 = vmul.f32 %v2302, %v1630
    %2306 = vrot.lane.b32.xlu0 %v2303, 64
    %v2307 = vpop.permute.xlu0 %2306
    %v2309 = vmul.f32 %v2302, %v2307
    %2311 = vrot.lane.b32.xlu0 %v2309, 32
    %v2312 = vpop.permute.xlu0 %2311
    %v2314 = vadd.f32 %v2304, %v2312
    %v2315 = vtanh.pop %v2314
    %2317 = vrot.lane.b32.xlu0 %v2315, 64
    %v2318 = vpop.permute.xlu0 %2317
    %v2320 = vmul.f32 %v2302, %v2318
    %v2322 = vrot.slane %v2320, 1
    %v2323 = vperm.slane %v2320, 0
    %v2324 = vperm.slane %v2322, 0
    %v2327 = vmul.f32 %v2323, %v212
    %v2328 = vmul.f32 %v2323, %v214
    %v2329 = vmul.f32 %v2323, %v216
    %v2330 = vmul.f32 %v2323, %v218
    %v2331 = vmul.f32 %v2323, %v220
    %v2332 = vmul.f32 %v2323, %v222
    %v2333 = vmul.f32 %v2323, %v224
    %v2334 = vmul.f32 %v2323, %v226
    %v2335 = vmul.f32 %v2324, %v228
    %v2336 = vmul.f32 %v2324, %v230
    %v2337 = vmul.f32 %v2324, %v232
    %v2338 = vmul.f32 %v2324, %v234
    %v2339 = vmul.f32 %v2324, %v236
    %v2340 = vmul.f32 %v2324, %v238
    %v2341 = vmul.f32 %v2324, %v240
    %v2342 = vmul.f32 %v2324, %v242
    %2359 = vrot.lane.b32.xlu0 %v2327, 32
    %v2360 = vpop.permute.xlu0 %2359
    %2361 = vrot.lane.b32.xlu0 %v2328, 32
    %v2362 = vpop.permute.xlu0 %2361
    %2363 = vrot.lane.b32.xlu0 %v2329, 32
    %v2364 = vpop.permute.xlu0 %2363
    %2365 = vrot.lane.b32.xlu0 %v2330, 32
    %v2366 = vpop.permute.xlu0 %2365
    %2367 = vrot.lane.b32.xlu0 %v2331, 32
    %v2368 = vpop.permute.xlu0 %2367
    %2369 = vrot.lane.b32.xlu0 %v2332, 32
    %v2370 = vpop.permute.xlu0 %2369
    %2371 = vrot.lane.b32.xlu0 %v2333, 32
    %v2372 = vpop.permute.xlu0 %2371
    %2373 = vrot.lane.b32.xlu0 %v2334, 32
    %v2374 = vpop.permute.xlu0 %2373
    %2375 = vrot.lane.b32.xlu0 %v2335, 32
    %v2376 = vpop.permute.xlu0 %2375
    %2377 = vrot.lane.b32.xlu0 %v2336, 32
    %v2378 = vpop.permute.xlu0 %2377
    %2379 = vrot.lane.b32.xlu0 %v2337, 32
    %v2380 = vpop.permute.xlu0 %2379
    %2381 = vrot.lane.b32.xlu0 %v2338, 32
    %v2382 = vpop.permute.xlu0 %2381
    %2383 = vrot.lane.b32.xlu0 %v2339, 32
    %v2384 = vpop.permute.xlu0 %2383
    %2385 = vrot.lane.b32.xlu0 %v2340, 32
    %v2386 = vpop.permute.xlu0 %2385
    %2387 = vrot.lane.b32.xlu0 %v2341, 32
    %v2388 = vpop.permute.xlu0 %2387
    %2389 = vrot.lane.b32.xlu0 %v2342, 32
    %v2390 = vpop.permute.xlu0 %2389
    %v2407 = vsel %vm54, %v2360, 0.0
    %2408 = vadd.xlane.f32.xlu0 %v2407
    %v2409 = vpop.xlane.xlu0 %2408
    %v2410 = vsel %vm54, %v2362, 0.0
    %2411 = vadd.xlane.f32.xlu0 %v2410
    %v2412 = vpop.xlane.xlu0 %2411
    %v2413 = vsel %vm54, %v2364, 0.0
    %2414 = vadd.xlane.f32.xlu0 %v2413
    %v2415 = vpop.xlane.xlu0 %2414
    %v2416 = vsel %vm54, %v2366, 0.0
    %2417 = vadd.xlane.f32.xlu0 %v2416
    %v2418 = vpop.xlane.xlu0 %2417
    %v2419 = vsel %vm54, %v2368, 0.0
    %2420 = vadd.xlane.f32.xlu0 %v2419
    %v2421 = vpop.xlane.xlu0 %2420
    %v2422 = vsel %vm54, %v2370, 0.0
    %2423 = vadd.xlane.f32.xlu0 %v2422
    %v2424 = vpop.xlane.xlu0 %2423
    %v2425 = vsel %vm54, %v2372, 0.0
    %2426 = vadd.xlane.f32.xlu0 %v2425
    %v2427 = vpop.xlane.xlu0 %2426
    %v2428 = vsel %vm54, %v2374, 0.0
    %2429 = vadd.xlane.f32.xlu0 %v2428
    %v2430 = vpop.xlane.xlu0 %2429
    %v2431 = vsel %vm54, %v2376, 0.0
    %2432 = vadd.xlane.f32.xlu0 %v2431
    %v2433 = vpop.xlane.xlu0 %2432
    %v2434 = vsel %vm54, %v2378, 0.0
    %2435 = vadd.xlane.f32.xlu0 %v2434
    %v2436 = vpop.xlane.xlu0 %2435
    %v2437 = vsel %vm54, %v2380, 0.0
    %2438 = vadd.xlane.f32.xlu0 %v2437
    %v2439 = vpop.xlane.xlu0 %2438
    %v2440 = vsel %vm54, %v2382, 0.0
    %2441 = vadd.xlane.f32.xlu0 %v2440
    %v2442 = vpop.xlane.xlu0 %2441
    %v2443 = vsel %vm54, %v2384, 0.0
    %2444 = vadd.xlane.f32.xlu0 %v2443
    %v2445 = vpop.xlane.xlu0 %2444
    %v2446 = vsel %vm54, %v2386, 0.0
    %2447 = vadd.xlane.f32.xlu0 %v2446
    %v2448 = vpop.xlane.xlu0 %2447
    %v2449 = vsel %vm54, %v2388, 0.0
    %2450 = vadd.xlane.f32.xlu0 %v2449
    %v2451 = vpop.xlane.xlu0 %2450
    %v2452 = vsel %vm54, %v2390, 0.0
    %2453 = vadd.xlane.f32.xlu0 %v2452
    %v2454 = vpop.xlane.xlu0 %2453
    %v2455 = vxor.u32 %v2409, 2147483648
    %v2456 = vxor.u32 %v2412, 2147483648
    %v2457 = vxor.u32 %v2415, 2147483648
    %v2458 = vxor.u32 %v2418, 2147483648
    %v2459 = vxor.u32 %v2421, 2147483648
    %v2460 = vxor.u32 %v2424, 2147483648
    %v2461 = vxor.u32 %v2427, 2147483648
    %v2462 = vxor.u32 %v2430, 2147483648
    %v2463 = vxor.u32 %v2433, 2147483648
    %v2464 = vxor.u32 %v2436, 2147483648
    %v2465 = vxor.u32 %v2439, 2147483648
    %v2466 = vxor.u32 %v2442, 2147483648
    %v2467 = vxor.u32 %v2445, 2147483648
    %v2468 = vxor.u32 %v2448, 2147483648
    %v2469 = vxor.u32 %v2451, 2147483648
    %v2470 = vxor.u32 %v2454, 2147483648
    %v2471 = vmul.f32 %v2455, 1.442695
    %v2472 = vpow.pop %v2471
    %v2473 = vmul.f32 %v2456, 1.442695
    %v2474 = vpow.pop %v2473
    %v2475 = vmul.f32 %v2457, 1.442695
    %v2476 = vpow.pop %v2475
    %v2477 = vmul.f32 %v2458, 1.442695
    %v2478 = vpow.pop %v2477
    %v2479 = vmul.f32 %v2459, 1.442695
    %v2480 = vpow.pop %v2479
    %v2481 = vmul.f32 %v2460, 1.442695
    %v2482 = vpow.pop %v2481
    %v2483 = vmul.f32 %v2461, 1.442695
    %v2484 = vpow.pop %v2483
    %v2485 = vmul.f32 %v2462, 1.442695
    %v2486 = vpow.pop %v2485
    %v2487 = vmul.f32 %v2463, 1.442695
    %v2488 = vpow.pop %v2487
    %v2489 = vmul.f32 %v2464, 1.442695
    %v2490 = vpow.pop %v2489
    %v2491 = vmul.f32 %v2465, 1.442695
    %v2492 = vpow.pop %v2491
    %v2493 = vmul.f32 %v2466, 1.442695
    %v2494 = vpow.pop %v2493
    %v2495 = vmul.f32 %v2467, 1.442695
    %v2496 = vpow.pop %v2495
    %v2497 = vmul.f32 %v2468, 1.442695
    %v2498 = vpow.pop %v2497
    %v2499 = vmul.f32 %v2469, 1.442695
    %v2500 = vpow.pop %v2499
    %v2501 = vmul.f32 %v2470, 1.442695
    %v2502 = vpow.pop %v2501
    %v2503 = vadd.f32 %v2472, 1.0
    %v2504 = vadd.f32 %v2474, 1.0
    %v2505 = vadd.f32 %v2476, 1.0
    %v2506 = vadd.f32 %v2478, 1.0
    %v2507 = vadd.f32 %v2480, 1.0
    %v2508 = vadd.f32 %v2482, 1.0
    %v2509 = vadd.f32 %v2484, 1.0
    %v2510 = vadd.f32 %v2486, 1.0
    %v2511 = vadd.f32 %v2488, 1.0
    %v2512 = vadd.f32 %v2490, 1.0
    %v2513 = vadd.f32 %v2492, 1.0
    %v2514 = vadd.f32 %v2494, 1.0
    %v2515 = vadd.f32 %v2496, 1.0
    %v2516 = vadd.f32 %v2498, 1.0
    %v2517 = vadd.f32 %v2500, 1.0
    %v2518 = vadd.f32 %v2502, 1.0
    %v2519 = vrcp.pop %v2503
    %v2520 = vmul.f32 %v2503, %v2519
    %v2521 = vsub.f32 1.0, %v2520
    %v2522 = vmul.f32 %v2519, %v2521
    %v2523 = vadd.f32 %v2519, %v2522
    %vm2524 = vweird.f32 %v2503
    %vm2525 = vweird.f32 %v2519
    %vm2526 = vmor %vm2524, %vm2525
    %v2527 = vsel %vm2526, %v2519, %v2523
    %v2528 = vand.u32 2147483647, %v2503
    %vm2529 = vcmp.eq.f32.partialorder %v2528, 8.507059e+37
    %v2530 = vand.u32 %v2503, 2147483648
    %v2531 = vor.u32 1.1754944e-38, %v2530
    %v2532 = vsel %vm2529, %v2531, %v2527
    %v2533 = vmul.f32 1.0, %v2532
    %v2534 = vrcp.pop %v2504
    %v2535 = vmul.f32 %v2504, %v2534
    %v2536 = vsub.f32 1.0, %v2535
    %v2537 = vmul.f32 %v2534, %v2536
    %v2538 = vadd.f32 %v2534, %v2537
    %vm2539 = vweird.f32 %v2504
    %vm2540 = vweird.f32 %v2534
    %vm2541 = vmor %vm2539, %vm2540
    %v2542 = vsel %vm2541, %v2534, %v2538
    %v2543 = vand.u32 2147483647, %v2504
    %vm2544 = vcmp.eq.f32.partialorder %v2543, 8.507059e+37
    %v2545 = vand.u32 %v2504, 2147483648
    %v2546 = vor.u32 1.1754944e-38, %v2545
    %v2547 = vsel %vm2544, %v2546, %v2542
    %v2548 = vmul.f32 1.0, %v2547
    %v2549 = vrcp.pop %v2505
    %v2550 = vmul.f32 %v2505, %v2549
    %v2551 = vsub.f32 1.0, %v2550
    %v2552 = vmul.f32 %v2549, %v2551
    %v2553 = vadd.f32 %v2549, %v2552
    %vm2554 = vweird.f32 %v2505
    %vm2555 = vweird.f32 %v2549
    %vm2556 = vmor %vm2554, %vm2555
    %v2557 = vsel %vm2556, %v2549, %v2553
    %v2558 = vand.u32 2147483647, %v2505
    %vm2559 = vcmp.eq.f32.partialorder %v2558, 8.507059e+37
    %v2560 = vand.u32 %v2505, 2147483648
    %v2561 = vor.u32 1.1754944e-38, %v2560
    %v2562 = vsel %vm2559, %v2561, %v2557
    %v2563 = vmul.f32 1.0, %v2562
    %v2564 = vrcp.pop %v2506
    %v2565 = vmul.f32 %v2506, %v2564
    %v2566 = vsub.f32 1.0, %v2565
    %v2567 = vmul.f32 %v2564, %v2566
    %v2568 = vadd.f32 %v2564, %v2567
    %vm2569 = vweird.f32 %v2506
    %vm2570 = vweird.f32 %v2564
    %vm2571 = vmor %vm2569, %vm2570
    %v2572 = vsel %vm2571, %v2564, %v2568
    %v2573 = vand.u32 2147483647, %v2506
    %vm2574 = vcmp.eq.f32.partialorder %v2573, 8.507059e+37
    %v2575 = vand.u32 %v2506, 2147483648
    %v2576 = vor.u32 1.1754944e-38, %v2575
    %v2577 = vsel %vm2574, %v2576, %v2572
    %v2578 = vmul.f32 1.0, %v2577
    %v2579 = vrcp.pop %v2507
    %v2580 = vmul.f32 %v2507, %v2579
    %v2581 = vsub.f32 1.0, %v2580
    %v2582 = vmul.f32 %v2579, %v2581
    %v2583 = vadd.f32 %v2579, %v2582
    %vm2584 = vweird.f32 %v2507
    %vm2585 = vweird.f32 %v2579
    %vm2586 = vmor %vm2584, %vm2585
    %v2587 = vsel %vm2586, %v2579, %v2583
    %v2588 = vand.u32 2147483647, %v2507
    %vm2589 = vcmp.eq.f32.partialorder %v2588, 8.507059e+37
    %v2590 = vand.u32 %v2507, 2147483648
    %v2591 = vor.u32 1.1754944e-38, %v2590
    %v2592 = vsel %vm2589, %v2591, %v2587
    %v2593 = vmul.f32 1.0, %v2592
    %v2594 = vrcp.pop %v2508
    %v2595 = vmul.f32 %v2508, %v2594
    %v2596 = vsub.f32 1.0, %v2595
    %v2597 = vmul.f32 %v2594, %v2596
    %v2598 = vadd.f32 %v2594, %v2597
    %vm2599 = vweird.f32 %v2508
    %vm2600 = vweird.f32 %v2594
    %vm2601 = vmor %vm2599, %vm2600
    %v2602 = vsel %vm2601, %v2594, %v2598
    %v2603 = vand.u32 2147483647, %v2508
    %vm2604 = vcmp.eq.f32.partialorder %v2603, 8.507059e+37
    %v2605 = vand.u32 %v2508, 2147483648
    %v2606 = vor.u32 1.1754944e-38, %v2605
    %v2607 = vsel %vm2604, %v2606, %v2602
    %v2608 = vmul.f32 1.0, %v2607
    %v2609 = vrcp.pop %v2509
    %v2610 = vmul.f32 %v2509, %v2609
    %v2611 = vsub.f32 1.0, %v2610
    %v2612 = vmul.f32 %v2609, %v2611
    %v2613 = vadd.f32 %v2609, %v2612
    %vm2614 = vweird.f32 %v2509
    %vm2615 = vweird.f32 %v2609
    %vm2616 = vmor %vm2614, %vm2615
    %v2617 = vsel %vm2616, %v2609, %v2613
    %v2618 = vand.u32 2147483647, %v2509
    %vm2619 = vcmp.eq.f32.partialorder %v2618, 8.507059e+37
    %v2620 = vand.u32 %v2509, 2147483648
    %v2621 = vor.u32 1.1754944e-38, %v2620
    %v2622 = vsel %vm2619, %v2621, %v2617
    %v2623 = vmul.f32 1.0, %v2622
    %v2624 = vrcp.pop %v2510
    %v2625 = vmul.f32 %v2510, %v2624
    %v2626 = vsub.f32 1.0, %v2625
    %v2627 = vmul.f32 %v2624, %v2626
    %v2628 = vadd.f32 %v2624, %v2627
    %vm2629 = vweird.f32 %v2510
    %vm2630 = vweird.f32 %v2624
    %vm2631 = vmor %vm2629, %vm2630
    %v2632 = vsel %vm2631, %v2624, %v2628
    %v2633 = vand.u32 2147483647, %v2510
    %vm2634 = vcmp.eq.f32.partialorder %v2633, 8.507059e+37
    %v2635 = vand.u32 %v2510, 2147483648
    %v2636 = vor.u32 1.1754944e-38, %v2635
    %v2637 = vsel %vm2634, %v2636, %v2632
    %v2638 = vmul.f32 1.0, %v2637
    %v2639 = vrcp.pop %v2511
    %v2640 = vmul.f32 %v2511, %v2639
    %v2641 = vsub.f32 1.0, %v2640
    %v2642 = vmul.f32 %v2639, %v2641
    %v2643 = vadd.f32 %v2639, %v2642
    %vm2644 = vweird.f32 %v2511
    %vm2645 = vweird.f32 %v2639
    %vm2646 = vmor %vm2644, %vm2645
    %v2647 = vsel %vm2646, %v2639, %v2643
    %v2648 = vand.u32 2147483647, %v2511
    %vm2649 = vcmp.eq.f32.partialorder %v2648, 8.507059e+37
    %v2650 = vand.u32 %v2511, 2147483648
    %v2651 = vor.u32 1.1754944e-38, %v2650
    %v2652 = vsel %vm2649, %v2651, %v2647
    %v2653 = vmul.f32 1.0, %v2652
    %v2654 = vrcp.pop %v2512
    %v2655 = vmul.f32 %v2512, %v2654
    %v2656 = vsub.f32 1.0, %v2655
    %v2657 = vmul.f32 %v2654, %v2656
    %v2658 = vadd.f32 %v2654, %v2657
    %vm2659 = vweird.f32 %v2512
    %vm2660 = vweird.f32 %v2654
    %vm2661 = vmor %vm2659, %vm2660
    %v2662 = vsel %vm2661, %v2654, %v2658
    %v2663 = vand.u32 2147483647, %v2512
    %vm2664 = vcmp.eq.f32.partialorder %v2663, 8.507059e+37
    %v2665 = vand.u32 %v2512, 2147483648
    %v2666 = vor.u32 1.1754944e-38, %v2665
    %v2667 = vsel %vm2664, %v2666, %v2662
    %v2668 = vmul.f32 1.0, %v2667
    %v2669 = vrcp.pop %v2513
    %v2670 = vmul.f32 %v2513, %v2669
    %v2671 = vsub.f32 1.0, %v2670
    %v2672 = vmul.f32 %v2669, %v2671
    %v2673 = vadd.f32 %v2669, %v2672
    %vm2674 = vweird.f32 %v2513
    %vm2675 = vweird.f32 %v2669
    %vm2676 = vmor %vm2674, %vm2675
    %v2677 = vsel %vm2676, %v2669, %v2673
    %v2678 = vand.u32 2147483647, %v2513
    %vm2679 = vcmp.eq.f32.partialorder %v2678, 8.507059e+37
    %v2680 = vand.u32 %v2513, 2147483648
    %v2681 = vor.u32 1.1754944e-38, %v2680
    %v2682 = vsel %vm2679, %v2681, %v2677
    %v2683 = vmul.f32 1.0, %v2682
    %v2684 = vrcp.pop %v2514
    %v2685 = vmul.f32 %v2514, %v2684
    %v2686 = vsub.f32 1.0, %v2685
    %v2687 = vmul.f32 %v2684, %v2686
    %v2688 = vadd.f32 %v2684, %v2687
    %vm2689 = vweird.f32 %v2514
    %vm2690 = vweird.f32 %v2684
    %vm2691 = vmor %vm2689, %vm2690
    %v2692 = vsel %vm2691, %v2684, %v2688
    %v2693 = vand.u32 2147483647, %v2514
    %vm2694 = vcmp.eq.f32.partialorder %v2693, 8.507059e+37
    %v2695 = vand.u32 %v2514, 2147483648
    %v2696 = vor.u32 1.1754944e-38, %v2695
    %v2697 = vsel %vm2694, %v2696, %v2692
    %v2698 = vmul.f32 1.0, %v2697
    %v2699 = vrcp.pop %v2515
    %v2700 = vmul.f32 %v2515, %v2699
    %v2701 = vsub.f32 1.0, %v2700
    %v2702 = vmul.f32 %v2699, %v2701
    %v2703 = vadd.f32 %v2699, %v2702
    %vm2704 = vweird.f32 %v2515
    %vm2705 = vweird.f32 %v2699
    %vm2706 = vmor %vm2704, %vm2705
    %v2707 = vsel %vm2706, %v2699, %v2703
    %v2708 = vand.u32 2147483647, %v2515
    %vm2709 = vcmp.eq.f32.partialorder %v2708, 8.507059e+37
    %v2710 = vand.u32 %v2515, 2147483648
    %v2711 = vor.u32 1.1754944e-38, %v2710
    %v2712 = vsel %vm2709, %v2711, %v2707
    %v2713 = vmul.f32 1.0, %v2712
    %v2714 = vrcp.pop %v2516
    %v2715 = vmul.f32 %v2516, %v2714
    %v2716 = vsub.f32 1.0, %v2715
    %v2717 = vmul.f32 %v2714, %v2716
    %v2718 = vadd.f32 %v2714, %v2717
    %vm2719 = vweird.f32 %v2516
    %vm2720 = vweird.f32 %v2714
    %vm2721 = vmor %vm2719, %vm2720
    %v2722 = vsel %vm2721, %v2714, %v2718
    %v2723 = vand.u32 2147483647, %v2516
    %vm2724 = vcmp.eq.f32.partialorder %v2723, 8.507059e+37
    %v2725 = vand.u32 %v2516, 2147483648
    %v2726 = vor.u32 1.1754944e-38, %v2725
    %v2727 = vsel %vm2724, %v2726, %v2722
    %v2728 = vmul.f32 1.0, %v2727
    %v2729 = vrcp.pop %v2517
    %v2730 = vmul.f32 %v2517, %v2729
    %v2731 = vsub.f32 1.0, %v2730
    %v2732 = vmul.f32 %v2729, %v2731
    %v2733 = vadd.f32 %v2729, %v2732
    %vm2734 = vweird.f32 %v2517
    %vm2735 = vweird.f32 %v2729
    %vm2736 = vmor %vm2734, %vm2735
    %v2737 = vsel %vm2736, %v2729, %v2733
    %v2738 = vand.u32 2147483647, %v2517
    %vm2739 = vcmp.eq.f32.partialorder %v2738, 8.507059e+37
    %v2740 = vand.u32 %v2517, 2147483648
    %v2741 = vor.u32 1.1754944e-38, %v2740
    %v2742 = vsel %vm2739, %v2741, %v2737
    %v2743 = vmul.f32 1.0, %v2742
    %v2744 = vrcp.pop %v2518
    %v2745 = vmul.f32 %v2518, %v2744
    %v2746 = vsub.f32 1.0, %v2745
    %v2747 = vmul.f32 %v2744, %v2746
    %v2748 = vadd.f32 %v2744, %v2747
    %vm2749 = vweird.f32 %v2518
    %vm2750 = vweird.f32 %v2744
    %vm2751 = vmor %vm2749, %vm2750
    %v2752 = vsel %vm2751, %v2744, %v2748
    %v2753 = vand.u32 2147483647, %v2518
    %vm2754 = vcmp.eq.f32.partialorder %v2753, 8.507059e+37
    %v2755 = vand.u32 %v2518, 2147483648
    %v2756 = vor.u32 1.1754944e-38, %v2755
    %v2757 = vsel %vm2754, %v2756, %v2752
    %v2758 = vmul.f32 1.0, %v2757
    %v2759 = vmul.f32 %v2533, %v24
    %v2760 = vmul.f32 %v2548, %v25
    %v2761 = vmul.f32 %v2563, %v26
    %v2762 = vmul.f32 %v2578, %v27
    %v2763 = vmul.f32 %v2593, %v28
    %v2764 = vmul.f32 %v2608, %v29
    %v2765 = vmul.f32 %v2623, %v30
    %v2766 = vmul.f32 %v2638, %v31
    %v2767 = vmul.f32 %v2653, %v32
    %v2768 = vmul.f32 %v2668, %v33
    %v2769 = vmul.f32 %v2683, %v34
    %v2770 = vmul.f32 %v2698, %v35
    %v2771 = vmul.f32 %v2713, %v36
    %v2772 = vmul.f32 %v2728, %v37
    %v2773 = vmul.f32 %v2743, %v38
    %v2774 = vmul.f32 %v2758, %v39
    %v2775 = vsel %vm54, %v2759, 0.0
    %v2776 = vsel %vm54, %v2760, 0.0
    %v2777 = vadd.f32 %v2775, %v2776
    %v2778 = vsel %vm54, %v2761, 0.0
    %v2779 = vadd.f32 %v2777, %v2778
    %v2780 = vsel %vm54, %v2762, 0.0
    %v2781 = vadd.f32 %v2779, %v2780
    %v2782 = vsel %vm54, %v2763, 0.0
    %v2783 = vadd.f32 %v2781, %v2782
    %v2784 = vsel %vm54, %v2764, 0.0
    %v2785 = vadd.f32 %v2783, %v2784
    %v2786 = vsel %vm54, %v2765, 0.0
    %v2787 = vadd.f32 %v2785, %v2786
    %v2788 = vsel %vm54, %v2766, 0.0
    %v2789 = vadd.f32 %v2787, %v2788
    %v2790 = vrot.slane %v2789, 4
    %v2791 = vadd.f32 %v2789, %v2790
    %v2792 = vrot.slane %v2791, 2
    %v2793 = vadd.f32 %v2791, %v2792
    %v2794 = vrot.slane %v2793, 1
    %v2795 = vadd.f32 %v2793, %v2794
    %v2796 = vsel %vm54, %v2767, 0.0
    %v2797 = vsel %vm54, %v2768, 0.0
    %v2798 = vadd.f32 %v2796, %v2797
    %v2799 = vsel %vm54, %v2769, 0.0
    %v2800 = vadd.f32 %v2798, %v2799
    %v2801 = vsel %vm54, %v2770, 0.0
    %v2802 = vadd.f32 %v2800, %v2801
    %v2803 = vsel %vm54, %v2771, 0.0
    %v2804 = vadd.f32 %v2802, %v2803
    %v2805 = vsel %vm54, %v2772, 0.0
    %v2806 = vadd.f32 %v2804, %v2805
    %v2807 = vsel %vm54, %v2773, 0.0
    %v2808 = vadd.f32 %v2806, %v2807
    %v2809 = vsel %vm54, %v2774, 0.0
    %v2810 = vadd.f32 %v2808, %v2809
    %v2811 = vrot.slane %v2810, 4
    %v2812 = vadd.f32 %v2810, %v2811
    %v2813 = vrot.slane %v2812, 2
    %v2814 = vadd.f32 %v2812, %v2813
    %v2815 = vrot.slane %v2814, 1
    %v2816 = vadd.f32 %v2814, %v2815
    %v2819 = vsel %vm751, %v2816, %v2795
    %s2821 = scalar_lea.vmem [#allocation3], 6
    %2822 = vst.msk [vmem:[%s2821] sm:$0x3] %vm120, %v2819
    %v2839 = vperm.slane %v2533, %v772
    %v2840 = vperm.slane %v2548, %v774
    %v2841 = vsel %vm776, %v2840, %v2839
    %v2842 = vperm.slane %v2563, %v778
    %v2843 = vsel %vm780, %v2842, %v2841
    %v2844 = vperm.slane %v2578, %v782
    %v2845 = vsel %vm784, %v2844, %v2843
    %v2846 = vperm.slane %v2593, %v786
    %v2847 = vsel %vm788, %v2846, %v2845
    %v2848 = vperm.slane %v2608, %v790
    %v2849 = vsel %vm792, %v2848, %v2847
    %v2850 = vperm.slane %v2623, %v794
    %v2851 = vsel %vm796, %v2850, %v2849
    %v2852 = vperm.slane %v2638, %v798
    %v2853 = vsel %vm800, %v2852, %v2851
    %v2854 = vperm.slane %v2653, %v772
    %v2855 = vperm.slane %v2668, %v774
    %v2856 = vsel %vm776, %v2855, %v2854
    %v2857 = vperm.slane %v2683, %v778
    %v2858 = vsel %vm780, %v2857, %v2856
    %v2859 = vperm.slane %v2698, %v782
    %v2860 = vsel %vm784, %v2859, %v2858
    %v2861 = vperm.slane %v2713, %v786
    %v2862 = vsel %vm788, %v2861, %v2860
    %v2863 = vperm.slane %v2728, %v790
    %v2864 = vsel %vm792, %v2863, %v2862
    %v2865 = vperm.slane %v2743, %v794
    %v2866 = vsel %vm796, %v2865, %v2864
    %v2867 = vperm.slane %v2758, %v798
    %v2868 = vsel %vm800, %v2867, %v2866
    %v2869 = vsel %vm751, %v2868, %v2853
    %s2871 = scalar_lea.vmem [#allocation5], 6
    %2872 = vst.msk [vmem:[%s2871] sm:$0x3] %vm819, %v2869
    %s2873 = scalar_lea.vmem %s0, 8
    %v2874 = vld [vmem:[%s2873] sm:$0x3]
    %v2875 = vsel %vm54, %v2253, 0
    %2877 = vmatpush.msra.mxu0 0.0
    %2878 = vmatpush.msra.mxu0 0.0
    %2879 = vmatpush.msra.mxu0 0.0
    %2880 = vmatpush.msra.mxu0 0.0
    %2881 = vmatpush.msra.mxu0 0.0
    %2882 = vmatpush.msra.mxu0 0.0
    %2883 = vmatpush.msra.mxu0 0.0
    %2884 = vmatpush.msra.mxu0 0.0
    %2885 = vmatpush.msra.mxu0 0.0
    %2886 = vmatpush.msra.mxu0 0.0
    %2887 = vmatpush.msra.mxu0 0.0
    %2888 = vmatpush.msra.mxu0 0.0
    %2889 = vmatpush.msra.mxu0 %v43
    %2890 = vmatpush.msra.mxu0 %v42
    %2891 = vmatpush.msra.mxu0 %v41
    %2892 = vmatpush.msra.mxu0 %v40
    %2893 = vmatmul.f32.gmra.mxu0 %v2875
    %v2894 = vpop.f32.mrf.mxu0
    %v2895 = vadd.f32 0.0, %v2894
    %2896 = vdwg.mxu0
    %v2897 = vadd.f32 %v2874, %v2895
    %v2898 = vxor.u32 %v2897, 2147483648
    %v2899 = vmul.f32 %v2898, 1.442695
    %v2900 = vpow.pop %v2899
    %v2901 = vadd.f32 %v2900, 1.0
    %v2902 = vrcp.pop %v2901
    %v2903 = vmul.f32 %v2901, %v2902
    %v2904 = vsub.f32 1.0, %v2903
    %v2905 = vmul.f32 %v2902, %v2904
    %v2906 = vadd.f32 %v2902, %v2905
    %vm2907 = vweird.f32 %v2901
    %vm2908 = vweird.f32 %v2902
    %vm2909 = vmor %vm2907, %vm2908
    %v2910 = vsel %vm2909, %v2902, %v2906
    %v2911 = vand.u32 2147483647, %v2901
    %vm2912 = vcmp.eq.f32.partialorder %v2911, 8.507059e+37
    %v2913 = vand.u32 %v2901, 2147483648
    %v2914 = vor.u32 1.1754944e-38, %v2913
    %v2915 = vsel %vm2912, %v2914, %v2910
    %v2916 = vmul.f32 1.0, %v2915
    %v2917 = vtanh.pop %v2897
    %v2918 = vmul.f32 %v2916, %v2244
    %2920 = vrot.lane.b32.xlu0 %v2917, 64
    %v2921 = vpop.permute.xlu0 %2920
    %v2923 = vmul.f32 %v2916, %v2921
    %2925 = vrot.lane.b32.xlu0 %v2923, 32
    %v2926 = vpop.permute.xlu0 %2925
    %v2928 = vadd.f32 %v2918, %v2926
    %v2929 = vtanh.pop %v2928
    %2931 = vrot.lane.b32.xlu0 %v2929, 64
    %v2932 = vpop.permute.xlu0 %2931
    %v2934 = vmul.f32 %v2916, %v2932
    %2936 = vrot.lane.b32.xlu0 %v2934, 32
    %v2937 = vpop.permute.xlu0 %2936
    %2939 = vst.msk [vmem:[#allocation2] sm:$0x3] %vm120, %v2937
    %2940 = vrot.lane.b32.xlu0 %v2320, 64
    %v2941 = vpop.permute.xlu0 %2940
    %2943 = vst.msk [vmem:[#allocation2] sm:$0x3] %vm122, %v2941
    %v2944 = vld [vmem:[#allocation2] sm:$0x3]
    %v2946 = vsel %vm128, %v2944, 0
    %2948 = vmatpush.msra.mxu0 0.0
    %2949 = vmatpush.msra.mxu0 0.0
    %2950 = vmatpush.msra.mxu0 0.0
    %2951 = vmatpush.msra.mxu0 0.0
    %2952 = vmatpush.msra.mxu0 0.0
    %2953 = vmatpush.msra.mxu0 0.0
    %2954 = vmatpush.msra.mxu0 0.0
    %2955 = vmatpush.msra.mxu0 0.0
    %2956 = vmatpush.msra.mxu0 %v51
    %2957 = vmatpush.msra.mxu0 %v50
    %2958 = vmatpush.msra.mxu0 %v49
    %2959 = vmatpush.msra.mxu0 %v48
    %2960 = vmatpush.msra.mxu0 %v47
    %2961 = vmatpush.msra.mxu0 %v46
    %2962 = vmatpush.msra.mxu0 %v45
    %2963 = vmatpush.msra.mxu0 %v44
    %2964 = vmatmul.f32.gmra.mxu0 %v2946
    %v2965 = vpop.f32.mrf.mxu0
    %v2966 = vadd.f32 %v126, %v2965
    %2967 = vdwg.mxu0
    %v2968 = vxor.u32 %v2966, 2147483648
    %v2969 = vmul.f32 %v2968, 1.442695
    %v2970 = vpow.pop %v2969
    %v2971 = vadd.f32 %v2970, 1.0
    %v2972 = vrcp.pop %v2971
    %v2973 = vmul.f32 %v2971, %v2972
    %v2974 = vsub.f32 1.0, %v2973
    %v2975 = vmul.f32 %v2972, %v2974
    %v2976 = vadd.f32 %v2972, %v2975
    %vm2977 = vweird.f32 %v2971
    %vm2978 = vweird.f32 %v2972
    %vm2979 = vmor %vm2977, %vm2978
    %v2980 = vsel %vm2979, %v2972, %v2976
    %v2981 = vand.u32 2147483647, %v2971
    %vm2982 = vcmp.eq.f32.partialorder %v2981, 8.507059e+37
    %v2983 = vand.u32 %v2971, 2147483648
    %v2984 = vor.u32 1.1754944e-38, %v2983
    %v2985 = vsel %vm2982, %v2984, %v2980
    %v2986 = vmul.f32 1.0, %v2985
    %v2987 = vtanh.pop %v2966
    %v2988 = vmul.f32 %v2986, %v2314
    %2990 = vrot.lane.b32.xlu0 %v2987, 64
    %v2991 = vpop.permute.xlu0 %2990
    %v2993 = vmul.f32 %v2986, %v2991
    %2995 = vrot.lane.b32.xlu0 %v2993, 32
    %v2996 = vpop.permute.xlu0 %2995
    %v2998 = vadd.f32 %v2988, %v2996
    %v2999 = vtanh.pop %v2998
    %3001 = vrot.lane.b32.xlu0 %v2999, 64
    %v3002 = vpop.permute.xlu0 %3001
    %v3004 = vmul.f32 %v2986, %v3002
    %v3006 = vrot.slane %v3004, 1
    %v3007 = vperm.slane %v3004, 0
    %v3008 = vperm.slane %v3006, 0
    %v3011 = vmul.f32 %v3007, %v212
    %v3012 = vmul.f32 %v3007, %v214
    %v3013 = vmul.f32 %v3007, %v216
    %v3014 = vmul.f32 %v3007, %v218
    %v3015 = vmul.f32 %v3007, %v220
    %v3016 = vmul.f32 %v3007, %v222
    %v3017 = vmul.f32 %v3007, %v224
    %v3018 = vmul.f32 %v3007, %v226
    %v3019 = vmul.f32 %v3008, %v228
    %v3020 = vmul.f32 %v3008, %v230
    %v3021 = vmul.f32 %v3008, %v232
    %v3022 = vmul.f32 %v3008, %v234
    %v3023 = vmul.f32 %v3008, %v236
    %v3024 = vmul.f32 %v3008, %v238
    %v3025 = vmul.f32 %v3008, %v240
    %v3026 = vmul.f32 %v3008, %v242
    %3043 = vrot.lane.b32.xlu0 %v3011, 32
    %v3044 = vpop.permute.xlu0 %3043
    %3045 = vrot.lane.b32.xlu0 %v3012, 32
    %v3046 = vpop.permute.xlu0 %3045
    %3047 = vrot.lane.b32.xlu0 %v3013, 32
    %v3048 = vpop.permute.xlu0 %3047
    %3049 = vrot.lane.b32.xlu0 %v3014, 32
    %v3050 = vpop.permute.xlu0 %3049
    %3051 = vrot.lane.b32.xlu0 %v3015, 32
    %v3052 = vpop.permute.xlu0 %3051
    %3053 = vrot.lane.b32.xlu0 %v3016, 32
    %v3054 = vpop.permute.xlu0 %3053
    %3055 = vrot.lane.b32.xlu0 %v3017, 32
    %v3056 = vpop.permute.xlu0 %3055
    %3057 = vrot.lane.b32.xlu0 %v3018, 32
    %v3058 = vpop.permute.xlu0 %3057
    %3059 = vrot.lane.b32.xlu0 %v3019, 32
    %v3060 = vpop.permute.xlu0 %3059
    %3061 = vrot.lane.b32.xlu0 %v3020, 32
    %v3062 = vpop.permute.xlu0 %3061
    %3063 = vrot.lane.b32.xlu0 %v3021, 32
    %v3064 = vpop.permute.xlu0 %3063
    %3065 = vrot.lane.b32.xlu0 %v3022, 32
    %v3066 = vpop.permute.xlu0 %3065
    %3067 = vrot.lane.b32.xlu0 %v3023, 32
    %v3068 = vpop.permute.xlu0 %3067
    %3069 = vrot.lane.b32.xlu0 %v3024, 32
    %v3070 = vpop.permute.xlu0 %3069
    %3071 = vrot.lane.b32.xlu0 %v3025, 32
    %v3072 = vpop.permute.xlu0 %3071
    %3073 = vrot.lane.b32.xlu0 %v3026, 32
    %v3074 = vpop.permute.xlu0 %3073
    %v3091 = vsel %vm54, %v3044, 0.0
    %3092 = vadd.xlane.f32.xlu0 %v3091
    %v3093 = vpop.xlane.xlu0 %3092
    %v3094 = vsel %vm54, %v3046, 0.0
    %3095 = vadd.xlane.f32.xlu0 %v3094
    %v3096 = vpop.xlane.xlu0 %3095
    %v3097 = vsel %vm54, %v3048, 0.0
    %3098 = vadd.xlane.f32.xlu0 %v3097
    %v3099 = vpop.xlane.xlu0 %3098
    %v3100 = vsel %vm54, %v3050, 0.0
    %3101 = vadd.xlane.f32.xlu0 %v3100
    %v3102 = vpop.xlane.xlu0 %3101
    %v3103 = vsel %vm54, %v3052, 0.0
    %3104 = vadd.xlane.f32.xlu0 %v3103
    %v3105 = vpop.xlane.xlu0 %3104
    %v3106 = vsel %vm54, %v3054, 0.0
    %3107 = vadd.xlane.f32.xlu0 %v3106
    %v3108 = vpop.xlane.xlu0 %3107
    %v3109 = vsel %vm54, %v3056, 0.0
    %3110 = vadd.xlane.f32.xlu0 %v3109
    %v3111 = vpop.xlane.xlu0 %3110
    %v3112 = vsel %vm54, %v3058, 0.0
    %3113 = vadd.xlane.f32.xlu0 %v3112
    %v3114 = vpop.xlane.xlu0 %3113
    %v3115 = vsel %vm54, %v3060, 0.0
    %3116 = vadd.xlane.f32.xlu0 %v3115
    %v3117 = vpop.xlane.xlu0 %3116
    %v3118 = vsel %vm54, %v3062, 0.0
    %3119 = vadd.xlane.f32.xlu0 %v3118
    %v3120 = vpop.xlane.xlu0 %3119
    %v3121 = vsel %vm54, %v3064, 0.0
    %3122 = vadd.xlane.f32.xlu0 %v3121
    %v3123 = vpop.xlane.xlu0 %3122
    %v3124 = vsel %vm54, %v3066, 0.0
    %3125 = vadd.xlane.f32.xlu0 %v3124
    %v3126 = vpop.xlane.xlu0 %3125
    %v3127 = vsel %vm54, %v3068, 0.0
    %3128 = vadd.xlane.f32.xlu0 %v3127
    %v3129 = vpop.xlane.xlu0 %3128
    %v3130 = vsel %vm54, %v3070, 0.0
    %3131 = vadd.xlane.f32.xlu0 %v3130
    %v3132 = vpop.xlane.xlu0 %3131
    %v3133 = vsel %vm54, %v3072, 0.0
    %3134 = vadd.xlane.f32.xlu0 %v3133
    %v3135 = vpop.xlane.xlu0 %3134
    %v3136 = vsel %vm54, %v3074, 0.0
    %3137 = vadd.xlane.f32.xlu0 %v3136
    %v3138 = vpop.xlane.xlu0 %3137
    %v3139 = vxor.u32 %v3093, 2147483648
    %v3140 = vxor.u32 %v3096, 2147483648
    %v3141 = vxor.u32 %v3099, 2147483648
    %v3142 = vxor.u32 %v3102, 2147483648
    %v3143 = vxor.u32 %v3105, 2147483648
    %v3144 = vxor.u32 %v3108, 2147483648
    %v3145 = vxor.u32 %v3111, 2147483648
    %v3146 = vxor.u32 %v3114, 2147483648
    %v3147 = vxor.u32 %v3117, 2147483648
    %v3148 = vxor.u32 %v3120, 2147483648
    %v3149 = vxor.u32 %v3123, 2147483648
    %v3150 = vxor.u32 %v3126, 2147483648
    %v3151 = vxor.u32 %v3129, 2147483648
    %v3152 = vxor.u32 %v3132, 2147483648
    %v3153 = vxor.u32 %v3135, 2147483648
    %v3154 = vxor.u32 %v3138, 2147483648
    %v3155 = vmul.f32 %v3139, 1.442695
    %v3156 = vpow.pop %v3155
    %v3157 = vmul.f32 %v3140, 1.442695
    %v3158 = vpow.pop %v3157
    %v3159 = vmul.f32 %v3141, 1.442695
    %v3160 = vpow.pop %v3159
    %v3161 = vmul.f32 %v3142, 1.442695
    %v3162 = vpow.pop %v3161
    %v3163 = vmul.f32 %v3143, 1.442695
    %v3164 = vpow.pop %v3163
    %v3165 = vmul.f32 %v3144, 1.442695
    %v3166 = vpow.pop %v3165
    %v3167 = vmul.f32 %v3145, 1.442695
    %v3168 = vpow.pop %v3167
    %v3169 = vmul.f32 %v3146, 1.442695
    %v3170 = vpow.pop %v3169
    %v3171 = vmul.f32 %v3147, 1.442695
    %v3172 = vpow.pop %v3171
    %v3173 = vmul.f32 %v3148, 1.442695
    %v3174 = vpow.pop %v3173
    %v3175 = vmul.f32 %v3149, 1.442695
    %v3176 = vpow.pop %v3175
    %v3177 = vmul.f32 %v3150, 1.442695
    %v3178 = vpow.pop %v3177
    %v3179 = vmul.f32 %v3151, 1.442695
    %v3180 = vpow.pop %v3179
    %v3181 = vmul.f32 %v3152, 1.442695
    %v3182 = vpow.pop %v3181
    %v3183 = vmul.f32 %v3153, 1.442695
    %v3184 = vpow.pop %v3183
    %v3185 = vmul.f32 %v3154, 1.442695
    %v3186 = vpow.pop %v3185
    %v3187 = vadd.f32 %v3156, 1.0
    %v3188 = vadd.f32 %v3158, 1.0
    %v3189 = vadd.f32 %v3160, 1.0
    %v3190 = vadd.f32 %v3162, 1.0
    %v3191 = vadd.f32 %v3164, 1.0
    %v3192 = vadd.f32 %v3166, 1.0
    %v3193 = vadd.f32 %v3168, 1.0
    %v3194 = vadd.f32 %v3170, 1.0
    %v3195 = vadd.f32 %v3172, 1.0
    %v3196 = vadd.f32 %v3174, 1.0
    %v3197 = vadd.f32 %v3176, 1.0
    %v3198 = vadd.f32 %v3178, 1.0
    %v3199 = vadd.f32 %v3180, 1.0
    %v3200 = vadd.f32 %v3182, 1.0
    %v3201 = vadd.f32 %v3184, 1.0
    %v3202 = vadd.f32 %v3186, 1.0
    %v3203 = vrcp.pop %v3187
    %v3204 = vmul.f32 %v3187, %v3203
    %v3205 = vsub.f32 1.0, %v3204
    %v3206 = vmul.f32 %v3203, %v3205
    %v3207 = vadd.f32 %v3203, %v3206
    %vm3208 = vweird.f32 %v3187
    %vm3209 = vweird.f32 %v3203
    %vm3210 = vmor %vm3208, %vm3209
    %v3211 = vsel %vm3210, %v3203, %v3207
    %v3212 = vand.u32 2147483647, %v3187
    %vm3213 = vcmp.eq.f32.partialorder %v3212, 8.507059e+37
    %v3214 = vand.u32 %v3187, 2147483648
    %v3215 = vor.u32 1.1754944e-38, %v3214
    %v3216 = vsel %vm3213, %v3215, %v3211
    %v3217 = vmul.f32 1.0, %v3216
    %v3218 = vrcp.pop %v3188
    %v3219 = vmul.f32 %v3188, %v3218
    %v3220 = vsub.f32 1.0, %v3219
    %v3221 = vmul.f32 %v3218, %v3220
    %v3222 = vadd.f32 %v3218, %v3221
    %vm3223 = vweird.f32 %v3188
    %vm3224 = vweird.f32 %v3218
    %vm3225 = vmor %vm3223, %vm3224
    %v3226 = vsel %vm3225, %v3218, %v3222
    %v3227 = vand.u32 2147483647, %v3188
    %vm3228 = vcmp.eq.f32.partialorder %v3227, 8.507059e+37
    %v3229 = vand.u32 %v3188, 2147483648
    %v3230 = vor.u32 1.1754944e-38, %v3229
    %v3231 = vsel %vm3228, %v3230, %v3226
    %v3232 = vmul.f32 1.0, %v3231
    %v3233 = vrcp.pop %v3189
    %v3234 = vmul.f32 %v3189, %v3233
    %v3235 = vsub.f32 1.0, %v3234
    %v3236 = vmul.f32 %v3233, %v3235
    %v3237 = vadd.f32 %v3233, %v3236
    %vm3238 = vweird.f32 %v3189
    %vm3239 = vweird.f32 %v3233
    %vm3240 = vmor %vm3238, %vm3239
    %v3241 = vsel %vm3240, %v3233, %v3237
    %v3242 = vand.u32 2147483647, %v3189
    %vm3243 = vcmp.eq.f32.partialorder %v3242, 8.507059e+37
    %v3244 = vand.u32 %v3189, 2147483648
    %v3245 = vor.u32 1.1754944e-38, %v3244
    %v3246 = vsel %vm3243, %v3245, %v3241
    %v3247 = vmul.f32 1.0, %v3246
    %v3248 = vrcp.pop %v3190
    %v3249 = vmul.f32 %v3190, %v3248
    %v3250 = vsub.f32 1.0, %v3249
    %v3251 = vmul.f32 %v3248, %v3250
    %v3252 = vadd.f32 %v3248, %v3251
    %vm3253 = vweird.f32 %v3190
    %vm3254 = vweird.f32 %v3248
    %vm3255 = vmor %vm3253, %vm3254
    %v3256 = vsel %vm3255, %v3248, %v3252
    %v3257 = vand.u32 2147483647, %v3190
    %vm3258 = vcmp.eq.f32.partialorder %v3257, 8.507059e+37
    %v3259 = vand.u32 %v3190, 2147483648
    %v3260 = vor.u32 1.1754944e-38, %v3259
    %v3261 = vsel %vm3258, %v3260, %v3256
    %v3262 = vmul.f32 1.0, %v3261
    %v3263 = vrcp.pop %v3191
    %v3264 = vmul.f32 %v3191, %v3263
    %v3265 = vsub.f32 1.0, %v3264
    %v3266 = vmul.f32 %v3263, %v3265
    %v3267 = vadd.f32 %v3263, %v3266
    %vm3268 = vweird.f32 %v3191
    %vm3269 = vweird.f32 %v3263
    %vm3270 = vmor %vm3268, %vm3269
    %v3271 = vsel %vm3270, %v3263, %v3267
    %v3272 = vand.u32 2147483647, %v3191
    %vm3273 = vcmp.eq.f32.partialorder %v3272, 8.507059e+37
    %v3274 = vand.u32 %v3191, 2147483648
    %v3275 = vor.u32 1.1754944e-38, %v3274
    %v3276 = vsel %vm3273, %v3275, %v3271
    %v3277 = vmul.f32 1.0, %v3276
    %v3278 = vrcp.pop %v3192
    %v3279 = vmul.f32 %v3192, %v3278
    %v3280 = vsub.f32 1.0, %v3279
    %v3281 = vmul.f32 %v3278, %v3280
    %v3282 = vadd.f32 %v3278, %v3281
    %vm3283 = vweird.f32 %v3192
    %vm3284 = vweird.f32 %v3278
    %vm3285 = vmor %vm3283, %vm3284
    %v3286 = vsel %vm3285, %v3278, %v3282
    %v3287 = vand.u32 2147483647, %v3192
    %vm3288 = vcmp.eq.f32.partialorder %v3287, 8.507059e+37
    %v3289 = vand.u32 %v3192, 2147483648
    %v3290 = vor.u32 1.1754944e-38, %v3289
    %v3291 = vsel %vm3288, %v3290, %v3286
    %v3292 = vmul.f32 1.0, %v3291
    %v3293 = vrcp.pop %v3193
    %v3294 = vmul.f32 %v3193, %v3293
    %v3295 = vsub.f32 1.0, %v3294
    %v3296 = vmul.f32 %v3293, %v3295
    %v3297 = vadd.f32 %v3293, %v3296
    %vm3298 = vweird.f32 %v3193
    %vm3299 = vweird.f32 %v3293
    %vm3300 = vmor %vm3298, %vm3299
    %v3301 = vsel %vm3300, %v3293, %v3297
    %v3302 = vand.u32 2147483647, %v3193
    %vm3303 = vcmp.eq.f32.partialorder %v3302, 8.507059e+37
    %v3304 = vand.u32 %v3193, 2147483648
    %v3305 = vor.u32 1.1754944e-38, %v3304
    %v3306 = vsel %vm3303, %v3305, %v3301
    %v3307 = vmul.f32 1.0, %v3306
    %v3308 = vrcp.pop %v3194
    %v3309 = vmul.f32 %v3194, %v3308
    %v3310 = vsub.f32 1.0, %v3309
    %v3311 = vmul.f32 %v3308, %v3310
    %v3312 = vadd.f32 %v3308, %v3311
    %vm3313 = vweird.f32 %v3194
    %vm3314 = vweird.f32 %v3308
    %vm3315 = vmor %vm3313, %vm3314
    %v3316 = vsel %vm3315, %v3308, %v3312
    %v3317 = vand.u32 2147483647, %v3194
    %vm3318 = vcmp.eq.f32.partialorder %v3317, 8.507059e+37
    %v3319 = vand.u32 %v3194, 2147483648
    %v3320 = vor.u32 1.1754944e-38, %v3319
    %v3321 = vsel %vm3318, %v3320, %v3316
    %v3322 = vmul.f32 1.0, %v3321
    %v3323 = vrcp.pop %v3195
    %v3324 = vmul.f32 %v3195, %v3323
    %v3325 = vsub.f32 1.0, %v3324
    %v3326 = vmul.f32 %v3323, %v3325
    %v3327 = vadd.f32 %v3323, %v3326
    %vm3328 = vweird.f32 %v3195
    %vm3329 = vweird.f32 %v3323
    %vm3330 = vmor %vm3328, %vm3329
    %v3331 = vsel %vm3330, %v3323, %v3327
    %v3332 = vand.u32 2147483647, %v3195
    %vm3333 = vcmp.eq.f32.partialorder %v3332, 8.507059e+37
    %v3334 = vand.u32 %v3195, 2147483648
    %v3335 = vor.u32 1.1754944e-38, %v3334
    %v3336 = vsel %vm3333, %v3335, %v3331
    %v3337 = vmul.f32 1.0, %v3336
    %v3338 = vrcp.pop %v3196
    %v3339 = vmul.f32 %v3196, %v3338
    %v3340 = vsub.f32 1.0, %v3339
    %v3341 = vmul.f32 %v3338, %v3340
    %v3342 = vadd.f32 %v3338, %v3341
    %vm3343 = vweird.f32 %v3196
    %vm3344 = vweird.f32 %v3338
    %vm3345 = vmor %vm3343, %vm3344
    %v3346 = vsel %vm3345, %v3338, %v3342
    %v3347 = vand.u32 2147483647, %v3196
    %vm3348 = vcmp.eq.f32.partialorder %v3347, 8.507059e+37
    %v3349 = vand.u32 %v3196, 2147483648
    %v3350 = vor.u32 1.1754944e-38, %v3349
    %v3351 = vsel %vm3348, %v3350, %v3346
    %v3352 = vmul.f32 1.0, %v3351
    %v3353 = vrcp.pop %v3197
    %v3354 = vmul.f32 %v3197, %v3353
    %v3355 = vsub.f32 1.0, %v3354
    %v3356 = vmul.f32 %v3353, %v3355
    %v3357 = vadd.f32 %v3353, %v3356
    %vm3358 = vweird.f32 %v3197
    %vm3359 = vweird.f32 %v3353
    %vm3360 = vmor %vm3358, %vm3359
    %v3361 = vsel %vm3360, %v3353, %v3357
    %v3362 = vand.u32 2147483647, %v3197
    %vm3363 = vcmp.eq.f32.partialorder %v3362, 8.507059e+37
    %v3364 = vand.u32 %v3197, 2147483648
    %v3365 = vor.u32 1.1754944e-38, %v3364
    %v3366 = vsel %vm3363, %v3365, %v3361
    %v3367 = vmul.f32 1.0, %v3366
    %v3368 = vrcp.pop %v3198
    %v3369 = vmul.f32 %v3198, %v3368
    %v3370 = vsub.f32 1.0, %v3369
    %v3371 = vmul.f32 %v3368, %v3370
    %v3372 = vadd.f32 %v3368, %v3371
    %vm3373 = vweird.f32 %v3198
    %vm3374 = vweird.f32 %v3368
    %vm3375 = vmor %vm3373, %vm3374
    %v3376 = vsel %vm3375, %v3368, %v3372
    %v3377 = vand.u32 2147483647, %v3198
    %vm3378 = vcmp.eq.f32.partialorder %v3377, 8.507059e+37
    %v3379 = vand.u32 %v3198, 2147483648
    %v3380 = vor.u32 1.1754944e-38, %v3379
    %v3381 = vsel %vm3378, %v3380, %v3376
    %v3382 = vmul.f32 1.0, %v3381
    %v3383 = vrcp.pop %v3199
    %v3384 = vmul.f32 %v3199, %v3383
    %v3385 = vsub.f32 1.0, %v3384
    %v3386 = vmul.f32 %v3383, %v3385
    %v3387 = vadd.f32 %v3383, %v3386
    %vm3388 = vweird.f32 %v3199
    %vm3389 = vweird.f32 %v3383
    %vm3390 = vmor %vm3388, %vm3389
    %v3391 = vsel %vm3390, %v3383, %v3387
    %v3392 = vand.u32 2147483647, %v3199
    %vm3393 = vcmp.eq.f32.partialorder %v3392, 8.507059e+37
    %v3394 = vand.u32 %v3199, 2147483648
    %v3395 = vor.u32 1.1754944e-38, %v3394
    %v3396 = vsel %vm3393, %v3395, %v3391
    %v3397 = vmul.f32 1.0, %v3396
    %v3398 = vrcp.pop %v3200
    %v3399 = vmul.f32 %v3200, %v3398
    %v3400 = vsub.f32 1.0, %v3399
    %v3401 = vmul.f32 %v3398, %v3400
    %v3402 = vadd.f32 %v3398, %v3401
    %vm3403 = vweird.f32 %v3200
    %vm3404 = vweird.f32 %v3398
    %vm3405 = vmor %vm3403, %vm3404
    %v3406 = vsel %vm3405, %v3398, %v3402
    %v3407 = vand.u32 2147483647, %v3200
    %vm3408 = vcmp.eq.f32.partialorder %v3407, 8.507059e+37
    %v3409 = vand.u32 %v3200, 2147483648
    %v3410 = vor.u32 1.1754944e-38, %v3409
    %v3411 = vsel %vm3408, %v3410, %v3406
    %v3412 = vmul.f32 1.0, %v3411
    %v3413 = vrcp.pop %v3201
    %v3414 = vmul.f32 %v3201, %v3413
    %v3415 = vsub.f32 1.0, %v3414
    %v3416 = vmul.f32 %v3413, %v3415
    %v3417 = vadd.f32 %v3413, %v3416
    %vm3418 = vweird.f32 %v3201
    %vm3419 = vweird.f32 %v3413
    %vm3420 = vmor %vm3418, %vm3419
    %v3421 = vsel %vm3420, %v3413, %v3417
    %v3422 = vand.u32 2147483647, %v3201
    %vm3423 = vcmp.eq.f32.partialorder %v3422, 8.507059e+37
    %v3424 = vand.u32 %v3201, 2147483648
    %v3425 = vor.u32 1.1754944e-38, %v3424
    %v3426 = vsel %vm3423, %v3425, %v3421
    %v3427 = vmul.f32 1.0, %v3426
    %v3428 = vrcp.pop %v3202
    %v3429 = vmul.f32 %v3202, %v3428
    %v3430 = vsub.f32 1.0, %v3429
    %v3431 = vmul.f32 %v3428, %v3430
    %v3432 = vadd.f32 %v3428, %v3431
    %vm3433 = vweird.f32 %v3202
    %vm3434 = vweird.f32 %v3428
    %vm3435 = vmor %vm3433, %vm3434
    %v3436 = vsel %vm3435, %v3428, %v3432
    %v3437 = vand.u32 2147483647, %v3202
    %vm3438 = vcmp.eq.f32.partialorder %v3437, 8.507059e+37
    %v3439 = vand.u32 %v3202, 2147483648
    %v3440 = vor.u32 1.1754944e-38, %v3439
    %v3441 = vsel %vm3438, %v3440, %v3436
    %v3442 = vmul.f32 1.0, %v3441
    %v3443 = vmul.f32 %v3217, %v24
    %v3444 = vmul.f32 %v3232, %v25
    %v3445 = vmul.f32 %v3247, %v26
    %v3446 = vmul.f32 %v3262, %v27
    %v3447 = vmul.f32 %v3277, %v28
    %v3448 = vmul.f32 %v3292, %v29
    %v3449 = vmul.f32 %v3307, %v30
    %v3450 = vmul.f32 %v3322, %v31
    %v3451 = vmul.f32 %v3337, %v32
    %v3452 = vmul.f32 %v3352, %v33
    %v3453 = vmul.f32 %v3367, %v34
    %v3454 = vmul.f32 %v3382, %v35
    %v3455 = vmul.f32 %v3397, %v36
    %v3456 = vmul.f32 %v3412, %v37
    %v3457 = vmul.f32 %v3427, %v38
    %v3458 = vmul.f32 %v3442, %v39
    %v3459 = vsel %vm54, %v3443, 0.0
    %v3460 = vsel %vm54, %v3444, 0.0
    %v3461 = vadd.f32 %v3459, %v3460
    %v3462 = vsel %vm54, %v3445, 0.0
    %v3463 = vadd.f32 %v3461, %v3462
    %v3464 = vsel %vm54, %v3446, 0.0
    %v3465 = vadd.f32 %v3463, %v3464
    %v3466 = vsel %vm54, %v3447, 0.0
    %v3467 = vadd.f32 %v3465, %v3466
    %v3468 = vsel %vm54, %v3448, 0.0
    %v3469 = vadd.f32 %v3467, %v3468
    %v3470 = vsel %vm54, %v3449, 0.0
    %v3471 = vadd.f32 %v3469, %v3470
    %v3472 = vsel %vm54, %v3450, 0.0
    %v3473 = vadd.f32 %v3471, %v3472
    %v3474 = vrot.slane %v3473, 4
    %v3475 = vadd.f32 %v3473, %v3474
    %v3476 = vrot.slane %v3475, 2
    %v3477 = vadd.f32 %v3475, %v3476
    %v3478 = vrot.slane %v3477, 1
    %v3479 = vadd.f32 %v3477, %v3478
    %v3480 = vsel %vm54, %v3451, 0.0
    %v3481 = vsel %vm54, %v3452, 0.0
    %v3482 = vadd.f32 %v3480, %v3481
    %v3483 = vsel %vm54, %v3453, 0.0
    %v3484 = vadd.f32 %v3482, %v3483
    %v3485 = vsel %vm54, %v3454, 0.0
    %v3486 = vadd.f32 %v3484, %v3485
    %v3487 = vsel %vm54, %v3455, 0.0
    %v3488 = vadd.f32 %v3486, %v3487
    %v3489 = vsel %vm54, %v3456, 0.0
    %v3490 = vadd.f32 %v3488, %v3489
    %v3491 = vsel %vm54, %v3457, 0.0
    %v3492 = vadd.f32 %v3490, %v3491
    %v3493 = vsel %vm54, %v3458, 0.0
    %v3494 = vadd.f32 %v3492, %v3493
    %v3495 = vrot.slane %v3494, 4
    %v3496 = vadd.f32 %v3494, %v3495
    %v3497 = vrot.slane %v3496, 2
    %v3498 = vadd.f32 %v3496, %v3497
    %v3499 = vrot.slane %v3498, 1
    %v3500 = vadd.f32 %v3498, %v3499
    %v3503 = vsel %vm751, %v3500, %v3479
    %s3505 = scalar_lea.vmem [#allocation3], 8
    %3506 = vst.msk [vmem:[%s3505] sm:$0x3] %vm120, %v3503
    %v3523 = vperm.slane %v3217, %v772
    %v3524 = vperm.slane %v3232, %v774
    %v3525 = vsel %vm776, %v3524, %v3523
    %v3526 = vperm.slane %v3247, %v778
    %v3527 = vsel %vm780, %v3526, %v3525
    %v3528 = vperm.slane %v3262, %v782
    %v3529 = vsel %vm784, %v3528, %v3527
    %v3530 = vperm.slane %v3277, %v786
    %v3531 = vsel %vm788, %v3530, %v3529
    %v3532 = vperm.slane %v3292, %v790
    %v3533 = vsel %vm792, %v3532, %v3531
    %v3534 = vperm.slane %v3307, %v794
    %v3535 = vsel %vm796, %v3534, %v3533
    %v3536 = vperm.slane %v3322, %v798
    %v3537 = vsel %vm800, %v3536, %v3535
    %v3538 = vperm.slane %v3337, %v772
    %v3539 = vperm.slane %v3352, %v774
    %v3540 = vsel %vm776, %v3539, %v3538
    %v3541 = vperm.slane %v3367, %v778
    %v3542 = vsel %vm780, %v3541, %v3540
    %v3543 = vperm.slane %v3382, %v782
    %v3544 = vsel %vm784, %v3543, %v3542
    %v3545 = vperm.slane %v3397, %v786
    %v3546 = vsel %vm788, %v3545, %v3544
    %v3547 = vperm.slane %v3412, %v790
    %v3548 = vsel %vm792, %v3547, %v3546
    %v3549 = vperm.slane %v3427, %v794
    %v3550 = vsel %vm796, %v3549, %v3548
    %v3551 = vperm.slane %v3442, %v798
    %v3552 = vsel %vm800, %v3551, %v3550
    %v3553 = vsel %vm751, %v3552, %v3537
    %s3555 = scalar_lea.vmem [#allocation5], 8
    %3556 = vst.msk [vmem:[%s3555] sm:$0x3] %vm819, %v3553
    %s3557 = scalar_lea.vmem %s0, 10
    %v3558 = vld [vmem:[%s3557] sm:$0x3]
    %v3559 = vsel %vm54, %v2937, 0
    %3561 = vmatpush.msra.mxu0 0.0
    %3562 = vmatpush.msra.mxu0 0.0
    %3563 = vmatpush.msra.mxu0 0.0
    %3564 = vmatpush.msra.mxu0 0.0
    %3565 = vmatpush.msra.mxu0 0.0
    %3566 = vmatpush.msra.mxu0 0.0
    %3567 = vmatpush.msra.mxu0 0.0
    %3568 = vmatpush.msra.mxu0 0.0
    %3569 = vmatpush.msra.mxu0 0.0
    %3570 = vmatpush.msra.mxu0 0.0
    %3571 = vmatpush.msra.mxu0 0.0
    %3572 = vmatpush.msra.mxu0 0.0
    %3573 = vmatpush.msra.mxu0 %v43
    %3574 = vmatpush.msra.mxu0 %v42
    %3575 = vmatpush.msra.mxu0 %v41
    %3576 = vmatpush.msra.mxu0 %v40
    %3577 = vmatmul.f32.gmra.mxu0 %v3559
    %v3578 = vpop.f32.mrf.mxu0
    %v3579 = vadd.f32 0.0, %v3578
    %3580 = vdwg.mxu0
    %v3581 = vadd.f32 %v3558, %v3579
    %v3582 = vxor.u32 %v3581, 2147483648
    %v3583 = vmul.f32 %v3582, 1.442695
    %v3584 = vpow.pop %v3583
    %v3585 = vadd.f32 %v3584, 1.0
    %v3586 = vrcp.pop %v3585
    %v3587 = vmul.f32 %v3585, %v3586
    %v3588 = vsub.f32 1.0, %v3587
    %v3589 = vmul.f32 %v3586, %v3588
    %v3590 = vadd.f32 %v3586, %v3589
    %vm3591 = vweird.f32 %v3585
    %vm3592 = vweird.f32 %v3586
    %vm3593 = vmor %vm3591, %vm3592
    %v3594 = vsel %vm3593, %v3586, %v3590
    %v3595 = vand.u32 2147483647, %v3585
    %vm3596 = vcmp.eq.f32.partialorder %v3595, 8.507059e+37
    %v3597 = vand.u32 %v3585, 2147483648
    %v3598 = vor.u32 1.1754944e-38, %v3597
    %v3599 = vsel %vm3596, %v3598, %v3594
    %v3600 = vmul.f32 1.0, %v3599
    %v3601 = vtanh.pop %v3581
    %v3602 = vmul.f32 %v3600, %v2928
    %3604 = vrot.lane.b32.xlu0 %v3601, 64
    %v3605 = vpop.permute.xlu0 %3604
    %v3607 = vmul.f32 %v3600, %v3605
    %3609 = vrot.lane.b32.xlu0 %v3607, 32
    %v3610 = vpop.permute.xlu0 %3609
    %v3612 = vadd.f32 %v3602, %v3610
    %v3613 = vtanh.pop %v3612
    %3615 = vrot.lane.b32.xlu0 %v3613, 64
    %v3616 = vpop.permute.xlu0 %3615
    %v3618 = vmul.f32 %v3600, %v3616
    %3620 = vrot.lane.b32.xlu0 %v3618, 32
    %v3621 = vpop.permute.xlu0 %3620
    %3623 = vst.msk [vmem:[#allocation2] sm:$0x3] %vm120, %v3621
    %3624 = vrot.lane.b32.xlu0 %v3004, 64
    %v3625 = vpop.permute.xlu0 %3624
    %3627 = vst.msk [vmem:[#allocation2] sm:$0x3] %vm122, %v3625
    %v3628 = vld [vmem:[#allocation2] sm:$0x3]
    %v3630 = vsel %vm128, %v3628, 0
    %3632 = vmatpush.msra.mxu0 0.0
    %3633 = vmatpush.msra.mxu0 0.0
    %3634 = vmatpush.msra.mxu0 0.0
    %3635 = vmatpush.msra.mxu0 0.0
    %3636 = vmatpush.msra.mxu0 0.0
    %3637 = vmatpush.msra.mxu0 0.0
    %3638 = vmatpush.msra.mxu0 0.0
    %3639 = vmatpush.msra.mxu0 0.0
    %3640 = vmatpush.msra.mxu0 %v51
    %3641 = vmatpush.msra.mxu0 %v50
    %3642 = vmatpush.msra.mxu0 %v49
    %3643 = vmatpush.msra.mxu0 %v48
    %3644 = vmatpush.msra.mxu0 %v47
    %3645 = vmatpush.msra.mxu0 %v46
    %3646 = vmatpush.msra.mxu0 %v45
    %3647 = vmatpush.msra.mxu0 %v44
    %3648 = vmatmul.f32.gmra.mxu0 %v3630
    %v3649 = vpop.f32.mrf.mxu0
    %v3650 = vadd.f32 %v126, %v3649
    %3651 = vdwg.mxu0
    %v3652 = vxor.u32 %v3650, 2147483648
    %v3653 = vmul.f32 %v3652, 1.442695
    %v3654 = vpow.pop %v3653
    %v3655 = vadd.f32 %v3654, 1.0
    %v3656 = vrcp.pop %v3655
    %v3657 = vmul.f32 %v3655, %v3656
    %v3658 = vsub.f32 1.0, %v3657
    %v3659 = vmul.f32 %v3656, %v3658
    %v3660 = vadd.f32 %v3656, %v3659
    %vm3661 = vweird.f32 %v3655
    %vm3662 = vweird.f32 %v3656
    %vm3663 = vmor %vm3661, %vm3662
    %v3664 = vsel %vm3663, %v3656, %v3660
    %v3665 = vand.u32 2147483647, %v3655
    %vm3666 = vcmp.eq.f32.partialorder %v3665, 8.507059e+37
    %v3667 = vand.u32 %v3655, 2147483648
    %v3668 = vor.u32 1.1754944e-38, %v3667
    %v3669 = vsel %vm3666, %v3668, %v3664
    %v3670 = vmul.f32 1.0, %v3669
    %v3671 = vtanh.pop %v3650
    %v3672 = vmul.f32 %v3670, %v2998
    %3674 = vrot.lane.b32.xlu0 %v3671, 64
    %v3675 = vpop.permute.xlu0 %3674
    %v3677 = vmul.f32 %v3670, %v3675
    %3679 = vrot.lane.b32.xlu0 %v3677, 32
    %v3680 = vpop.permute.xlu0 %3679
    %v3682 = vadd.f32 %v3672, %v3680
    %v3683 = vtanh.pop %v3682
    %3685 = vrot.lane.b32.xlu0 %v3683, 64
    %v3686 = vpop.permute.xlu0 %3685
    %v3688 = vmul.f32 %v3670, %v3686
    %v3690 = vrot.slane %v3688, 1
    %v3691 = vperm.slane %v3688, 0
    %v3692 = vperm.slane %v3690, 0
    %v3695 = vmul.f32 %v3691, %v212
    %v3696 = vmul.f32 %v3691, %v214
    %v3697 = vmul.f32 %v3691, %v216
    %v3698 = vmul.f32 %v3691, %v218
    %v3699 = vmul.f32 %v3691, %v220
    %v3700 = vmul.f32 %v3691, %v222
    %v3701 = vmul.f32 %v3691, %v224
    %v3702 = vmul.f32 %v3691, %v226
    %v3703 = vmul.f32 %v3692, %v228
    %v3704 = vmul.f32 %v3692, %v230
    %v3705 = vmul.f32 %v3692, %v232
    %v3706 = vmul.f32 %v3692, %v234
    %v3707 = vmul.f32 %v3692, %v236
    %v3708 = vmul.f32 %v3692, %v238
    %v3709 = vmul.f32 %v3692, %v240
    %v3710 = vmul.f32 %v3692, %v242
    %3727 = vrot.lane.b32.xlu0 %v3695, 32
    %v3728 = vpop.permute.xlu0 %3727
    %3729 = vrot.lane.b32.xlu0 %v3696, 32
    %v3730 = vpop.permute.xlu0 %3729
    %3731 = vrot.lane.b32.xlu0 %v3697, 32
    %v3732 = vpop.permute.xlu0 %3731
    %3733 = vrot.lane.b32.xlu0 %v3698, 32
    %v3734 = vpop.permute.xlu0 %3733
    %3735 = vrot.lane.b32.xlu0 %v3699, 32
    %v3736 = vpop.permute.xlu0 %3735
    %3737 = vrot.lane.b32.xlu0 %v3700, 32
    %v3738 = vpop.permute.xlu0 %3737
    %3739 = vrot.lane.b32.xlu0 %v3701, 32
    %v3740 = vpop.permute.xlu0 %3739
    %3741 = vrot.lane.b32.xlu0 %v3702, 32
    %v3742 = vpop.permute.xlu0 %3741
    %3743 = vrot.lane.b32.xlu0 %v3703, 32
    %v3744 = vpop.permute.xlu0 %3743
    %3745 = vrot.lane.b32.xlu0 %v3704, 32
    %v3746 = vpop.permute.xlu0 %3745
    %3747 = vrot.lane.b32.xlu0 %v3705, 32
    %v3748 = vpop.permute.xlu0 %3747
    %3749 = vrot.lane.b32.xlu0 %v3706, 32
    %v3750 = vpop.permute.xlu0 %3749
    %3751 = vrot.lane.b32.xlu0 %v3707, 32
    %v3752 = vpop.permute.xlu0 %3751
    %3753 = vrot.lane.b32.xlu0 %v3708, 32
    %v3754 = vpop.permute.xlu0 %3753
    %3755 = vrot.lane.b32.xlu0 %v3709, 32
    %v3756 = vpop.permute.xlu0 %3755
    %3757 = vrot.lane.b32.xlu0 %v3710, 32
    %v3758 = vpop.permute.xlu0 %3757
    %v3775 = vsel %vm54, %v3728, 0.0
    %3776 = vadd.xlane.f32.xlu0 %v3775
    %v3777 = vpop.xlane.xlu0 %3776
    %v3778 = vsel %vm54, %v3730, 0.0
    %3779 = vadd.xlane.f32.xlu0 %v3778
    %v3780 = vpop.xlane.xlu0 %3779
    %v3781 = vsel %vm54, %v3732, 0.0
    %3782 = vadd.xlane.f32.xlu0 %v3781
    %v3783 = vpop.xlane.xlu0 %3782
    %v3784 = vsel %vm54, %v3734, 0.0
    %3785 = vadd.xlane.f32.xlu0 %v3784
    %v3786 = vpop.xlane.xlu0 %3785
    %v3787 = vsel %vm54, %v3736, 0.0
    %3788 = vadd.xlane.f32.xlu0 %v3787
    %v3789 = vpop.xlane.xlu0 %3788
    %v3790 = vsel %vm54, %v3738, 0.0
    %3791 = vadd.xlane.f32.xlu0 %v3790
    %v3792 = vpop.xlane.xlu0 %3791
    %v3793 = vsel %vm54, %v3740, 0.0
    %3794 = vadd.xlane.f32.xlu0 %v3793
    %v3795 = vpop.xlane.xlu0 %3794
    %v3796 = vsel %vm54, %v3742, 0.0
    %3797 = vadd.xlane.f32.xlu0 %v3796
    %v3798 = vpop.xlane.xlu0 %3797
    %v3799 = vsel %vm54, %v3744, 0.0
    %3800 = vadd.xlane.f32.xlu0 %v3799
    %v3801 = vpop.xlane.xlu0 %3800
    %v3802 = vsel %vm54, %v3746, 0.0
    %3803 = vadd.xlane.f32.xlu0 %v3802
    %v3804 = vpop.xlane.xlu0 %3803
    %v3805 = vsel %vm54, %v3748, 0.0
    %3806 = vadd.xlane.f32.xlu0 %v3805
    %v3807 = vpop.xlane.xlu0 %3806
    %v3808 = vsel %vm54, %v3750, 0.0
    %3809 = vadd.xlane.f32.xlu0 %v3808
    %v3810 = vpop.xlane.xlu0 %3809
    %v3811 = vsel %vm54, %v3752, 0.0
    %3812 = vadd.xlane.f32.xlu0 %v3811
    %v3813 = vpop.xlane.xlu0 %3812
    %v3814 = vsel %vm54, %v3754, 0.0
    %3815 = vadd.xlane.f32.xlu0 %v3814
    %v3816 = vpop.xlane.xlu0 %3815
    %v3817 = vsel %vm54, %v3756, 0.0
    %3818 = vadd.xlane.f32.xlu0 %v3817
    %v3819 = vpop.xlane.xlu0 %3818
    %v3820 = vsel %vm54, %v3758, 0.0
    %3821 = vadd.xlane.f32.xlu0 %v3820
    %v3822 = vpop.xlane.xlu0 %3821
    %v3823 = vxor.u32 %v3777, 2147483648
    %v3824 = vxor.u32 %v3780, 2147483648
    %v3825 = vxor.u32 %v3783, 2147483648
    %v3826 = vxor.u32 %v3786, 2147483648
    %v3827 = vxor.u32 %v3789, 2147483648
    %v3828 = vxor.u32 %v3792, 2147483648
    %v3829 = vxor.u32 %v3795, 2147483648
    %v3830 = vxor.u32 %v3798, 2147483648
    %v3831 = vxor.u32 %v3801, 2147483648
    %v3832 = vxor.u32 %v3804, 2147483648
    %v3833 = vxor.u32 %v3807, 2147483648
    %v3834 = vxor.u32 %v3810, 2147483648
    %v3835 = vxor.u32 %v3813, 2147483648
    %v3836 = vxor.u32 %v3816, 2147483648
    %v3837 = vxor.u32 %v3819, 2147483648
    %v3838 = vxor.u32 %v3822, 2147483648
    %v3839 = vmul.f32 %v3823, 1.442695
    %v3840 = vpow.pop %v3839
    %v3841 = vmul.f32 %v3824, 1.442695
    %v3842 = vpow.pop %v3841
    %v3843 = vmul.f32 %v3825, 1.442695
    %v3844 = vpow.pop %v3843
    %v3845 = vmul.f32 %v3826, 1.442695
    %v3846 = vpow.pop %v3845
    %v3847 = vmul.f32 %v3827, 1.442695
    %v3848 = vpow.pop %v3847
    %v3849 = vmul.f32 %v3828, 1.442695
    %v3850 = vpow.pop %v3849
    %v3851 = vmul.f32 %v3829, 1.442695
    %v3852 = vpow.pop %v3851
    %v3853 = vmul.f32 %v3830, 1.442695
    %v3854 = vpow.pop %v3853
    %v3855 = vmul.f32 %v3831, 1.442695
    %v3856 = vpow.pop %v3855
    %v3857 = vmul.f32 %v3832, 1.442695
    %v3858 = vpow.pop %v3857
    %v3859 = vmul.f32 %v3833, 1.442695
    %v3860 = vpow.pop %v3859
    %v3861 = vmul.f32 %v3834, 1.442695
    %v3862 = vpow.pop %v3861
    %v3863 = vmul.f32 %v3835, 1.442695
    %v3864 = vpow.pop %v3863
    %v3865 = vmul.f32 %v3836, 1.442695
    %v3866 = vpow.pop %v3865
    %v3867 = vmul.f32 %v3837, 1.442695
    %v3868 = vpow.pop %v3867
    %v3869 = vmul.f32 %v3838, 1.442695
    %v3870 = vpow.pop %v3869
    %v3871 = vadd.f32 %v3840, 1.0
    %v3872 = vadd.f32 %v3842, 1.0
    %v3873 = vadd.f32 %v3844, 1.0
    %v3874 = vadd.f32 %v3846, 1.0
    %v3875 = vadd.f32 %v3848, 1.0
    %v3876 = vadd.f32 %v3850, 1.0
    %v3877 = vadd.f32 %v3852, 1.0
    %v3878 = vadd.f32 %v3854, 1.0
    %v3879 = vadd.f32 %v3856, 1.0
    %v3880 = vadd.f32 %v3858, 1.0
    %v3881 = vadd.f32 %v3860, 1.0
    %v3882 = vadd.f32 %v3862, 1.0
    %v3883 = vadd.f32 %v3864, 1.0
    %v3884 = vadd.f32 %v3866, 1.0
    %v3885 = vadd.f32 %v3868, 1.0
    %v3886 = vadd.f32 %v3870, 1.0
    %v3887 = vrcp.pop %v3871
    %v3888 = vmul.f32 %v3871, %v3887
    %v3889 = vsub.f32 1.0, %v3888
    %v3890 = vmul.f32 %v3887, %v3889
    %v3891 = vadd.f32 %v3887, %v3890
    %vm3892 = vweird.f32 %v3871
    %vm3893 = vweird.f32 %v3887
    %vm3894 = vmor %vm3892, %vm3893
    %v3895 = vsel %vm3894, %v3887, %v3891
    %v3896 = vand.u32 2147483647, %v3871
    %vm3897 = vcmp.eq.f32.partialorder %v3896, 8.507059e+37
    %v3898 = vand.u32 %v3871, 2147483648
    %v3899 = vor.u32 1.1754944e-38, %v3898
    %v3900 = vsel %vm3897, %v3899, %v3895
    %v3901 = vmul.f32 1.0, %v3900
    %v3902 = vrcp.pop %v3872
    %v3903 = vmul.f32 %v3872, %v3902
    %v3904 = vsub.f32 1.0, %v3903
    %v3905 = vmul.f32 %v3902, %v3904
    %v3906 = vadd.f32 %v3902, %v3905
    %vm3907 = vweird.f32 %v3872
    %vm3908 = vweird.f32 %v3902
    %vm3909 = vmor %vm3907, %vm3908
    %v3910 = vsel %vm3909, %v3902, %v3906
    %v3911 = vand.u32 2147483647, %v3872
    %vm3912 = vcmp.eq.f32.partialorder %v3911, 8.507059e+37
    %v3913 = vand.u32 %v3872, 2147483648
    %v3914 = vor.u32 1.1754944e-38, %v3913
    %v3915 = vsel %vm3912, %v3914, %v3910
    %v3916 = vmul.f32 1.0, %v3915
    %v3917 = vrcp.pop %v3873
    %v3918 = vmul.f32 %v3873, %v3917
    %v3919 = vsub.f32 1.0, %v3918
    %v3920 = vmul.f32 %v3917, %v3919
    %v3921 = vadd.f32 %v3917, %v3920
    %vm3922 = vweird.f32 %v3873
    %vm3923 = vweird.f32 %v3917
    %vm3924 = vmor %vm3922, %vm3923
    %v3925 = vsel %vm3924, %v3917, %v3921
    %v3926 = vand.u32 2147483647, %v3873
    %vm3927 = vcmp.eq.f32.partialorder %v3926, 8.507059e+37
    %v3928 = vand.u32 %v3873, 2147483648
    %v3929 = vor.u32 1.1754944e-38, %v3928
    %v3930 = vsel %vm3927, %v3929, %v3925
    %v3931 = vmul.f32 1.0, %v3930
    %v3932 = vrcp.pop %v3874
    %v3933 = vmul.f32 %v3874, %v3932
    %v3934 = vsub.f32 1.0, %v3933
    %v3935 = vmul.f32 %v3932, %v3934
    %v3936 = vadd.f32 %v3932, %v3935
    %vm3937 = vweird.f32 %v3874
    %vm3938 = vweird.f32 %v3932
    %vm3939 = vmor %vm3937, %vm3938
    %v3940 = vsel %vm3939, %v3932, %v3936
    %v3941 = vand.u32 2147483647, %v3874
    %vm3942 = vcmp.eq.f32.partialorder %v3941, 8.507059e+37
    %v3943 = vand.u32 %v3874, 2147483648
    %v3944 = vor.u32 1.1754944e-38, %v3943
    %v3945 = vsel %vm3942, %v3944, %v3940
    %v3946 = vmul.f32 1.0, %v3945
    %v3947 = vrcp.pop %v3875
    %v3948 = vmul.f32 %v3875, %v3947
    %v3949 = vsub.f32 1.0, %v3948
    %v3950 = vmul.f32 %v3947, %v3949
    %v3951 = vadd.f32 %v3947, %v3950
    %vm3952 = vweird.f32 %v3875
    %vm3953 = vweird.f32 %v3947
    %vm3954 = vmor %vm3952, %vm3953
    %v3955 = vsel %vm3954, %v3947, %v3951
    %v3956 = vand.u32 2147483647, %v3875
    %vm3957 = vcmp.eq.f32.partialorder %v3956, 8.507059e+37
    %v3958 = vand.u32 %v3875, 2147483648
    %v3959 = vor.u32 1.1754944e-38, %v3958
    %v3960 = vsel %vm3957, %v3959, %v3955
    %v3961 = vmul.f32 1.0, %v3960
    %v3962 = vrcp.pop %v3876
    %v3963 = vmul.f32 %v3876, %v3962
    %v3964 = vsub.f32 1.0, %v3963
    %v3965 = vmul.f32 %v3962, %v3964
    %v3966 = vadd.f32 %v3962, %v3965
    %vm3967 = vweird.f32 %v3876
    %vm3968 = vweird.f32 %v3962
    %vm3969 = vmor %vm3967, %vm3968
    %v3970 = vsel %vm3969, %v3962, %v3966
    %v3971 = vand.u32 2147483647, %v3876
    %vm3972 = vcmp.eq.f32.partialorder %v3971, 8.507059e+37
    %v3973 = vand.u32 %v3876, 2147483648
    %v3974 = vor.u32 1.1754944e-38, %v3973
    %v3975 = vsel %vm3972, %v3974, %v3970
    %v3976 = vmul.f32 1.0, %v3975
    %v3977 = vrcp.pop %v3877
    %v3978 = vmul.f32 %v3877, %v3977
    %v3979 = vsub.f32 1.0, %v3978
    %v3980 = vmul.f32 %v3977, %v3979
    %v3981 = vadd.f32 %v3977, %v3980
    %vm3982 = vweird.f32 %v3877
    %vm3983 = vweird.f32 %v3977
    %vm3984 = vmor %vm3982, %vm3983
    %v3985 = vsel %vm3984, %v3977, %v3981
    %v3986 = vand.u32 2147483647, %v3877
    %vm3987 = vcmp.eq.f32.partialorder %v3986, 8.507059e+37
    %v3988 = vand.u32 %v3877, 2147483648
    %v3989 = vor.u32 1.1754944e-38, %v3988
    %v3990 = vsel %vm3987, %v3989, %v3985
    %v3991 = vmul.f32 1.0, %v3990
    %v3992 = vrcp.pop %v3878
    %v3993 = vmul.f32 %v3878, %v3992
    %v3994 = vsub.f32 1.0, %v3993
    %v3995 = vmul.f32 %v3992, %v3994
    %v3996 = vadd.f32 %v3992, %v3995
    %vm3997 = vweird.f32 %v3878
    %vm3998 = vweird.f32 %v3992
    %vm3999 = vmor %vm3997, %vm3998
    %v4000 = vsel %vm3999, %v3992, %v3996
    %v4001 = vand.u32 2147483647, %v3878
    %vm4002 = vcmp.eq.f32.partialorder %v4001, 8.507059e+37
    %v4003 = vand.u32 %v3878, 2147483648
    %v4004 = vor.u32 1.1754944e-38, %v4003
    %v4005 = vsel %vm4002, %v4004, %v4000
    %v4006 = vmul.f32 1.0, %v4005
    %v4007 = vrcp.pop %v3879
    %v4008 = vmul.f32 %v3879, %v4007
    %v4009 = vsub.f32 1.0, %v4008
    %v4010 = vmul.f32 %v4007, %v4009
    %v4011 = vadd.f32 %v4007, %v4010
    %vm4012 = vweird.f32 %v3879
    %vm4013 = vweird.f32 %v4007
    %vm4014 = vmor %vm4012, %vm4013
    %v4015 = vsel %vm4014, %v4007, %v4011
    %v4016 = vand.u32 2147483647, %v3879
    %vm4017 = vcmp.eq.f32.partialorder %v4016, 8.507059e+37
    %v4018 = vand.u32 %v3879, 2147483648
    %v4019 = vor.u32 1.1754944e-38, %v4018
    %v4020 = vsel %vm4017, %v4019, %v4015
    %v4021 = vmul.f32 1.0, %v4020
    %v4022 = vrcp.pop %v3880
    %v4023 = vmul.f32 %v3880, %v4022
    %v4024 = vsub.f32 1.0, %v4023
    %v4025 = vmul.f32 %v4022, %v4024
    %v4026 = vadd.f32 %v4022, %v4025
    %vm4027 = vweird.f32 %v3880
    %vm4028 = vweird.f32 %v4022
    %vm4029 = vmor %vm4027, %vm4028
    %v4030 = vsel %vm4029, %v4022, %v4026
    %v4031 = vand.u32 2147483647, %v3880
    %vm4032 = vcmp.eq.f32.partialorder %v4031, 8.507059e+37
    %v4033 = vand.u32 %v3880, 2147483648
    %v4034 = vor.u32 1.1754944e-38, %v4033
    %v4035 = vsel %vm4032, %v4034, %v4030
    %v4036 = vmul.f32 1.0, %v4035
    %v4037 = vrcp.pop %v3881
    %v4038 = vmul.f32 %v3881, %v4037
    %v4039 = vsub.f32 1.0, %v4038
    %v4040 = vmul.f32 %v4037, %v4039
    %v4041 = vadd.f32 %v4037, %v4040
    %vm4042 = vweird.f32 %v3881
    %vm4043 = vweird.f32 %v4037
    %vm4044 = vmor %vm4042, %vm4043
    %v4045 = vsel %vm4044, %v4037, %v4041
    %v4046 = vand.u32 2147483647, %v3881
    %vm4047 = vcmp.eq.f32.partialorder %v4046, 8.507059e+37
    %v4048 = vand.u32 %v3881, 2147483648
    %v4049 = vor.u32 1.1754944e-38, %v4048
    %v4050 = vsel %vm4047, %v4049, %v4045
    %v4051 = vmul.f32 1.0, %v4050
    %v4052 = vrcp.pop %v3882
    %v4053 = vmul.f32 %v3882, %v4052
    %v4054 = vsub.f32 1.0, %v4053
    %v4055 = vmul.f32 %v4052, %v4054
    %v4056 = vadd.f32 %v4052, %v4055
    %vm4057 = vweird.f32 %v3882
    %vm4058 = vweird.f32 %v4052
    %vm4059 = vmor %vm4057, %vm4058
    %v4060 = vsel %vm4059, %v4052, %v4056
    %v4061 = vand.u32 2147483647, %v3882
    %vm4062 = vcmp.eq.f32.partialorder %v4061, 8.507059e+37
    %v4063 = vand.u32 %v3882, 2147483648
    %v4064 = vor.u32 1.1754944e-38, %v4063
    %v4065 = vsel %vm4062, %v4064, %v4060
    %v4066 = vmul.f32 1.0, %v4065
    %v4067 = vrcp.pop %v3883
    %v4068 = vmul.f32 %v3883, %v4067
    %v4069 = vsub.f32 1.0, %v4068
    %v4070 = vmul.f32 %v4067, %v4069
    %v4071 = vadd.f32 %v4067, %v4070
    %vm4072 = vweird.f32 %v3883
    %vm4073 = vweird.f32 %v4067
    %vm4074 = vmor %vm4072, %vm4073
    %v4075 = vsel %vm4074, %v4067, %v4071
    %v4076 = vand.u32 2147483647, %v3883
    %vm4077 = vcmp.eq.f32.partialorder %v4076, 8.507059e+37
    %v4078 = vand.u32 %v3883, 2147483648
    %v4079 = vor.u32 1.1754944e-38, %v4078
    %v4080 = vsel %vm4077, %v4079, %v4075
    %v4081 = vmul.f32 1.0, %v4080
    %v4082 = vrcp.pop %v3884
    %v4083 = vmul.f32 %v3884, %v4082
    %v4084 = vsub.f32 1.0, %v4083
    %v4085 = vmul.f32 %v4082, %v4084
    %v4086 = vadd.f32 %v4082, %v4085
    %vm4087 = vweird.f32 %v3884
    %vm4088 = vweird.f32 %v4082
    %vm4089 = vmor %vm4087, %vm4088
    %v4090 = vsel %vm4089, %v4082, %v4086
    %v4091 = vand.u32 2147483647, %v3884
    %vm4092 = vcmp.eq.f32.partialorder %v4091, 8.507059e+37
    %v4093 = vand.u32 %v3884, 2147483648
    %v4094 = vor.u32 1.1754944e-38, %v4093
    %v4095 = vsel %vm4092, %v4094, %v4090
    %v4096 = vmul.f32 1.0, %v4095
    %v4097 = vrcp.pop %v3885
    %v4098 = vmul.f32 %v3885, %v4097
    %v4099 = vsub.f32 1.0, %v4098
    %v4100 = vmul.f32 %v4097, %v4099
    %v4101 = vadd.f32 %v4097, %v4100
    %vm4102 = vweird.f32 %v3885
    %vm4103 = vweird.f32 %v4097
    %vm4104 = vmor %vm4102, %vm4103
    %v4105 = vsel %vm4104, %v4097, %v4101
    %v4106 = vand.u32 2147483647, %v3885
    %vm4107 = vcmp.eq.f32.partialorder %v4106, 8.507059e+37
    %v4108 = vand.u32 %v3885, 2147483648
    %v4109 = vor.u32 1.1754944e-38, %v4108
    %v4110 = vsel %vm4107, %v4109, %v4105
    %v4111 = vmul.f32 1.0, %v4110
    %v4112 = vrcp.pop %v3886
    %v4113 = vmul.f32 %v3886, %v4112
    %v4114 = vsub.f32 1.0, %v4113
    %v4115 = vmul.f32 %v4112, %v4114
    %v4116 = vadd.f32 %v4112, %v4115
    %vm4117 = vweird.f32 %v3886
    %vm4118 = vweird.f32 %v4112
    %vm4119 = vmor %vm4117, %vm4118
    %v4120 = vsel %vm4119, %v4112, %v4116
    %v4121 = vand.u32 2147483647, %v3886
    %vm4122 = vcmp.eq.f32.partialorder %v4121, 8.507059e+37
    %v4123 = vand.u32 %v3886, 2147483648
    %v4124 = vor.u32 1.1754944e-38, %v4123
    %v4125 = vsel %vm4122, %v4124, %v4120
    %v4126 = vmul.f32 1.0, %v4125
    %v4127 = vmul.f32 %v3901, %v24
    %v4128 = vmul.f32 %v3916, %v25
    %v4129 = vmul.f32 %v3931, %v26
    %v4130 = vmul.f32 %v3946, %v27
    %v4131 = vmul.f32 %v3961, %v28
    %v4132 = vmul.f32 %v3976, %v29
    %v4133 = vmul.f32 %v3991, %v30
    %v4134 = vmul.f32 %v4006, %v31
    %v4135 = vmul.f32 %v4021, %v32
    %v4136 = vmul.f32 %v4036, %v33
    %v4137 = vmul.f32 %v4051, %v34
    %v4138 = vmul.f32 %v4066, %v35
    %v4139 = vmul.f32 %v4081, %v36
    %v4140 = vmul.f32 %v4096, %v37
    %v4141 = vmul.f32 %v4111, %v38
    %v4142 = vmul.f32 %v4126, %v39
    %v4143 = vsel %vm54, %v4127, 0.0
    %v4144 = vsel %vm54, %v4128, 0.0
    %v4145 = vadd.f32 %v4143, %v4144
    %v4146 = vsel %vm54, %v4129, 0.0
    %v4147 = vadd.f32 %v4145, %v4146
    %v4148 = vsel %vm54, %v4130, 0.0
    %v4149 = vadd.f32 %v4147, %v4148
    %v4150 = vsel %vm54, %v4131, 0.0
    %v4151 = vadd.f32 %v4149, %v4150
    %v4152 = vsel %vm54, %v4132, 0.0
    %v4153 = vadd.f32 %v4151, %v4152
    %v4154 = vsel %vm54, %v4133, 0.0
    %v4155 = vadd.f32 %v4153, %v4154
    %v4156 = vsel %vm54, %v4134, 0.0
    %v4157 = vadd.f32 %v4155, %v4156
    %v4158 = vrot.slane %v4157, 4
    %v4159 = vadd.f32 %v4157, %v4158
    %v4160 = vrot.slane %v4159, 2
    %v4161 = vadd.f32 %v4159, %v4160
    %v4162 = vrot.slane %v4161, 1
    %v4163 = vadd.f32 %v4161, %v4162
    %v4164 = vsel %vm54, %v4135, 0.0
    %v4165 = vsel %vm54, %v4136, 0.0
    %v4166 = vadd.f32 %v4164, %v4165
    %v4167 = vsel %vm54, %v4137, 0.0
    %v4168 = vadd.f32 %v4166, %v4167
    %v4169 = vsel %vm54, %v4138, 0.0
    %v4170 = vadd.f32 %v4168, %v4169
    %v4171 = vsel %vm54, %v4139, 0.0
    %v4172 = vadd.f32 %v4170, %v4171
    %v4173 = vsel %vm54, %v4140, 0.0
    %v4174 = vadd.f32 %v4172, %v4173
    %v4175 = vsel %vm54, %v4141, 0.0
    %v4176 = vadd.f32 %v4174, %v4175
    %v4177 = vsel %vm54, %v4142, 0.0
    %v4178 = vadd.f32 %v4176, %v4177
    %v4179 = vrot.slane %v4178, 4
    %v4180 = vadd.f32 %v4178, %v4179
    %v4181 = vrot.slane %v4180, 2
    %v4182 = vadd.f32 %v4180, %v4181
    %v4183 = vrot.slane %v4182, 1
    %v4184 = vadd.f32 %v4182, %v4183
    %v4187 = vsel %vm751, %v4184, %v4163
    %s4189 = scalar_lea.vmem [#allocation3], 10
    %4190 = vst.msk [vmem:[%s4189] sm:$0x3] %vm120, %v4187
    %v4207 = vperm.slane %v3901, %v772
    %v4208 = vperm.slane %v3916, %v774
    %v4209 = vsel %vm776, %v4208, %v4207
    %v4210 = vperm.slane %v3931, %v778
    %v4211 = vsel %vm780, %v4210, %v4209
    %v4212 = vperm.slane %v3946, %v782
    %v4213 = vsel %vm784, %v4212, %v4211
    %v4214 = vperm.slane %v3961, %v786
    %v4215 = vsel %vm788, %v4214, %v4213
    %v4216 = vperm.slane %v3976, %v790
    %v4217 = vsel %vm792, %v4216, %v4215
    %v4218 = vperm.slane %v3991, %v794
    %v4219 = vsel %vm796, %v4218, %v4217
    %v4220 = vperm.slane %v4006, %v798
    %v4221 = vsel %vm800, %v4220, %v4219
    %v4222 = vperm.slane %v4021, %v772
    %v4223 = vperm.slane %v4036, %v774
    %v4224 = vsel %vm776, %v4223, %v4222
    %v4225 = vperm.slane %v4051, %v778
    %v4226 = vsel %vm780, %v4225, %v4224
    %v4227 = vperm.slane %v4066, %v782
    %v4228 = vsel %vm784, %v4227, %v4226
    %v4229 = vperm.slane %v4081, %v786
    %v4230 = vsel %vm788, %v4229, %v4228
    %v4231 = vperm.slane %v4096, %v790
    %v4232 = vsel %vm792, %v4231, %v4230
    %v4233 = vperm.slane %v4111, %v794
    %v4234 = vsel %vm796, %v4233, %v4232
    %v4235 = vperm.slane %v4126, %v798
    %v4236 = vsel %vm800, %v4235, %v4234
    %v4237 = vsel %vm751, %v4236, %v4221
    %s4239 = scalar_lea.vmem [#allocation5], 10
    %4240 = vst.msk [vmem:[%s4239] sm:$0x3] %vm819, %v4237
    %s4241 = scalar_lea.vmem %s0, 12
    %v4242 = vld [vmem:[%s4241] sm:$0x3]
    %v4243 = vsel %vm54, %v3621, 0
    %4245 = vmatpush.msra.mxu0 0.0
    %4246 = vmatpush.msra.mxu0 0.0
    %4247 = vmatpush.msra.mxu0 0.0
    %4248 = vmatpush.msra.mxu0 0.0
    %4249 = vmatpush.msra.mxu0 0.0
    %4250 = vmatpush.msra.mxu0 0.0
    %4251 = vmatpush.msra.mxu0 0.0
    %4252 = vmatpush.msra.mxu0 0.0
    %4253 = vmatpush.msra.mxu0 0.0
    %4254 = vmatpush.msra.mxu0 0.0
    %4255 = vmatpush.msra.mxu0 0.0
    %4256 = vmatpush.msra.mxu0 0.0
    %4257 = vmatpush.msra.mxu0 %v43
    %4258 = vmatpush.msra.mxu0 %v42
    %4259 = vmatpush.msra.mxu0 %v41
    %4260 = vmatpush.msra.mxu0 %v40
    %4261 = vmatmul.f32.gmra.mxu0 %v4243
    %v4262 = vpop.f32.mrf.mxu0
    %v4263 = vadd.f32 0.0, %v4262
    %4264 = vdwg.mxu0
    %v4265 = vadd.f32 %v4242, %v4263
    %v4266 = vxor.u32 %v4265, 2147483648
    %v4267 = vmul.f32 %v4266, 1.442695
    %v4268 = vpow.pop %v4267
    %v4269 = vadd.f32 %v4268, 1.0
    %v4270 = vrcp.pop %v4269
    %v4271 = vmul.f32 %v4269, %v4270
    %v4272 = vsub.f32 1.0, %v4271
    %v4273 = vmul.f32 %v4270, %v4272
    %v4274 = vadd.f32 %v4270, %v4273
    %vm4275 = vweird.f32 %v4269
    %vm4276 = vweird.f32 %v4270
    %vm4277 = vmor %vm4275, %vm4276
    %v4278 = vsel %vm4277, %v4270, %v4274
    %v4279 = vand.u32 2147483647, %v4269
    %vm4280 = vcmp.eq.f32.partialorder %v4279, 8.507059e+37
    %v4281 = vand.u32 %v4269, 2147483648
    %v4282 = vor.u32 1.1754944e-38, %v4281
    %v4283 = vsel %vm4280, %v4282, %v4278
    %v4284 = vmul.f32 1.0, %v4283
    %v4285 = vtanh.pop %v4265
    %v4286 = vmul.f32 %v4284, %v3612
    %4288 = vrot.lane.b32.xlu0 %v4285, 64
    %v4289 = vpop.permute.xlu0 %4288
    %v4291 = vmul.f32 %v4284, %v4289
    %4293 = vrot.lane.b32.xlu0 %v4291, 32
    %v4294 = vpop.permute.xlu0 %4293
    %v4296 = vadd.f32 %v4286, %v4294
    %v4297 = vtanh.pop %v4296
    %4299 = vrot.lane.b32.xlu0 %v4297, 64
    %v4300 = vpop.permute.xlu0 %4299
    %v4302 = vmul.f32 %v4284, %v4300
    %4304 = vrot.lane.b32.xlu0 %v4302, 32
    %v4305 = vpop.permute.xlu0 %4304
    %4307 = vst.msk [vmem:[#allocation2] sm:$0x3] %vm120, %v4305
    %4308 = vrot.lane.b32.xlu0 %v3688, 64
    %v4309 = vpop.permute.xlu0 %4308
    %4311 = vst.msk [vmem:[#allocation2] sm:$0x3] %vm122, %v4309
    %v4312 = vld [vmem:[#allocation2] sm:$0x3]
    %v4314 = vsel %vm128, %v4312, 0
    %4316 = vmatpush.msra.mxu0 0.0
    %4317 = vmatpush.msra.mxu0 0.0
    %4318 = vmatpush.msra.mxu0 0.0
    %4319 = vmatpush.msra.mxu0 0.0
    %4320 = vmatpush.msra.mxu0 0.0
    %4321 = vmatpush.msra.mxu0 0.0
    %4322 = vmatpush.msra.mxu0 0.0
    %4323 = vmatpush.msra.mxu0 0.0
    %4324 = vmatpush.msra.mxu0 %v51
    %4325 = vmatpush.msra.mxu0 %v50
    %4326 = vmatpush.msra.mxu0 %v49
    %4327 = vmatpush.msra.mxu0 %v48
    %4328 = vmatpush.msra.mxu0 %v47
    %4329 = vmatpush.msra.mxu0 %v46
    %4330 = vmatpush.msra.mxu0 %v45
    %4331 = vmatpush.msra.mxu0 %v44
    %4332 = vmatmul.f32.gmra.mxu0 %v4314
    %v4333 = vpop.f32.mrf.mxu0
    %v4334 = vadd.f32 %v126, %v4333
    %4335 = vdwg.mxu0
    %v4336 = vxor.u32 %v4334, 2147483648
    %v4337 = vmul.f32 %v4336, 1.442695
    %v4338 = vpow.pop %v4337
    %v4339 = vadd.f32 %v4338, 1.0
    %v4340 = vrcp.pop %v4339
    %v4341 = vmul.f32 %v4339, %v4340
    %v4342 = vsub.f32 1.0, %v4341
    %v4343 = vmul.f32 %v4340, %v4342
    %v4344 = vadd.f32 %v4340, %v4343
    %vm4345 = vweird.f32 %v4339
    %vm4346 = vweird.f32 %v4340
    %vm4347 = vmor %vm4345, %vm4346
    %v4348 = vsel %vm4347, %v4340, %v4344
    %v4349 = vand.u32 2147483647, %v4339
    %vm4350 = vcmp.eq.f32.partialorder %v4349, 8.507059e+37
    %v4351 = vand.u32 %v4339, 2147483648
    %v4352 = vor.u32 1.1754944e-38, %v4351
    %v4353 = vsel %vm4350, %v4352, %v4348
    %v4354 = vmul.f32 1.0, %v4353
    %v4355 = vtanh.pop %v4334
    %v4356 = vmul.f32 %v4354, %v3682
    %4358 = vrot.lane.b32.xlu0 %v4355, 64
    %v4359 = vpop.permute.xlu0 %4358
    %v4361 = vmul.f32 %v4354, %v4359
    %4363 = vrot.lane.b32.xlu0 %v4361, 32
    %v4364 = vpop.permute.xlu0 %4363
    %v4366 = vadd.f32 %v4356, %v4364
    %v4367 = vtanh.pop %v4366
    %4369 = vrot.lane.b32.xlu0 %v4367, 64
    %v4370 = vpop.permute.xlu0 %4369
    %v4372 = vmul.f32 %v4354, %v4370
    %v4374 = vrot.slane %v4372, 1
    %v4375 = vperm.slane %v4372, 0
    %v4376 = vperm.slane %v4374, 0
    %v4379 = vmul.f32 %v4375, %v212
    %v4380 = vmul.f32 %v4375, %v214
    %v4381 = vmul.f32 %v4375, %v216
    %v4382 = vmul.f32 %v4375, %v218
    %v4383 = vmul.f32 %v4375, %v220
    %v4384 = vmul.f32 %v4375, %v222
    %v4385 = vmul.f32 %v4375, %v224
    %v4386 = vmul.f32 %v4375, %v226
    %v4387 = vmul.f32 %v4376, %v228
    %v4388 = vmul.f32 %v4376, %v230
    %v4389 = vmul.f32 %v4376, %v232
    %v4390 = vmul.f32 %v4376, %v234
    %v4391 = vmul.f32 %v4376, %v236
    %v4392 = vmul.f32 %v4376, %v238
    %v4393 = vmul.f32 %v4376, %v240
    %v4394 = vmul.f32 %v4376, %v242
    %4411 = vrot.lane.b32.xlu0 %v4379, 32
    %v4412 = vpop.permute.xlu0 %4411
    %4413 = vrot.lane.b32.xlu0 %v4380, 32
    %v4414 = vpop.permute.xlu0 %4413
    %4415 = vrot.lane.b32.xlu0 %v4381, 32
    %v4416 = vpop.permute.xlu0 %4415
    %4417 = vrot.lane.b32.xlu0 %v4382, 32
    %v4418 = vpop.permute.xlu0 %4417
    %4419 = vrot.lane.b32.xlu0 %v4383, 32
    %v4420 = vpop.permute.xlu0 %4419
    %4421 = vrot.lane.b32.xlu0 %v4384, 32
    %v4422 = vpop.permute.xlu0 %4421
    %4423 = vrot.lane.b32.xlu0 %v4385, 32
    %v4424 = vpop.permute.xlu0 %4423
    %4425 = vrot.lane.b32.xlu0 %v4386, 32
    %v4426 = vpop.permute.xlu0 %4425
    %4427 = vrot.lane.b32.xlu0 %v4387, 32
    %v4428 = vpop.permute.xlu0 %4427
    %4429 = vrot.lane.b32.xlu0 %v4388, 32
    %v4430 = vpop.permute.xlu0 %4429
    %4431 = vrot.lane.b32.xlu0 %v4389, 32
    %v4432 = vpop.permute.xlu0 %4431
    %4433 = vrot.lane.b32.xlu0 %v4390, 32
    %v4434 = vpop.permute.xlu0 %4433
    %4435 = vrot.lane.b32.xlu0 %v4391, 32
    %v4436 = vpop.permute.xlu0 %4435
    %4437 = vrot.lane.b32.xlu0 %v4392, 32
    %v4438 = vpop.permute.xlu0 %4437
    %4439 = vrot.lane.b32.xlu0 %v4393, 32
    %v4440 = vpop.permute.xlu0 %4439
    %4441 = vrot.lane.b32.xlu0 %v4394, 32
    %v4442 = vpop.permute.xlu0 %4441
    %v4459 = vsel %vm54, %v4412, 0.0
    %4460 = vadd.xlane.f32.xlu0 %v4459
    %v4461 = vpop.xlane.xlu0 %4460
    %v4462 = vsel %vm54, %v4414, 0.0
    %4463 = vadd.xlane.f32.xlu0 %v4462
    %v4464 = vpop.xlane.xlu0 %4463
    %v4465 = vsel %vm54, %v4416, 0.0
    %4466 = vadd.xlane.f32.xlu0 %v4465
    %v4467 = vpop.xlane.xlu0 %4466
    %v4468 = vsel %vm54, %v4418, 0.0
    %4469 = vadd.xlane.f32.xlu0 %v4468
    %v4470 = vpop.xlane.xlu0 %4469
    %v4471 = vsel %vm54, %v4420, 0.0
    %4472 = vadd.xlane.f32.xlu0 %v4471
    %v4473 = vpop.xlane.xlu0 %4472
    %v4474 = vsel %vm54, %v4422, 0.0
    %4475 = vadd.xlane.f32.xlu0 %v4474
    %v4476 = vpop.xlane.xlu0 %4475
    %v4477 = vsel %vm54, %v4424, 0.0
    %4478 = vadd.xlane.f32.xlu0 %v4477
    %v4479 = vpop.xlane.xlu0 %4478
    %v4480 = vsel %vm54, %v4426, 0.0
    %4481 = vadd.xlane.f32.xlu0 %v4480
    %v4482 = vpop.xlane.xlu0 %4481
    %v4483 = vsel %vm54, %v4428, 0.0
    %4484 = vadd.xlane.f32.xlu0 %v4483
    %v4485 = vpop.xlane.xlu0 %4484
    %v4486 = vsel %vm54, %v4430, 0.0
    %4487 = vadd.xlane.f32.xlu0 %v4486
    %v4488 = vpop.xlane.xlu0 %4487
    %v4489 = vsel %vm54, %v4432, 0.0
    %4490 = vadd.xlane.f32.xlu0 %v4489
    %v4491 = vpop.xlane.xlu0 %4490
    %v4492 = vsel %vm54, %v4434, 0.0
    %4493 = vadd.xlane.f32.xlu0 %v4492
    %v4494 = vpop.xlane.xlu0 %4493
    %v4495 = vsel %vm54, %v4436, 0.0
    %4496 = vadd.xlane.f32.xlu0 %v4495
    %v4497 = vpop.xlane.xlu0 %4496
    %v4498 = vsel %vm54, %v4438, 0.0
    %4499 = vadd.xlane.f32.xlu0 %v4498
    %v4500 = vpop.xlane.xlu0 %4499
    %v4501 = vsel %vm54, %v4440, 0.0
    %4502 = vadd.xlane.f32.xlu0 %v4501
    %v4503 = vpop.xlane.xlu0 %4502
    %v4504 = vsel %vm54, %v4442, 0.0
    %4505 = vadd.xlane.f32.xlu0 %v4504
    %v4506 = vpop.xlane.xlu0 %4505
    %v4507 = vxor.u32 %v4461, 2147483648
    %v4508 = vxor.u32 %v4464, 2147483648
    %v4509 = vxor.u32 %v4467, 2147483648
    %v4510 = vxor.u32 %v4470, 2147483648
    %v4511 = vxor.u32 %v4473, 2147483648
    %v4512 = vxor.u32 %v4476, 2147483648
    %v4513 = vxor.u32 %v4479, 2147483648
    %v4514 = vxor.u32 %v4482, 2147483648
    %v4515 = vxor.u32 %v4485, 2147483648
    %v4516 = vxor.u32 %v4488, 2147483648
    %v4517 = vxor.u32 %v4491, 2147483648
    %v4518 = vxor.u32 %v4494, 2147483648
    %v4519 = vxor.u32 %v4497, 2147483648
    %v4520 = vxor.u32 %v4500, 2147483648
    %v4521 = vxor.u32 %v4503, 2147483648
    %v4522 = vxor.u32 %v4506, 2147483648
    %v4523 = vmul.f32 %v4507, 1.442695
    %v4524 = vpow.pop %v4523
    %v4525 = vmul.f32 %v4508, 1.442695
    %v4526 = vpow.pop %v4525
    %v4527 = vmul.f32 %v4509, 1.442695
    %v4528 = vpow.pop %v4527
    %v4529 = vmul.f32 %v4510, 1.442695
    %v4530 = vpow.pop %v4529
    %v4531 = vmul.f32 %v4511, 1.442695
    %v4532 = vpow.pop %v4531
    %v4533 = vmul.f32 %v4512, 1.442695
    %v4534 = vpow.pop %v4533
    %v4535 = vmul.f32 %v4513, 1.442695
    %v4536 = vpow.pop %v4535
    %v4537 = vmul.f32 %v4514, 1.442695
    %v4538 = vpow.pop %v4537
    %v4539 = vmul.f32 %v4515, 1.442695
    %v4540 = vpow.pop %v4539
    %v4541 = vmul.f32 %v4516, 1.442695
    %v4542 = vpow.pop %v4541
    %v4543 = vmul.f32 %v4517, 1.442695
    %v4544 = vpow.pop %v4543
    %v4545 = vmul.f32 %v4518, 1.442695
    %v4546 = vpow.pop %v4545
    %v4547 = vmul.f32 %v4519, 1.442695
    %v4548 = vpow.pop %v4547
    %v4549 = vmul.f32 %v4520, 1.442695
    %v4550 = vpow.pop %v4549
    %v4551 = vmul.f32 %v4521, 1.442695
    %v4552 = vpow.pop %v4551
    %v4553 = vmul.f32 %v4522, 1.442695
    %v4554 = vpow.pop %v4553
    %v4555 = vadd.f32 %v4524, 1.0
    %v4556 = vadd.f32 %v4526, 1.0
    %v4557 = vadd.f32 %v4528, 1.0
    %v4558 = vadd.f32 %v4530, 1.0
    %v4559 = vadd.f32 %v4532, 1.0
    %v4560 = vadd.f32 %v4534, 1.0
    %v4561 = vadd.f32 %v4536, 1.0
    %v4562 = vadd.f32 %v4538, 1.0
    %v4563 = vadd.f32 %v4540, 1.0
    %v4564 = vadd.f32 %v4542, 1.0
    %v4565 = vadd.f32 %v4544, 1.0
    %v4566 = vadd.f32 %v4546, 1.0
    %v4567 = vadd.f32 %v4548, 1.0
    %v4568 = vadd.f32 %v4550, 1.0
    %v4569 = vadd.f32 %v4552, 1.0
    %v4570 = vadd.f32 %v4554, 1.0
    %v4571 = vrcp.pop %v4555
    %v4572 = vmul.f32 %v4555, %v4571
    %v4573 = vsub.f32 1.0, %v4572
    %v4574 = vmul.f32 %v4571, %v4573
    %v4575 = vadd.f32 %v4571, %v4574
    %vm4576 = vweird.f32 %v4555
    %vm4577 = vweird.f32 %v4571
    %vm4578 = vmor %vm4576, %vm4577
    %v4579 = vsel %vm4578, %v4571, %v4575
    %v4580 = vand.u32 2147483647, %v4555
    %vm4581 = vcmp.eq.f32.partialorder %v4580, 8.507059e+37
    %v4582 = vand.u32 %v4555, 2147483648
    %v4583 = vor.u32 1.1754944e-38, %v4582
    %v4584 = vsel %vm4581, %v4583, %v4579
    %v4585 = vmul.f32 1.0, %v4584
    %v4586 = vrcp.pop %v4556
    %v4587 = vmul.f32 %v4556, %v4586
    %v4588 = vsub.f32 1.0, %v4587
    %v4589 = vmul.f32 %v4586, %v4588
    %v4590 = vadd.f32 %v4586, %v4589
    %vm4591 = vweird.f32 %v4556
    %vm4592 = vweird.f32 %v4586
    %vm4593 = vmor %vm4591, %vm4592
    %v4594 = vsel %vm4593, %v4586, %v4590
    %v4595 = vand.u32 2147483647, %v4556
    %vm4596 = vcmp.eq.f32.partialorder %v4595, 8.507059e+37
    %v4597 = vand.u32 %v4556, 2147483648
    %v4598 = vor.u32 1.1754944e-38, %v4597
    %v4599 = vsel %vm4596, %v4598, %v4594
    %v4600 = vmul.f32 1.0, %v4599
    %v4601 = vrcp.pop %v4557
    %v4602 = vmul.f32 %v4557, %v4601
    %v4603 = vsub.f32 1.0, %v4602
    %v4604 = vmul.f32 %v4601, %v4603
    %v4605 = vadd.f32 %v4601, %v4604
    %vm4606 = vweird.f32 %v4557
    %vm4607 = vweird.f32 %v4601
    %vm4608 = vmor %vm4606, %vm4607
    %v4609 = vsel %vm4608, %v4601, %v4605
    %v4610 = vand.u32 2147483647, %v4557
    %vm4611 = vcmp.eq.f32.partialorder %v4610, 8.507059e+37
    %v4612 = vand.u32 %v4557, 2147483648
    %v4613 = vor.u32 1.1754944e-38, %v4612
    %v4614 = vsel %vm4611, %v4613, %v4609
    %v4615 = vmul.f32 1.0, %v4614
    %v4616 = vrcp.pop %v4558
    %v4617 = vmul.f32 %v4558, %v4616
    %v4618 = vsub.f32 1.0, %v4617
    %v4619 = vmul.f32 %v4616, %v4618
    %v4620 = vadd.f32 %v4616, %v4619
    %vm4621 = vweird.f32 %v4558
    %vm4622 = vweird.f32 %v4616
    %vm4623 = vmor %vm4621, %vm4622
    %v4624 = vsel %vm4623, %v4616, %v4620
    %v4625 = vand.u32 2147483647, %v4558
    %vm4626 = vcmp.eq.f32.partialorder %v4625, 8.507059e+37
    %v4627 = vand.u32 %v4558, 2147483648
    %v4628 = vor.u32 1.1754944e-38, %v4627
    %v4629 = vsel %vm4626, %v4628, %v4624
    %v4630 = vmul.f32 1.0, %v4629
    %v4631 = vrcp.pop %v4559
    %v4632 = vmul.f32 %v4559, %v4631
    %v4633 = vsub.f32 1.0, %v4632
    %v4634 = vmul.f32 %v4631, %v4633
    %v4635 = vadd.f32 %v4631, %v4634
    %vm4636 = vweird.f32 %v4559
    %vm4637 = vweird.f32 %v4631
    %vm4638 = vmor %vm4636, %vm4637
    %v4639 = vsel %vm4638, %v4631, %v4635
    %v4640 = vand.u32 2147483647, %v4559
    %vm4641 = vcmp.eq.f32.partialorder %v4640, 8.507059e+37
    %v4642 = vand.u32 %v4559, 2147483648
    %v4643 = vor.u32 1.1754944e-38, %v4642
    %v4644 = vsel %vm4641, %v4643, %v4639
    %v4645 = vmul.f32 1.0, %v4644
    %v4646 = vrcp.pop %v4560
    %v4647 = vmul.f32 %v4560, %v4646
    %v4648 = vsub.f32 1.0, %v4647
    %v4649 = vmul.f32 %v4646, %v4648
    %v4650 = vadd.f32 %v4646, %v4649
    %vm4651 = vweird.f32 %v4560
    %vm4652 = vweird.f32 %v4646
    %vm4653 = vmor %vm4651, %vm4652
    %v4654 = vsel %vm4653, %v4646, %v4650
    %v4655 = vand.u32 2147483647, %v4560
    %vm4656 = vcmp.eq.f32.partialorder %v4655, 8.507059e+37
    %v4657 = vand.u32 %v4560, 2147483648
    %v4658 = vor.u32 1.1754944e-38, %v4657
    %v4659 = vsel %vm4656, %v4658, %v4654
    %v4660 = vmul.f32 1.0, %v4659
    %v4661 = vrcp.pop %v4561
    %v4662 = vmul.f32 %v4561, %v4661
    %v4663 = vsub.f32 1.0, %v4662
    %v4664 = vmul.f32 %v4661, %v4663
    %v4665 = vadd.f32 %v4661, %v4664
    %vm4666 = vweird.f32 %v4561
    %vm4667 = vweird.f32 %v4661
    %vm4668 = vmor %vm4666, %vm4667
    %v4669 = vsel %vm4668, %v4661, %v4665
    %v4670 = vand.u32 2147483647, %v4561
    %vm4671 = vcmp.eq.f32.partialorder %v4670, 8.507059e+37
    %v4672 = vand.u32 %v4561, 2147483648
    %v4673 = vor.u32 1.1754944e-38, %v4672
    %v4674 = vsel %vm4671, %v4673, %v4669
    %v4675 = vmul.f32 1.0, %v4674
    %v4676 = vrcp.pop %v4562
    %v4677 = vmul.f32 %v4562, %v4676
    %v4678 = vsub.f32 1.0, %v4677
    %v4679 = vmul.f32 %v4676, %v4678
    %v4680 = vadd.f32 %v4676, %v4679
    %vm4681 = vweird.f32 %v4562
    %vm4682 = vweird.f32 %v4676
    %vm4683 = vmor %vm4681, %vm4682
    %v4684 = vsel %vm4683, %v4676, %v4680
    %v4685 = vand.u32 2147483647, %v4562
    %vm4686 = vcmp.eq.f32.partialorder %v4685, 8.507059e+37
    %v4687 = vand.u32 %v4562, 2147483648
    %v4688 = vor.u32 1.1754944e-38, %v4687
    %v4689 = vsel %vm4686, %v4688, %v4684
    %v4690 = vmul.f32 1.0, %v4689
    %v4691 = vrcp.pop %v4563
    %v4692 = vmul.f32 %v4563, %v4691
    %v4693 = vsub.f32 1.0, %v4692
    %v4694 = vmul.f32 %v4691, %v4693
    %v4695 = vadd.f32 %v4691, %v4694
    %vm4696 = vweird.f32 %v4563
    %vm4697 = vweird.f32 %v4691
    %vm4698 = vmor %vm4696, %vm4697
    %v4699 = vsel %vm4698, %v4691, %v4695
    %v4700 = vand.u32 2147483647, %v4563
    %vm4701 = vcmp.eq.f32.partialorder %v4700, 8.507059e+37
    %v4702 = vand.u32 %v4563, 2147483648
    %v4703 = vor.u32 1.1754944e-38, %v4702
    %v4704 = vsel %vm4701, %v4703, %v4699
    %v4705 = vmul.f32 1.0, %v4704
    %v4706 = vrcp.pop %v4564
    %v4707 = vmul.f32 %v4564, %v4706
    %v4708 = vsub.f32 1.0, %v4707
    %v4709 = vmul.f32 %v4706, %v4708
    %v4710 = vadd.f32 %v4706, %v4709
    %vm4711 = vweird.f32 %v4564
    %vm4712 = vweird.f32 %v4706
    %vm4713 = vmor %vm4711, %vm4712
    %v4714 = vsel %vm4713, %v4706, %v4710
    %v4715 = vand.u32 2147483647, %v4564
    %vm4716 = vcmp.eq.f32.partialorder %v4715, 8.507059e+37
    %v4717 = vand.u32 %v4564, 2147483648
    %v4718 = vor.u32 1.1754944e-38, %v4717
    %v4719 = vsel %vm4716, %v4718, %v4714
    %v4720 = vmul.f32 1.0, %v4719
    %v4721 = vrcp.pop %v4565
    %v4722 = vmul.f32 %v4565, %v4721
    %v4723 = vsub.f32 1.0, %v4722
    %v4724 = vmul.f32 %v4721, %v4723
    %v4725 = vadd.f32 %v4721, %v4724
    %vm4726 = vweird.f32 %v4565
    %vm4727 = vweird.f32 %v4721
    %vm4728 = vmor %vm4726, %vm4727
    %v4729 = vsel %vm4728, %v4721, %v4725
    %v4730 = vand.u32 2147483647, %v4565
    %vm4731 = vcmp.eq.f32.partialorder %v4730, 8.507059e+37
    %v4732 = vand.u32 %v4565, 2147483648
    %v4733 = vor.u32 1.1754944e-38, %v4732
    %v4734 = vsel %vm4731, %v4733, %v4729
    %v4735 = vmul.f32 1.0, %v4734
    %v4736 = vrcp.pop %v4566
    %v4737 = vmul.f32 %v4566, %v4736
    %v4738 = vsub.f32 1.0, %v4737
    %v4739 = vmul.f32 %v4736, %v4738
    %v4740 = vadd.f32 %v4736, %v4739
    %vm4741 = vweird.f32 %v4566
    %vm4742 = vweird.f32 %v4736
    %vm4743 = vmor %vm4741, %vm4742
    %v4744 = vsel %vm4743, %v4736, %v4740
    %v4745 = vand.u32 2147483647, %v4566
    %vm4746 = vcmp.eq.f32.partialorder %v4745, 8.507059e+37
    %v4747 = vand.u32 %v4566, 2147483648
    %v4748 = vor.u32 1.1754944e-38, %v4747
    %v4749 = vsel %vm4746, %v4748, %v4744
    %v4750 = vmul.f32 1.0, %v4749
    %v4751 = vrcp.pop %v4567
    %v4752 = vmul.f32 %v4567, %v4751
    %v4753 = vsub.f32 1.0, %v4752
    %v4754 = vmul.f32 %v4751, %v4753
    %v4755 = vadd.f32 %v4751, %v4754
    %vm4756 = vweird.f32 %v4567
    %vm4757 = vweird.f32 %v4751
    %vm4758 = vmor %vm4756, %vm4757
    %v4759 = vsel %vm4758, %v4751, %v4755
    %v4760 = vand.u32 2147483647, %v4567
    %vm4761 = vcmp.eq.f32.partialorder %v4760, 8.507059e+37
    %v4762 = vand.u32 %v4567, 2147483648
    %v4763 = vor.u32 1.1754944e-38, %v4762
    %v4764 = vsel %vm4761, %v4763, %v4759
    %v4765 = vmul.f32 1.0, %v4764
    %v4766 = vrcp.pop %v4568
    %v4767 = vmul.f32 %v4568, %v4766
    %v4768 = vsub.f32 1.0, %v4767
    %v4769 = vmul.f32 %v4766, %v4768
    %v4770 = vadd.f32 %v4766, %v4769
    %vm4771 = vweird.f32 %v4568
    %vm4772 = vweird.f32 %v4766
    %vm4773 = vmor %vm4771, %vm4772
    %v4774 = vsel %vm4773, %v4766, %v4770
    %v4775 = vand.u32 2147483647, %v4568
    %vm4776 = vcmp.eq.f32.partialorder %v4775, 8.507059e+37
    %v4777 = vand.u32 %v4568, 2147483648
    %v4778 = vor.u32 1.1754944e-38, %v4777
    %v4779 = vsel %vm4776, %v4778, %v4774
    %v4780 = vmul.f32 1.0, %v4779
    %v4781 = vrcp.pop %v4569
    %v4782 = vmul.f32 %v4569, %v4781
    %v4783 = vsub.f32 1.0, %v4782
    %v4784 = vmul.f32 %v4781, %v4783
    %v4785 = vadd.f32 %v4781, %v4784
    %vm4786 = vweird.f32 %v4569
    %vm4787 = vweird.f32 %v4781
    %vm4788 = vmor %vm4786, %vm4787
    %v4789 = vsel %vm4788, %v4781, %v4785
    %v4790 = vand.u32 2147483647, %v4569
    %vm4791 = vcmp.eq.f32.partialorder %v4790, 8.507059e+37
    %v4792 = vand.u32 %v4569, 2147483648
    %v4793 = vor.u32 1.1754944e-38, %v4792
    %v4794 = vsel %vm4791, %v4793, %v4789
    %v4795 = vmul.f32 1.0, %v4794
    %v4796 = vrcp.pop %v4570
    %v4797 = vmul.f32 %v4570, %v4796
    %v4798 = vsub.f32 1.0, %v4797
    %v4799 = vmul.f32 %v4796, %v4798
    %v4800 = vadd.f32 %v4796, %v4799
    %vm4801 = vweird.f32 %v4570
    %vm4802 = vweird.f32 %v4796
    %vm4803 = vmor %vm4801, %vm4802
    %v4804 = vsel %vm4803, %v4796, %v4800
    %v4805 = vand.u32 2147483647, %v4570
    %vm4806 = vcmp.eq.f32.partialorder %v4805, 8.507059e+37
    %v4807 = vand.u32 %v4570, 2147483648
    %v4808 = vor.u32 1.1754944e-38, %v4807
    %v4809 = vsel %vm4806, %v4808, %v4804
    %v4810 = vmul.f32 1.0, %v4809
    %v4811 = vmul.f32 %v4585, %v24
    %v4812 = vmul.f32 %v4600, %v25
    %v4813 = vmul.f32 %v4615, %v26
    %v4814 = vmul.f32 %v4630, %v27
    %v4815 = vmul.f32 %v4645, %v28
    %v4816 = vmul.f32 %v4660, %v29
    %v4817 = vmul.f32 %v4675, %v30
    %v4818 = vmul.f32 %v4690, %v31
    %v4819 = vmul.f32 %v4705, %v32
    %v4820 = vmul.f32 %v4720, %v33
    %v4821 = vmul.f32 %v4735, %v34
    %v4822 = vmul.f32 %v4750, %v35
    %v4823 = vmul.f32 %v4765, %v36
    %v4824 = vmul.f32 %v4780, %v37
    %v4825 = vmul.f32 %v4795, %v38
    %v4826 = vmul.f32 %v4810, %v39
    %v4827 = vsel %vm54, %v4811, 0.0
    %v4828 = vsel %vm54, %v4812, 0.0
    %v4829 = vadd.f32 %v4827, %v4828
    %v4830 = vsel %vm54, %v4813, 0.0
    %v4831 = vadd.f32 %v4829, %v4830
    %v4832 = vsel %vm54, %v4814, 0.0
    %v4833 = vadd.f32 %v4831, %v4832
    %v4834 = vsel %vm54, %v4815, 0.0
    %v4835 = vadd.f32 %v4833, %v4834
    %v4836 = vsel %vm54, %v4816, 0.0
    %v4837 = vadd.f32 %v4835, %v4836
    %v4838 = vsel %vm54, %v4817, 0.0
    %v4839 = vadd.f32 %v4837, %v4838
    %v4840 = vsel %vm54, %v4818, 0.0
    %v4841 = vadd.f32 %v4839, %v4840
    %v4842 = vrot.slane %v4841, 4
    %v4843 = vadd.f32 %v4841, %v4842
    %v4844 = vrot.slane %v4843, 2
    %v4845 = vadd.f32 %v4843, %v4844
    %v4846 = vrot.slane %v4845, 1
    %v4847 = vadd.f32 %v4845, %v4846
    %v4848 = vsel %vm54, %v4819, 0.0
    %v4849 = vsel %vm54, %v4820, 0.0
    %v4850 = vadd.f32 %v4848, %v4849
    %v4851 = vsel %vm54, %v4821, 0.0
    %v4852 = vadd.f32 %v4850, %v4851
    %v4853 = vsel %vm54, %v4822, 0.0
    %v4854 = vadd.f32 %v4852, %v4853
    %v4855 = vsel %vm54, %v4823, 0.0
    %v4856 = vadd.f32 %v4854, %v4855
    %v4857 = vsel %vm54, %v4824, 0.0
    %v4858 = vadd.f32 %v4856, %v4857
    %v4859 = vsel %vm54, %v4825, 0.0
    %v4860 = vadd.f32 %v4858, %v4859
    %v4861 = vsel %vm54, %v4826, 0.0
    %v4862 = vadd.f32 %v4860, %v4861
    %v4863 = vrot.slane %v4862, 4
    %v4864 = vadd.f32 %v4862, %v4863
    %v4865 = vrot.slane %v4864, 2
    %v4866 = vadd.f32 %v4864, %v4865
    %v4867 = vrot.slane %v4866, 1
    %v4868 = vadd.f32 %v4866, %v4867
    %v4871 = vsel %vm751, %v4868, %v4847
    %s4873 = scalar_lea.vmem [#allocation3], 12
    %4874 = vst.msk [vmem:[%s4873] sm:$0x3] %vm120, %v4871
    %v4891 = vperm.slane %v4585, %v772
    %v4892 = vperm.slane %v4600, %v774
    %v4893 = vsel %vm776, %v4892, %v4891
    %v4894 = vperm.slane %v4615, %v778
    %v4895 = vsel %vm780, %v4894, %v4893
    %v4896 = vperm.slane %v4630, %v782
    %v4897 = vsel %vm784, %v4896, %v4895
    %v4898 = vperm.slane %v4645, %v786
    %v4899 = vsel %vm788, %v4898, %v4897
    %v4900 = vperm.slane %v4660, %v790
    %v4901 = vsel %vm792, %v4900, %v4899
    %v4902 = vperm.slane %v4675, %v794
    %v4903 = vsel %vm796, %v4902, %v4901
    %v4904 = vperm.slane %v4690, %v798
    %v4905 = vsel %vm800, %v4904, %v4903
    %v4906 = vperm.slane %v4705, %v772
    %v4907 = vperm.slane %v4720, %v774
    %v4908 = vsel %vm776, %v4907, %v4906
    %v4909 = vperm.slane %v4735, %v778
    %v4910 = vsel %vm780, %v4909, %v4908
    %v4911 = vperm.slane %v4750, %v782
    %v4912 = vsel %vm784, %v4911, %v4910
    %v4913 = vperm.slane %v4765, %v786
    %v4914 = vsel %vm788, %v4913, %v4912
    %v4915 = vperm.slane %v4780, %v790
    %v4916 = vsel %vm792, %v4915, %v4914
    %v4917 = vperm.slane %v4795, %v794
    %v4918 = vsel %vm796, %v4917, %v4916
    %v4919 = vperm.slane %v4810, %v798
    %v4920 = vsel %vm800, %v4919, %v4918
    %v4921 = vsel %vm751, %v4920, %v4905
    %s4923 = scalar_lea.vmem [#allocation5], 12
    %4924 = vst.msk [vmem:[%s4923] sm:$0x3] %vm819, %v4921
    %s4925 = scalar_lea.vmem %s0, 14
    %v4926 = vld [vmem:[%s4925] sm:$0x3]
    %v4927 = vsel %vm54, %v4305, 0
    %4929 = vmatpush.msra.mxu0 0.0
    %4930 = vmatpush.msra.mxu0 0.0
    %4931 = vmatpush.msra.mxu0 0.0
    %4932 = vmatpush.msra.mxu0 0.0
    %4933 = vmatpush.msra.mxu0 0.0
    %4934 = vmatpush.msra.mxu0 0.0
    %4935 = vmatpush.msra.mxu0 0.0
    %4936 = vmatpush.msra.mxu0 0.0
    %4937 = vmatpush.msra.mxu0 0.0
    %4938 = vmatpush.msra.mxu0 0.0
    %4939 = vmatpush.msra.mxu0 0.0
    %4940 = vmatpush.msra.mxu0 0.0
    %4941 = vmatpush.msra.mxu0 %v43
    %4942 = vmatpush.msra.mxu0 %v42
    %4943 = vmatpush.msra.mxu0 %v41
    %4944 = vmatpush.msra.mxu0 %v40
    %4945 = vmatmul.f32.gmra.mxu0 %v4927
    %v4946 = vpop.f32.mrf.mxu0
    %v4947 = vadd.f32 0.0, %v4946
    %4948 = vdwg.mxu0
    %v4949 = vadd.f32 %v4926, %v4947
    %v4950 = vxor.u32 %v4949, 2147483648
    %v4951 = vmul.f32 %v4950, 1.442695
    %v4952 = vpow.pop %v4951
    %v4953 = vadd.f32 %v4952, 1.0
    %v4954 = vrcp.pop %v4953
    %v4955 = vmul.f32 %v4953, %v4954
    %v4956 = vsub.f32 1.0, %v4955
    %v4957 = vmul.f32 %v4954, %v4956
    %v4958 = vadd.f32 %v4954, %v4957
    %vm4959 = vweird.f32 %v4953
    %vm4960 = vweird.f32 %v4954
    %vm4961 = vmor %vm4959, %vm4960
    %v4962 = vsel %vm4961, %v4954, %v4958
    %v4963 = vand.u32 2147483647, %v4953
    %vm4964 = vcmp.eq.f32.partialorder %v4963, 8.507059e+37
    %v4965 = vand.u32 %v4953, 2147483648
    %v4966 = vor.u32 1.1754944e-38, %v4965
    %v4967 = vsel %vm4964, %v4966, %v4962
    %v4968 = vmul.f32 1.0, %v4967
    %v4969 = vtanh.pop %v4949
    %v4970 = vmul.f32 %v4968, %v4296
    %4972 = vrot.lane.b32.xlu0 %v4969, 64
    %v4973 = vpop.permute.xlu0 %4972
    %v4975 = vmul.f32 %v4968, %v4973
    %4977 = vrot.lane.b32.xlu0 %v4975, 32
    %v4978 = vpop.permute.xlu0 %4977
    %v4980 = vadd.f32 %v4970, %v4978
    %v4981 = vtanh.pop %v4980
    %4983 = vrot.lane.b32.xlu0 %v4981, 64
    %v4984 = vpop.permute.xlu0 %4983
    %v4986 = vmul.f32 %v4968, %v4984
    %4988 = vrot.lane.b32.xlu0 %v4986, 32
    %v4989 = vpop.permute.xlu0 %4988
    %4991 = vst.msk [vmem:[#allocation2] sm:$0x3] %vm120, %v4989
    %4992 = vrot.lane.b32.xlu0 %v4372, 64
    %v4993 = vpop.permute.xlu0 %4992
    %4995 = vst.msk [vmem:[#allocation2] sm:$0x3] %vm122, %v4993
    %v4996 = vld [vmem:[#allocation2] sm:$0x3]
    %v4998 = vsel %vm128, %v4996, 0
    %5000 = vmatpush.msra.mxu0 0.0
    %5001 = vmatpush.msra.mxu0 0.0
    %5002 = vmatpush.msra.mxu0 0.0
    %5003 = vmatpush.msra.mxu0 0.0
    %5004 = vmatpush.msra.mxu0 0.0
    %5005 = vmatpush.msra.mxu0 0.0
    %5006 = vmatpush.msra.mxu0 0.0
    %5007 = vmatpush.msra.mxu0 0.0
    %5008 = vmatpush.msra.mxu0 %v51
    %5009 = vmatpush.msra.mxu0 %v50
    %5010 = vmatpush.msra.mxu0 %v49
    %5011 = vmatpush.msra.mxu0 %v48
    %5012 = vmatpush.msra.mxu0 %v47
    %5013 = vmatpush.msra.mxu0 %v46
    %5014 = vmatpush.msra.mxu0 %v45
    %5015 = vmatpush.msra.mxu0 %v44
    %5016 = vmatmul.f32.gmra.mxu0 %v4998
    %v5017 = vpop.f32.mrf.mxu0
    %v5018 = vadd.f32 %v126, %v5017
    %5019 = vdwg.mxu0
    %v5020 = vxor.u32 %v5018, 2147483648
    %v5021 = vmul.f32 %v5020, 1.442695
    %v5022 = vpow.pop %v5021
    %v5023 = vadd.f32 %v5022, 1.0
    %v5024 = vrcp.pop %v5023
    %v5025 = vmul.f32 %v5023, %v5024
    %v5026 = vsub.f32 1.0, %v5025
    %v5027 = vmul.f32 %v5024, %v5026
    %v5028 = vadd.f32 %v5024, %v5027
    %vm5029 = vweird.f32 %v5023
    %vm5030 = vweird.f32 %v5024
    %vm5031 = vmor %vm5029, %vm5030
    %v5032 = vsel %vm5031, %v5024, %v5028
    %v5033 = vand.u32 2147483647, %v5023
    %vm5034 = vcmp.eq.f32.partialorder %v5033, 8.507059e+37
    %v5035 = vand.u32 %v5023, 2147483648
    %v5036 = vor.u32 1.1754944e-38, %v5035
    %v5037 = vsel %vm5034, %v5036, %v5032
    %v5038 = vmul.f32 1.0, %v5037
    %v5039 = vtanh.pop %v5018
    %v5040 = vmul.f32 %v5038, %v4366
    %5042 = vrot.lane.b32.xlu0 %v5039, 64
    %v5043 = vpop.permute.xlu0 %5042
    %v5045 = vmul.f32 %v5038, %v5043
    %5047 = vrot.lane.b32.xlu0 %v5045, 32
    %v5048 = vpop.permute.xlu0 %5047
    %v5050 = vadd.f32 %v5040, %v5048
    %v5051 = vtanh.pop %v5050
    %5053 = vrot.lane.b32.xlu0 %v5051, 64
    %v5054 = vpop.permute.xlu0 %5053
    %v5056 = vmul.f32 %v5038, %v5054
    %v5058 = vrot.slane %v5056, 1
    %v5059 = vperm.slane %v5056, 0
    %v5060 = vperm.slane %v5058, 0
    %v5063 = vmul.f32 %v5059, %v212
    %v5064 = vmul.f32 %v5059, %v214
    %v5065 = vmul.f32 %v5059, %v216
    %v5066 = vmul.f32 %v5059, %v218
    %v5067 = vmul.f32 %v5059, %v220
    %v5068 = vmul.f32 %v5059, %v222
    %v5069 = vmul.f32 %v5059, %v224
    %v5070 = vmul.f32 %v5059, %v226
    %v5071 = vmul.f32 %v5060, %v228
    %v5072 = vmul.f32 %v5060, %v230
    %v5073 = vmul.f32 %v5060, %v232
    %v5074 = vmul.f32 %v5060, %v234
    %v5075 = vmul.f32 %v5060, %v236
    %v5076 = vmul.f32 %v5060, %v238
    %v5077 = vmul.f32 %v5060, %v240
    %v5078 = vmul.f32 %v5060, %v242
    %5095 = vrot.lane.b32.xlu0 %v5063, 32
    %v5096 = vpop.permute.xlu0 %5095
    %5097 = vrot.lane.b32.xlu0 %v5064, 32
    %v5098 = vpop.permute.xlu0 %5097
    %5099 = vrot.lane.b32.xlu0 %v5065, 32
    %v5100 = vpop.permute.xlu0 %5099
    %5101 = vrot.lane.b32.xlu0 %v5066, 32
    %v5102 = vpop.permute.xlu0 %5101
    %5103 = vrot.lane.b32.xlu0 %v5067, 32
    %v5104 = vpop.permute.xlu0 %5103
    %5105 = vrot.lane.b32.xlu0 %v5068, 32
    %v5106 = vpop.permute.xlu0 %5105
    %5107 = vrot.lane.b32.xlu0 %v5069, 32
    %v5108 = vpop.permute.xlu0 %5107
    %5109 = vrot.lane.b32.xlu0 %v5070, 32
    %v5110 = vpop.permute.xlu0 %5109
    %5111 = vrot.lane.b32.xlu0 %v5071, 32
    %v5112 = vpop.permute.xlu0 %5111
    %5113 = vrot.lane.b32.xlu0 %v5072, 32
    %v5114 = vpop.permute.xlu0 %5113
    %5115 = vrot.lane.b32.xlu0 %v5073, 32
    %v5116 = vpop.permute.xlu0 %5115
    %5117 = vrot.lane.b32.xlu0 %v5074, 32
    %v5118 = vpop.permute.xlu0 %5117
    %5119 = vrot.lane.b32.xlu0 %v5075, 32
    %v5120 = vpop.permute.xlu0 %5119
    %5121 = vrot.lane.b32.xlu0 %v5076, 32
    %v5122 = vpop.permute.xlu0 %5121
    %5123 = vrot.lane.b32.xlu0 %v5077, 32
    %v5124 = vpop.permute.xlu0 %5123
    %5125 = vrot.lane.b32.xlu0 %v5078, 32
    %v5126 = vpop.permute.xlu0 %5125
    %v5143 = vsel %vm54, %v5096, 0.0
    %5144 = vadd.xlane.f32.xlu0 %v5143
    %v5145 = vpop.xlane.xlu0 %5144
    %v5146 = vsel %vm54, %v5098, 0.0
    %5147 = vadd.xlane.f32.xlu0 %v5146
    %v5148 = vpop.xlane.xlu0 %5147
    %v5149 = vsel %vm54, %v5100, 0.0
    %5150 = vadd.xlane.f32.xlu0 %v5149
    %v5151 = vpop.xlane.xlu0 %5150
    %v5152 = vsel %vm54, %v5102, 0.0
    %5153 = vadd.xlane.f32.xlu0 %v5152
    %v5154 = vpop.xlane.xlu0 %5153
    %v5155 = vsel %vm54, %v5104, 0.0
    %5156 = vadd.xlane.f32.xlu0 %v5155
    %v5157 = vpop.xlane.xlu0 %5156
    %v5158 = vsel %vm54, %v5106, 0.0
    %5159 = vadd.xlane.f32.xlu0 %v5158
    %v5160 = vpop.xlane.xlu0 %5159
    %v5161 = vsel %vm54, %v5108, 0.0
    %5162 = vadd.xlane.f32.xlu0 %v5161
    %v5163 = vpop.xlane.xlu0 %5162
    %v5164 = vsel %vm54, %v5110, 0.0
    %5165 = vadd.xlane.f32.xlu0 %v5164
    %v5166 = vpop.xlane.xlu0 %5165
    %v5167 = vsel %vm54, %v5112, 0.0
    %5168 = vadd.xlane.f32.xlu0 %v5167
    %v5169 = vpop.xlane.xlu0 %5168
    %v5170 = vsel %vm54, %v5114, 0.0
    %5171 = vadd.xlane.f32.xlu0 %v5170
    %v5172 = vpop.xlane.xlu0 %5171
    %v5173 = vsel %vm54, %v5116, 0.0
    %5174 = vadd.xlane.f32.xlu0 %v5173
    %v5175 = vpop.xlane.xlu0 %5174
    %v5176 = vsel %vm54, %v5118, 0.0
    %5177 = vadd.xlane.f32.xlu0 %v5176
    %v5178 = vpop.xlane.xlu0 %5177
    %v5179 = vsel %vm54, %v5120, 0.0
    %5180 = vadd.xlane.f32.xlu0 %v5179
    %v5181 = vpop.xlane.xlu0 %5180
    %v5182 = vsel %vm54, %v5122, 0.0
    %5183 = vadd.xlane.f32.xlu0 %v5182
    %v5184 = vpop.xlane.xlu0 %5183
    %v5185 = vsel %vm54, %v5124, 0.0
    %5186 = vadd.xlane.f32.xlu0 %v5185
    %v5187 = vpop.xlane.xlu0 %5186
    %v5188 = vsel %vm54, %v5126, 0.0
    %5189 = vadd.xlane.f32.xlu0 %v5188
    %v5190 = vpop.xlane.xlu0 %5189
    %v5191 = vxor.u32 %v5145, 2147483648
    %v5192 = vxor.u32 %v5148, 2147483648
    %v5193 = vxor.u32 %v5151, 2147483648
    %v5194 = vxor.u32 %v5154, 2147483648
    %v5195 = vxor.u32 %v5157, 2147483648
    %v5196 = vxor.u32 %v5160, 2147483648
    %v5197 = vxor.u32 %v5163, 2147483648
    %v5198 = vxor.u32 %v5166, 2147483648
    %v5199 = vxor.u32 %v5169, 2147483648
    %v5200 = vxor.u32 %v5172, 2147483648
    %v5201 = vxor.u32 %v5175, 2147483648
    %v5202 = vxor.u32 %v5178, 2147483648
    %v5203 = vxor.u32 %v5181, 2147483648
    %v5204 = vxor.u32 %v5184, 2147483648
    %v5205 = vxor.u32 %v5187, 2147483648
    %v5206 = vxor.u32 %v5190, 2147483648
    %v5207 = vmul.f32 %v5191, 1.442695
    %v5208 = vpow.pop %v5207
    %v5209 = vmul.f32 %v5192, 1.442695
    %v5210 = vpow.pop %v5209
    %v5211 = vmul.f32 %v5193, 1.442695
    %v5212 = vpow.pop %v5211
    %v5213 = vmul.f32 %v5194, 1.442695
    %v5214 = vpow.pop %v5213
    %v5215 = vmul.f32 %v5195, 1.442695
    %v5216 = vpow.pop %v5215
    %v5217 = vmul.f32 %v5196, 1.442695
    %v5218 = vpow.pop %v5217
    %v5219 = vmul.f32 %v5197, 1.442695
    %v5220 = vpow.pop %v5219
    %v5221 = vmul.f32 %v5198, 1.442695
    %v5222 = vpow.pop %v5221
    %v5223 = vmul.f32 %v5199, 1.442695
    %v5224 = vpow.pop %v5223
    %v5225 = vmul.f32 %v5200, 1.442695
    %v5226 = vpow.pop %v5225
    %v5227 = vmul.f32 %v5201, 1.442695
    %v5228 = vpow.pop %v5227
    %v5229 = vmul.f32 %v5202, 1.442695
    %v5230 = vpow.pop %v5229
    %v5231 = vmul.f32 %v5203, 1.442695
    %v5232 = vpow.pop %v5231
    %v5233 = vmul.f32 %v5204, 1.442695
    %v5234 = vpow.pop %v5233
    %v5235 = vmul.f32 %v5205, 1.442695
    %v5236 = vpow.pop %v5235
    %v5237 = vmul.f32 %v5206, 1.442695
    %v5238 = vpow.pop %v5237
    %v5239 = vadd.f32 %v5208, 1.0
    %v5240 = vadd.f32 %v5210, 1.0
    %v5241 = vadd.f32 %v5212, 1.0
    %v5242 = vadd.f32 %v5214, 1.0
    %v5243 = vadd.f32 %v5216, 1.0
    %v5244 = vadd.f32 %v5218, 1.0
    %v5245 = vadd.f32 %v5220, 1.0
    %v5246 = vadd.f32 %v5222, 1.0
    %v5247 = vadd.f32 %v5224, 1.0
    %v5248 = vadd.f32 %v5226, 1.0
    %v5249 = vadd.f32 %v5228, 1.0
    %v5250 = vadd.f32 %v5230, 1.0
    %v5251 = vadd.f32 %v5232, 1.0
    %v5252 = vadd.f32 %v5234, 1.0
    %v5253 = vadd.f32 %v5236, 1.0
    %v5254 = vadd.f32 %v5238, 1.0
    %v5255 = vrcp.pop %v5239
    %v5256 = vmul.f32 %v5239, %v5255
    %v5257 = vsub.f32 1.0, %v5256
    %v5258 = vmul.f32 %v5255, %v5257
    %v5259 = vadd.f32 %v5255, %v5258
    %vm5260 = vweird.f32 %v5239
    %vm5261 = vweird.f32 %v5255
    %vm5262 = vmor %vm5260, %vm5261
    %v5263 = vsel %vm5262, %v5255, %v5259
    %v5264 = vand.u32 2147483647, %v5239
    %vm5265 = vcmp.eq.f32.partialorder %v5264, 8.507059e+37
    %v5266 = vand.u32 %v5239, 2147483648
    %v5267 = vor.u32 1.1754944e-38, %v5266
    %v5268 = vsel %vm5265, %v5267, %v5263
    %v5269 = vmul.f32 1.0, %v5268
    %v5270 = vrcp.pop %v5240
    %v5271 = vmul.f32 %v5240, %v5270
    %v5272 = vsub.f32 1.0, %v5271
    %v5273 = vmul.f32 %v5270, %v5272
    %v5274 = vadd.f32 %v5270, %v5273
    %vm5275 = vweird.f32 %v5240
    %vm5276 = vweird.f32 %v5270
    %vm5277 = vmor %vm5275, %vm5276
    %v5278 = vsel %vm5277, %v5270, %v5274
    %v5279 = vand.u32 2147483647, %v5240
    %vm5280 = vcmp.eq.f32.partialorder %v5279, 8.507059e+37
    %v5281 = vand.u32 %v5240, 2147483648
    %v5282 = vor.u32 1.1754944e-38, %v5281
    %v5283 = vsel %vm5280, %v5282, %v5278
    %v5284 = vmul.f32 1.0, %v5283
    %v5285 = vrcp.pop %v5241
    %v5286 = vmul.f32 %v5241, %v5285
    %v5287 = vsub.f32 1.0, %v5286
    %v5288 = vmul.f32 %v5285, %v5287
    %v5289 = vadd.f32 %v5285, %v5288
    %vm5290 = vweird.f32 %v5241
    %vm5291 = vweird.f32 %v5285
    %vm5292 = vmor %vm5290, %vm5291
    %v5293 = vsel %vm5292, %v5285, %v5289
    %v5294 = vand.u32 2147483647, %v5241
    %vm5295 = vcmp.eq.f32.partialorder %v5294, 8.507059e+37
    %v5296 = vand.u32 %v5241, 2147483648
    %v5297 = vor.u32 1.1754944e-38, %v5296
    %v5298 = vsel %vm5295, %v5297, %v5293
    %v5299 = vmul.f32 1.0, %v5298
    %v5300 = vrcp.pop %v5242
    %v5301 = vmul.f32 %v5242, %v5300
    %v5302 = vsub.f32 1.0, %v5301
    %v5303 = vmul.f32 %v5300, %v5302
    %v5304 = vadd.f32 %v5300, %v5303
    %vm5305 = vweird.f32 %v5242
    %vm5306 = vweird.f32 %v5300
    %vm5307 = vmor %vm5305, %vm5306
    %v5308 = vsel %vm5307, %v5300, %v5304
    %v5309 = vand.u32 2147483647, %v5242
    %vm5310 = vcmp.eq.f32.partialorder %v5309, 8.507059e+37
    %v5311 = vand.u32 %v5242, 2147483648
    %v5312 = vor.u32 1.1754944e-38, %v5311
    %v5313 = vsel %vm5310, %v5312, %v5308
    %v5314 = vmul.f32 1.0, %v5313
    %v5315 = vrcp.pop %v5243
    %v5316 = vmul.f32 %v5243, %v5315
    %v5317 = vsub.f32 1.0, %v5316
    %v5318 = vmul.f32 %v5315, %v5317
    %v5319 = vadd.f32 %v5315, %v5318
    %vm5320 = vweird.f32 %v5243
    %vm5321 = vweird.f32 %v5315
    %vm5322 = vmor %vm5320, %vm5321
    %v5323 = vsel %vm5322, %v5315, %v5319
    %v5324 = vand.u32 2147483647, %v5243
    %vm5325 = vcmp.eq.f32.partialorder %v5324, 8.507059e+37
    %v5326 = vand.u32 %v5243, 2147483648
    %v5327 = vor.u32 1.1754944e-38, %v5326
    %v5328 = vsel %vm5325, %v5327, %v5323
    %v5329 = vmul.f32 1.0, %v5328
    %v5330 = vrcp.pop %v5244
    %v5331 = vmul.f32 %v5244, %v5330
    %v5332 = vsub.f32 1.0, %v5331
    %v5333 = vmul.f32 %v5330, %v5332
    %v5334 = vadd.f32 %v5330, %v5333
    %vm5335 = vweird.f32 %v5244
    %vm5336 = vweird.f32 %v5330
    %vm5337 = vmor %vm5335, %vm5336
    %v5338 = vsel %vm5337, %v5330, %v5334
    %v5339 = vand.u32 2147483647, %v5244
    %vm5340 = vcmp.eq.f32.partialorder %v5339, 8.507059e+37
    %v5341 = vand.u32 %v5244, 2147483648
    %v5342 = vor.u32 1.1754944e-38, %v5341
    %v5343 = vsel %vm5340, %v5342, %v5338
    %v5344 = vmul.f32 1.0, %v5343
    %v5345 = vrcp.pop %v5245
    %v5346 = vmul.f32 %v5245, %v5345
    %v5347 = vsub.f32 1.0, %v5346
    %v5348 = vmul.f32 %v5345, %v5347
    %v5349 = vadd.f32 %v5345, %v5348
    %vm5350 = vweird.f32 %v5245
    %vm5351 = vweird.f32 %v5345
    %vm5352 = vmor %vm5350, %vm5351
    %v5353 = vsel %vm5352, %v5345, %v5349
    %v5354 = vand.u32 2147483647, %v5245
    %vm5355 = vcmp.eq.f32.partialorder %v5354, 8.507059e+37
    %v5356 = vand.u32 %v5245, 2147483648
    %v5357 = vor.u32 1.1754944e-38, %v5356
    %v5358 = vsel %vm5355, %v5357, %v5353
    %v5359 = vmul.f32 1.0, %v5358
    %v5360 = vrcp.pop %v5246
    %v5361 = vmul.f32 %v5246, %v5360
    %v5362 = vsub.f32 1.0, %v5361
    %v5363 = vmul.f32 %v5360, %v5362
    %v5364 = vadd.f32 %v5360, %v5363
    %vm5365 = vweird.f32 %v5246
    %vm5366 = vweird.f32 %v5360
    %vm5367 = vmor %vm5365, %vm5366
    %v5368 = vsel %vm5367, %v5360, %v5364
    %v5369 = vand.u32 2147483647, %v5246
    %vm5370 = vcmp.eq.f32.partialorder %v5369, 8.507059e+37
    %v5371 = vand.u32 %v5246, 2147483648
    %v5372 = vor.u32 1.1754944e-38, %v5371
    %v5373 = vsel %vm5370, %v5372, %v5368
    %v5374 = vmul.f32 1.0, %v5373
    %v5375 = vrcp.pop %v5247
    %v5376 = vmul.f32 %v5247, %v5375
    %v5377 = vsub.f32 1.0, %v5376
    %v5378 = vmul.f32 %v5375, %v5377
    %v5379 = vadd.f32 %v5375, %v5378
    %vm5380 = vweird.f32 %v5247
    %vm5381 = vweird.f32 %v5375
    %vm5382 = vmor %vm5380, %vm5381
    %v5383 = vsel %vm5382, %v5375, %v5379
    %v5384 = vand.u32 2147483647, %v5247
    %vm5385 = vcmp.eq.f32.partialorder %v5384, 8.507059e+37
    %v5386 = vand.u32 %v5247, 2147483648
    %v5387 = vor.u32 1.1754944e-38, %v5386
    %v5388 = vsel %vm5385, %v5387, %v5383
    %v5389 = vmul.f32 1.0, %v5388
    %v5390 = vrcp.pop %v5248
    %v5391 = vmul.f32 %v5248, %v5390
    %v5392 = vsub.f32 1.0, %v5391
    %v5393 = vmul.f32 %v5390, %v5392
    %v5394 = vadd.f32 %v5390, %v5393
    %vm5395 = vweird.f32 %v5248
    %vm5396 = vweird.f32 %v5390
    %vm5397 = vmor %vm5395, %vm5396
    %v5398 = vsel %vm5397, %v5390, %v5394
    %v5399 = vand.u32 2147483647, %v5248
    %vm5400 = vcmp.eq.f32.partialorder %v5399, 8.507059e+37
    %v5401 = vand.u32 %v5248, 2147483648
    %v5402 = vor.u32 1.1754944e-38, %v5401
    %v5403 = vsel %vm5400, %v5402, %v5398
    %v5404 = vmul.f32 1.0, %v5403
    %v5405 = vrcp.pop %v5249
    %v5406 = vmul.f32 %v5249, %v5405
    %v5407 = vsub.f32 1.0, %v5406
    %v5408 = vmul.f32 %v5405, %v5407
    %v5409 = vadd.f32 %v5405, %v5408
    %vm5410 = vweird.f32 %v5249
    %vm5411 = vweird.f32 %v5405
    %vm5412 = vmor %vm5410, %vm5411
    %v5413 = vsel %vm5412, %v5405, %v5409
    %v5414 = vand.u32 2147483647, %v5249
    %vm5415 = vcmp.eq.f32.partialorder %v5414, 8.507059e+37
    %v5416 = vand.u32 %v5249, 2147483648
    %v5417 = vor.u32 1.1754944e-38, %v5416
    %v5418 = vsel %vm5415, %v5417, %v5413
    %v5419 = vmul.f32 1.0, %v5418
    %v5420 = vrcp.pop %v5250
    %v5421 = vmul.f32 %v5250, %v5420
    %v5422 = vsub.f32 1.0, %v5421
    %v5423 = vmul.f32 %v5420, %v5422
    %v5424 = vadd.f32 %v5420, %v5423
    %vm5425 = vweird.f32 %v5250
    %vm5426 = vweird.f32 %v5420
    %vm5427 = vmor %vm5425, %vm5426
    %v5428 = vsel %vm5427, %v5420, %v5424
    %v5429 = vand.u32 2147483647, %v5250
    %vm5430 = vcmp.eq.f32.partialorder %v5429, 8.507059e+37
    %v5431 = vand.u32 %v5250, 2147483648
    %v5432 = vor.u32 1.1754944e-38, %v5431
    %v5433 = vsel %vm5430, %v5432, %v5428
    %v5434 = vmul.f32 1.0, %v5433
    %v5435 = vrcp.pop %v5251
    %v5436 = vmul.f32 %v5251, %v5435
    %v5437 = vsub.f32 1.0, %v5436
    %v5438 = vmul.f32 %v5435, %v5437
    %v5439 = vadd.f32 %v5435, %v5438
    %vm5440 = vweird.f32 %v5251
    %vm5441 = vweird.f32 %v5435
    %vm5442 = vmor %vm5440, %vm5441
    %v5443 = vsel %vm5442, %v5435, %v5439
    %v5444 = vand.u32 2147483647, %v5251
    %vm5445 = vcmp.eq.f32.partialorder %v5444, 8.507059e+37
    %v5446 = vand.u32 %v5251, 2147483648
    %v5447 = vor.u32 1.1754944e-38, %v5446
    %v5448 = vsel %vm5445, %v5447, %v5443
    %v5449 = vmul.f32 1.0, %v5448
    %v5450 = vrcp.pop %v5252
    %v5451 = vmul.f32 %v5252, %v5450
    %v5452 = vsub.f32 1.0, %v5451
    %v5453 = vmul.f32 %v5450, %v5452
    %v5454 = vadd.f32 %v5450, %v5453
    %vm5455 = vweird.f32 %v5252
    %vm5456 = vweird.f32 %v5450
    %vm5457 = vmor %vm5455, %vm5456
    %v5458 = vsel %vm5457, %v5450, %v5454
    %v5459 = vand.u32 2147483647, %v5252
    %vm5460 = vcmp.eq.f32.partialorder %v5459, 8.507059e+37
    %v5461 = vand.u32 %v5252, 2147483648
    %v5462 = vor.u32 1.1754944e-38, %v5461
    %v5463 = vsel %vm5460, %v5462, %v5458
    %v5464 = vmul.f32 1.0, %v5463
    %v5465 = vrcp.pop %v5253
    %v5466 = vmul.f32 %v5253, %v5465
    %v5467 = vsub.f32 1.0, %v5466
    %v5468 = vmul.f32 %v5465, %v5467
    %v5469 = vadd.f32 %v5465, %v5468
    %vm5470 = vweird.f32 %v5253
    %vm5471 = vweird.f32 %v5465
    %vm5472 = vmor %vm5470, %vm5471
    %v5473 = vsel %vm5472, %v5465, %v5469
    %v5474 = vand.u32 2147483647, %v5253
    %vm5475 = vcmp.eq.f32.partialorder %v5474, 8.507059e+37
    %v5476 = vand.u32 %v5253, 2147483648
    %v5477 = vor.u32 1.1754944e-38, %v5476
    %v5478 = vsel %vm5475, %v5477, %v5473
    %v5479 = vmul.f32 1.0, %v5478
    %v5480 = vrcp.pop %v5254
    %v5481 = vmul.f32 %v5254, %v5480
    %v5482 = vsub.f32 1.0, %v5481
    %v5483 = vmul.f32 %v5480, %v5482
    %v5484 = vadd.f32 %v5480, %v5483
    %vm5485 = vweird.f32 %v5254
    %vm5486 = vweird.f32 %v5480
    %vm5487 = vmor %vm5485, %vm5486
    %v5488 = vsel %vm5487, %v5480, %v5484
    %v5489 = vand.u32 2147483647, %v5254
    %vm5490 = vcmp.eq.f32.partialorder %v5489, 8.507059e+37
    %v5491 = vand.u32 %v5254, 2147483648
    %v5492 = vor.u32 1.1754944e-38, %v5491
    %v5493 = vsel %vm5490, %v5492, %v5488
    %v5494 = vmul.f32 1.0, %v5493
    %v5495 = vmul.f32 %v5269, %v24
    %v5496 = vmul.f32 %v5284, %v25
    %v5497 = vmul.f32 %v5299, %v26
    %v5498 = vmul.f32 %v5314, %v27
    %v5499 = vmul.f32 %v5329, %v28
    %v5500 = vmul.f32 %v5344, %v29
    %v5501 = vmul.f32 %v5359, %v30
    %v5502 = vmul.f32 %v5374, %v31
    %v5503 = vmul.f32 %v5389, %v32
    %v5504 = vmul.f32 %v5404, %v33
    %v5505 = vmul.f32 %v5419, %v34
    %v5506 = vmul.f32 %v5434, %v35
    %v5507 = vmul.f32 %v5449, %v36
    %v5508 = vmul.f32 %v5464, %v37
    %v5509 = vmul.f32 %v5479, %v38
    %v5510 = vmul.f32 %v5494, %v39
    %v5511 = vsel %vm54, %v5495, 0.0
    %v5512 = vsel %vm54, %v5496, 0.0
    %v5513 = vadd.f32 %v5511, %v5512
    %v5514 = vsel %vm54, %v5497, 0.0
    %v5515 = vadd.f32 %v5513, %v5514
    %v5516 = vsel %vm54, %v5498, 0.0
    %v5517 = vadd.f32 %v5515, %v5516
    %v5518 = vsel %vm54, %v5499, 0.0
    %v5519 = vadd.f32 %v5517, %v5518
    %v5520 = vsel %vm54, %v5500, 0.0
    %v5521 = vadd.f32 %v5519, %v5520
    %v5522 = vsel %vm54, %v5501, 0.0
    %v5523 = vadd.f32 %v5521, %v5522
    %v5524 = vsel %vm54, %v5502, 0.0
    %v5525 = vadd.f32 %v5523, %v5524
    %v5526 = vrot.slane %v5525, 4
    %v5527 = vadd.f32 %v5525, %v5526
    %v5528 = vrot.slane %v5527, 2
    %v5529 = vadd.f32 %v5527, %v5528
    %v5530 = vrot.slane %v5529, 1
    %v5531 = vadd.f32 %v5529, %v5530
    %v5532 = vsel %vm54, %v5503, 0.0
    %v5533 = vsel %vm54, %v5504, 0.0
    %v5534 = vadd.f32 %v5532, %v5533
    %v5535 = vsel %vm54, %v5505, 0.0
    %v5536 = vadd.f32 %v5534, %v5535
    %v5537 = vsel %vm54, %v5506, 0.0
    %v5538 = vadd.f32 %v5536, %v5537
    %v5539 = vsel %vm54, %v5507, 0.0
    %v5540 = vadd.f32 %v5538, %v5539
    %v5541 = vsel %vm54, %v5508, 0.0
    %v5542 = vadd.f32 %v5540, %v5541
    %v5543 = vsel %vm54, %v5509, 0.0
    %v5544 = vadd.f32 %v5542, %v5543
    %v5545 = vsel %vm54, %v5510, 0.0
    %v5546 = vadd.f32 %v5544, %v5545
    %v5547 = vrot.slane %v5546, 4
    %v5548 = vadd.f32 %v5546, %v5547
    %v5549 = vrot.slane %v5548, 2
    %v5550 = vadd.f32 %v5548, %v5549
    %v5551 = vrot.slane %v5550, 1
    %v5552 = vadd.f32 %v5550, %v5551
    %v5555 = vsel %vm751, %v5552, %v5531
    %s5557 = scalar_lea.vmem [#allocation3], 14
    %5558 = vst.msk [vmem:[%s5557] sm:$0x3] %vm120, %v5555
    %v5575 = vperm.slane %v5269, %v772
    %v5576 = vperm.slane %v5284, %v774
    %v5577 = vsel %vm776, %v5576, %v5575
    %v5578 = vperm.slane %v5299, %v778
    %v5579 = vsel %vm780, %v5578, %v5577
    %v5580 = vperm.slane %v5314, %v782
    %v5581 = vsel %vm784, %v5580, %v5579
    %v5582 = vperm.slane %v5329, %v786
    %v5583 = vsel %vm788, %v5582, %v5581
    %v5584 = vperm.slane %v5344, %v790
    %v5585 = vsel %vm792, %v5584, %v5583
    %v5586 = vperm.slane %v5359, %v794
    %v5587 = vsel %vm796, %v5586, %v5585
    %v5588 = vperm.slane %v5374, %v798
    %v5589 = vsel %vm800, %v5588, %v5587
    %v5590 = vperm.slane %v5389, %v772
    %v5591 = vperm.slane %v5404, %v774
    %v5592 = vsel %vm776, %v5591, %v5590
    %v5593 = vperm.slane %v5419, %v778
    %v5594 = vsel %vm780, %v5593, %v5592
    %v5595 = vperm.slane %v5434, %v782
    %v5596 = vsel %vm784, %v5595, %v5594
    %v5597 = vperm.slane %v5449, %v786
    %v5598 = vsel %vm788, %v5597, %v5596
    %v5599 = vperm.slane %v5464, %v790
    %v5600 = vsel %vm792, %v5599, %v5598
    %v5601 = vperm.slane %v5479, %v794
    %v5602 = vsel %vm796, %v5601, %v5600
    %v5603 = vperm.slane %v5494, %v798
    %v5604 = vsel %vm800, %v5603, %v5602
    %v5605 = vsel %vm751, %v5604, %v5589
    %s5607 = scalar_lea.vmem [#allocation5], 14
    %5608 = vst.msk [vmem:[%s5607] sm:$0x3] %vm819, %v5605
    // Predicated region
    $region22: #{tpu_custom_call.1} parent=1 // pred_check
      _
    $region23: #{tpu_custom_call.1} parent=1 // pred_check_branch
      %5610 = sbr.rel (0) target = $region25
    $region24: #{tpu_custom_call.1} parent=1 // pred_region
      %5612 = vsyncadd [#allocation4], 0
      %s5613 = sshll.u32 [#allocation3], 4
      %s5614 = int_to_ptr.vmem [resolvable:$true] %s5613
      %s5615 = sshll.u32 %s5, 4
      %s5616 = int_to_ptr.hbm [resolvable:$true] %s5615
      %5621 = dma.vmem_to_hbm [thread:$0]  %s5614, 256, %s5616, [#allocation4], 32, 32, 2
    $region25: #{tpu_custom_call.1} parent=1 // pred_fallthru
      _
    // Predicated region
    $region26: #{tpu_custom_call.1} parent=1 // pred_check
      _
    $region27: #{tpu_custom_call.1} parent=1 // pred_check_branch
      %5623 = sbr.rel (0) target = $region29
    $region28: #{tpu_custom_call.1} parent=1 // pred_region
      %5625 = vsyncadd [#allocation6], 0
      %s5626 = sshll.u32 [#allocation5], 4
      %s5627 = int_to_ptr.vmem [resolvable:$true] %s5626
      %s5628 = sshll.u32 %s6, 4
      %s5629 = int_to_ptr.hbm [resolvable:$true] %s5628
      %5634 = dma.vmem_to_hbm [thread:$0]  %s5627, 256, %s5629, [#allocation6], 32, 32, 2
    $region29: #{tpu_custom_call.1} parent=1 // pred_fallthru
      _
    // Predicated region
    $region30: #{tpu_custom_call.1} parent=1 // pred_check
      _
    $region31: #{tpu_custom_call.1} parent=1 // pred_check_branch
      %5636 = sbr.rel (0) target = $region33
    $region32: #{tpu_custom_call.1} parent=1 // pred_region
      %5638 = dma.done [#allocation4], 256
    $region33: #{tpu_custom_call.1} parent=1 // pred_fallthru
      _
    // Predicated region
    $region34: #{tpu_custom_call.1} parent=1 // pred_check
      _
    $region35: #{tpu_custom_call.1} parent=1 // pred_check_branch
      %5640 = sbr.rel (0) target = $region37
    $region36: #{tpu_custom_call.1} parent=1 // pred_region
      %5642 = dma.done [#allocation6], 256
    $region37: #{tpu_custom_call.1} parent=1 // pred_fallthru
      _
    %5643 = vsyncpa [#allocation4], 1
    %5644 = vsyncpa [#allocation6], 1

</llo_original>
